<compile_context>
chip_gen: v7x
topology: tpu7x:2x2x1
jax: 0.10.0
libtpu: 0.0.40
codegen_flags: <defaults>
</compile_context>

<pallas_src>
import math
from functools import partial

import jax
import jax.numpy as jnp
from jax.experimental import pallas as pl
from jax.experimental.pallas import tpu as pltpu


def _attention_layer_kernel(src_ref, tar_ref,
                            wq_ref, bq_ref, wkv_ref, bkv_ref, wo_ref, bo_ref,
                            w1_ref, b1_ref, w2_ref, b2_ref,
                            g1_ref, be1_ref, g2_ref, be2_ref,
                            out_ref, attn_scr,
                            *, nhead, mxu_dtype):
    Bb, T, d = src_ref.shape
    hd = d // nhead
    scale = 1.0 / math.sqrt(hd)

    def mm(a, b):                       # rows @ weight  (MXU, f32 accumulate)
        if mxu_dtype is not None:
            a = a.astype(mxu_dtype)
            if b.dtype != mxu_dtype:
                b = b.astype(mxu_dtype)
        return jnp.dot(a, b, preferred_element_type=jnp.float32)

    def bmm(eq, a, b):                  # batched attention matmuls
        if mxu_dtype is not None:
            a = a.astype(mxu_dtype)
            b = b.astype(mxu_dtype)
        return jnp.einsum(eq, a, b, preferred_element_type=jnp.float32)

    src = src_ref[...].astype(jnp.float32)          # (Bb, T, d)  key/value + residual
    tar = tar_ref[...].astype(jnp.float32)          # (Bb, T, d)  query source
    # Fold batch into the matmul M dimension (leading-dim reshape only: free).
    src2d = src.reshape(Bb * T, d)
    tar2d = tar.reshape(Bb * T, d)

    # ---- projections: q separate, k/v fused into one (d, 2d) matmul ----------
    q = (mm(tar2d, wq_ref[...]) + bq_ref[...]) * scale      # scale hoisted
    kv = mm(src2d, wkv_ref[...]) + bkv_ref[...]             # (rows, 2d)
    q3 = q.reshape(Bb, T, d)
    k3 = kv[:, :d].reshape(Bb, T, d)
    v3 = kv[:, d:].reshape(Bb, T, d)

    # ---- multi-head attention -------------------------------------------------
    # Contraction on the last dim (no .T); each head's context goes into its
    # lane slice of the VMEM scratch so the output projection is ONE full-K
    # matmul instead of nhead K=hd matmuls.
    # TODO(synk): for long T, stream K/V blocks with an online softmax instead
    # of materializing the (Bb, T, T) scores per head (VMEM pressure on v7x).
    for h in range(nhead):              # static loop; nhead is small (switch to
        sl = slice(h * hd, (h + 1) * hd)  # lax.fori_loop if nhead grows large)
        s = bmm('bqd,bkd->bqk', q3[:, :, sl], k3[:, :, sl])     # (Bb, T, T)
        s = s - jnp.max(s, axis=-1, keepdims=True)
        p = jnp.exp(s)                                          # EUP
        p = p * pl.reciprocal(jnp.sum(p, axis=-1, keepdims=True), approx=True)
        oh = bmm('bqk,bkd->bqd', p, v3[:, :, sl])               # (Bb, T, hd)
        attn_scr[:, sl] = oh.reshape(Bb * T, hd)
    attn = mm(attn_scr[...], wo_ref[...]) + bo_ref[...]         # single full-K matmul

    # ---- residual + LayerNorm 1 (dropout1 = identity) -------------------------
    x = src2d + attn
    mu = jnp.mean(x, axis=-1, keepdims=True)
    var = jnp.mean((x - mu) ** 2, axis=-1, keepdims=True)
    x = (x - mu) * jax.lax.rsqrt(var + 1e-5) * g1_ref[...] + be1_ref[...]

    # ---- FFN: linear1 -> ReLU -> (dropout = identity) -> linear2 --------------
    h1 = jnp.maximum(mm(x, w1_ref[...]) + b1_ref[...], 0.0)
    h2 = mm(h1, w2_ref[...]) + b2_ref[...]

    # ---- residual + LayerNorm 2 (dropout2 = identity) -------------------------
    y = x + h2
    mu2 = jnp.mean(y, axis=-1, keepdims=True)
    var2 = jnp.mean((y - mu2) ** 2, axis=-1, keepdims=True)
    y = (y - mu2) * jax.lax.rsqrt(var2 + 1e-5) * g2_ref[...] + be2_ref[...]

    out_ref[...] = y.reshape(Bb, T, d).astype(out_ref.dtype)


def _pick_b_blk(B, T, target_rows=256):
    """Largest batch block that (a) keeps the grid >= 2 steps when B >= 2 and
    (b) keeps b_blk*T at or below ~target_rows (VMEM / pipelining friendly)."""
    divs = [b for b in range(1, B + 1) if B % b == 0]
    if B >= 2:
        divs = [b for b in divs if B // b >= 2]
    ok = [b for b in divs if b * T <= target_rows]
    return max(ok) if ok else min(divs)


def attention_layer(src, tar, params, nhead, *, b_blk=None,
                    mxu_dtype=None, single_buffer_weights=True,
                    vmem_limit_bytes=48 * 1024 * 1024):
    """params: ordered weight list produced by build_params."""
    (wq, wk, wv, bq, bk, bv, wo, bo, w1, b1, w2, b2, g1, be1, g2, be2) = params
    B, T, d = src.shape
    if b_blk is None:
        b_blk = _pick_b_blk(B, T)
    assert B % b_blk == 0

    # Fuse K/V projection weights (one MXU push of the same LHS); optionally
    # pre-cast the big weight matrices to bf16 on the HBM side (halves DMA).
    wkv = jnp.concatenate([wk, wv], axis=1)        # (d, 2d)
    bkv = jnp.concatenate([bk, bv], axis=1)        # (1, 2d)
    if mxu_dtype is not None:
        wq, wkv, wo, w1, w2 = (a.astype(mxu_dtype) for a in (wq, wkv, wo, w1, w2))
    packed = [wq, bq, wkv, bkv, wo, bo, w1, b1, w2, b2, g1, be1, g2, be2]

    def weight_spec(arr):              # grid-invariant: whole array, block 0
        idx = lambda i, _n=arr.ndim: (0,) * _n
        if single_buffer_weights:      # resident anyway -> don't double-buffer
            return pl.BlockSpec(arr.shape, idx, pipeline_mode=pl.Buffered(1))
        return pl.BlockSpec(arr.shape, idx)

    io_spec = pl.BlockSpec((b_blk, T, d), lambda i: (i, 0, 0))
    in_specs = [io_spec, io_spec] + [weight_spec(p) for p in packed]

    d_ff = w1.shape[1]
    flops = (2 * B * T * d * d * 4            # q / kv / out projections
             + 2 * B * T * T * d * 2          # scores + p@v (summed over heads)
             + 2 * B * T * d * d_ff * 2)      # FFN
    transcendentals = B * nhead * T * T + 4 * B * T
    bytes_accessed = (4 * 3 * B * T * d
                      + sum(int(p.size) * p.dtype.itemsize for p in packed))

    return pl.pallas_call(
        partial(_attention_layer_kernel, nhead=nhead, mxu_dtype=mxu_dtype),
        out_shape=jax.ShapeDtypeStruct((B, T, d), jnp.float32),
        grid=(B // b_blk,),
        in_specs=in_specs,
        out_specs=io_spec,
        scratch_shapes=[pltpu.VMEM((b_blk * T, d), jnp.float32)],
        compiler_params=pltpu.CompilerParams(
            dimension_semantics=("parallel",),
            vmem_limit_bytes=vmem_limit_bytes),
        cost_estimate=pl.CostEstimate(flops=flops,
                                      transcendentals=transcendentals,
                                      bytes_accessed=bytes_accessed),
    )(src, tar, *packed)


# --------------------------- pure-JAX reference --------------------------------
def reference(src, tar, params, nhead):
    (wq, wk, wv, bq, bk, bv, wo, bo, w1, b1, w2, b2, g1, be1, g2, be2) = params
    d = src.shape[-1]
    hd = d // nhead
    scale = 1.0 / math.sqrt(hd)

    def ln(x, g, b):
        mu = jnp.mean(x, -1, keepdims=True)
        var = jnp.mean((x - mu) ** 2, -1, keepdims=True)
        return (x - mu) * jax.lax.rsqrt(var + 1e-5) * g + b

    q = tar @ wq + bq
    k = src @ wk + bk
    v = src @ wv + bv
    B, T, _ = q.shape
    qh = q.reshape(B, T, nhead, hd).transpose(0, 2, 1, 3) * scale
    kh = k.reshape(B, T, nhead, hd).transpose(0, 2, 1, 3)
    vh = v.reshape(B, T, nhead, hd).transpose(0, 2, 1, 3)
    s = jnp.einsum("bhqd,bhkd->bhqk", qh, kh)
    p = jax.nn.softmax(s, axis=-1)
    o = jnp.einsum("bhqk,bhkd->bhqd", p, vh).transpose(0, 2, 1, 3).reshape(B, T, d)
    attn = o @ wo + bo
    x = ln(src + attn, g1, be1)
    h = jnp.maximum(x @ w1 + b1, 0.0) @ w2 + b2
    return ln(x + h, g2, be2)


def build_params(key, d_model):
    ks = jax.random.split(key, 10)
    w = lambda k, shape: 0.05 * jax.random.normal(k, shape, jnp.float32)
    d4 = d_model * 4
    return [
        w(ks[0], (d_model, d_model)),   # wq   (stored transposed: x @ w)
        w(ks[1], (d_model, d_model)),   # wk
        w(ks[2], (d_model, d_model)),   # wv
        w(ks[3], (1, d_model)),         # bq
        w(ks[4], (1, d_model)),         # bk
        w(ks[5], (1, d_model)),         # bv
        w(ks[6], (d_model, d_model)),   # wo (out_proj)
        w(ks[7], (1, d_model)),         # bo
        w(ks[8], (d_model, d4)),        # w1 (linear1, transposed)
        jnp.zeros((1, d4), jnp.float32),            # b1
        w(ks[9], (d4, d_model)),        # w2 (linear2, transposed)
        jnp.zeros((1, d_model), jnp.float32),       # b2
        jnp.ones((1, d_model), jnp.float32),        # norm1 gamma
        jnp.zeros((1, d_model), jnp.float32),       # norm1 beta
        jnp.ones((1, d_model), jnp.float32),        # norm2 gamma
        jnp.zeros((1, d_model), jnp.float32),       # norm2 beta
    ]


if __name__ == "__main__":
    d_model, nhead = 32, 4
    B, T = 2, 8

    key = jax.random.PRNGKey(0)
    kp, ksrc, ktar = jax.random.split(key, 3)
    params = build_params(kp, d_model)
    src = jax.random.normal(ksrc, (B, T, d_model), jnp.float32)
    tar = jax.random.normal(ktar, (B, T, d_model), jnp.float32)

    ref = reference(src, tar, params, nhead)

    # f32 MXU path: tight-tolerance check vs the pure-JAX reference.
    single_buf = True
    try:
        out = jax.block_until_ready(
            attention_layer(src, tar, params, nhead, single_buffer_weights=True))
    except Exception:
        # Fallback if this JAX build rejects pl.Buffered(1) on pipelined inputs.
        single_buf = False
        out = jax.block_until_ready(
            attention_layer(src, tar, params, nhead, single_buffer_weights=False))
    assert out.shape == (B, T, d_model)
    assert jnp.allclose(out, ref, atol=2e-3, rtol=2e-3), "f32 mismatch vs reference"

    # Production bf16-MXU path (weights pre-cast to bf16 in the wrapper);
    # softmax / LayerNorm / ReLU stay f32, so a bf16-level tolerance suffices.
    out_bf16 = jax.block_until_ready(
        attention_layer(src, tar, params, nhead, mxu_dtype=jnp.bfloat16,
                        single_buffer_weights=single_buf))
    assert jnp.allclose(out_bf16, ref, atol=6e-2, rtol=6e-2), "bf16 mismatch vs reference"

    print("KERNEL_OK")
</pallas_src>

<mosaic_0001>
module attributes {stable_mosaic.version = 11 : i64} {
  func.func @_attention_layer_kernel(%arg0: i32, %arg1: memref<1x8x32xf32, #tpu.memory_space<vmem>>, %arg2: memref<1x8x32xf32, #tpu.memory_space<vmem>>, %arg3: memref<32x32xf32, #tpu.memory_space<vmem>>, %arg4: memref<1x32xf32, #tpu.memory_space<vmem>>, %arg5: memref<32x64xf32, #tpu.memory_space<vmem>>, %arg6: memref<1x64xf32, #tpu.memory_space<vmem>>, %arg7: memref<32x32xf32, #tpu.memory_space<vmem>>, %arg8: memref<1x32xf32, #tpu.memory_space<vmem>>, %arg9: memref<32x128xf32, #tpu.memory_space<vmem>>, %arg10: memref<1x128xf32, #tpu.memory_space<vmem>>, %arg11: memref<128x32xf32, #tpu.memory_space<vmem>>, %arg12: memref<1x32xf32, #tpu.memory_space<vmem>>, %arg13: memref<1x32xf32, #tpu.memory_space<vmem>>, %arg14: memref<1x32xf32, #tpu.memory_space<vmem>>, %arg15: memref<1x32xf32, #tpu.memory_space<vmem>>, %arg16: memref<1x32xf32, #tpu.memory_space<vmem>>, %arg17: memref<1x8x32xf32, #tpu.memory_space<vmem>>, %arg18: memref<8x32xf32, #tpu.memory_space<vmem>>) attributes {dimension_semantics = [#tpu.dimension_semantics<parallel>], iteration_bounds = array<i64: 2>, scalar_prefetch = 0 : i64, scratch_operands = 1 : i64, tpu.core_type = #tpu.core_type<tc>, window_params = [{transform_indices = @transform_0, window_bounds = array<i64: 1, 8, 32>}, {transform_indices = @transform_1, window_bounds = array<i64: 1, 8, 32>}, {pipeline_mode = #tpu.pipeline_mode<synchronous>, transform_indices = @transform_2, window_bounds = array<i64: 32, 32>}, {pipeline_mode = #tpu.pipeline_mode<synchronous>, transform_indices = @transform_3, window_bounds = array<i64: 1, 32>}, {pipeline_mode = #tpu.pipeline_mode<synchronous>, transform_indices = @transform_4, window_bounds = array<i64: 32, 64>}, {pipeline_mode = #tpu.pipeline_mode<synchronous>, transform_indices = @transform_5, window_bounds = array<i64: 1, 64>}, {pipeline_mode = #tpu.pipeline_mode<synchronous>, transform_indices = @transform_6, window_bounds = array<i64: 32, 32>}, {pipeline_mode = #tpu.pipeline_mode<synchronous>, transform_indices = @transform_7, window_bounds = array<i64: 1, 32>}, {pipeline_mode = #tpu.pipeline_mode<synchronous>, transform_indices = @transform_8, window_bounds = array<i64: 32, 128>}, {pipeline_mode = #tpu.pipeline_mode<synchronous>, transform_indices = @transform_9, window_bounds = array<i64: 1, 128>}, {pipeline_mode = #tpu.pipeline_mode<synchronous>, transform_indices = @transform_10, window_bounds = array<i64: 128, 32>}, {pipeline_mode = #tpu.pipeline_mode<synchronous>, transform_indices = @transform_11, window_bounds = array<i64: 1, 32>}, {pipeline_mode = #tpu.pipeline_mode<synchronous>, transform_indices = @transform_12, window_bounds = array<i64: 1, 32>}, {pipeline_mode = #tpu.pipeline_mode<synchronous>, transform_indices = @transform_13, window_bounds = array<i64: 1, 32>}, {pipeline_mode = #tpu.pipeline_mode<synchronous>, transform_indices = @transform_14, window_bounds = array<i64: 1, 32>}, {pipeline_mode = #tpu.pipeline_mode<synchronous>, transform_indices = @transform_15, window_bounds = array<i64: 1, 32>}, {transform_indices = @transform_16, window_bounds = array<i64: 1, 8, 32>}]} {
    %c0 = arith.constant 0 : index
    %c0_0 = arith.constant 0 : index
    %c0_1 = arith.constant 0 : index
    %0 = vector.load %arg1[%c0, %c0_0, %c0_1] : memref<1x8x32xf32, #tpu.memory_space<vmem>>, vector<1x8x32xf32>
    %c0_2 = arith.constant 0 : index
    %c0_3 = arith.constant 0 : index
    %c0_4 = arith.constant 0 : index
    %1 = vector.load %arg2[%c0_2, %c0_3, %c0_4] : memref<1x8x32xf32, #tpu.memory_space<vmem>>, vector<1x8x32xf32>
    %2 = vector.shape_cast %0 : vector<1x8x32xf32> to vector<8x32xf32>
    %3 = vector.shape_cast %1 : vector<1x8x32xf32> to vector<8x32xf32>
    %c0_5 = arith.constant 0 : index
    %c0_6 = arith.constant 0 : index
    %4 = vector.load %arg3[%c0_5, %c0_6] : memref<32x32xf32, #tpu.memory_space<vmem>>, vector<32x32xf32>
    %cst = arith.constant dense<0.000000e+00> : vector<8x32xf32>
    %5 = tpu.matmul %3, %4, %cst {dimension_numbers = #tpu.dot_dimension_numbers<[1], [0], [0], [1], [0, 0, 1, 1], [], []>} : vector<8x32xf32>, vector<32x32xf32>, vector<8x32xf32> -> vector<8x32xf32>
    %c0_7 = arith.constant 0 : index
    %c0_8 = arith.constant 0 : index
    %6 = vector.load %arg4[%c0_7, %c0_8] : memref<1x32xf32, #tpu.memory_space<vmem>>, vector<1x32xf32>
    %7 = vector.broadcast %6 : vector<1x32xf32> to vector<8x32xf32>
    %8 = arith.addf %5, %7 : vector<8x32xf32>
    %cst_9 = arith.constant 0.353553385 : f32
    %9 = vector.broadcast %cst_9 : f32 to vector<8x32xf32>
    %10 = arith.mulf %8, %9 : vector<8x32xf32>
    %c0_10 = arith.constant 0 : index
    %c0_11 = arith.constant 0 : index
    %11 = vector.load %arg5[%c0_10, %c0_11] : memref<32x64xf32, #tpu.memory_space<vmem>>, vector<32x64xf32>
    %cst_12 = arith.constant dense<0.000000e+00> : vector<8x64xf32>
    %12 = tpu.matmul %2, %11, %cst_12 {dimension_numbers = #tpu.dot_dimension_numbers<[1], [0], [0], [1], [0, 0, 1, 1], [], []>} : vector<8x32xf32>, vector<32x64xf32>, vector<8x64xf32> -> vector<8x64xf32>
    %c0_13 = arith.constant 0 : index
    %c0_14 = arith.constant 0 : index
    %13 = vector.load %arg6[%c0_13, %c0_14] : memref<1x64xf32, #tpu.memory_space<vmem>>, vector<1x64xf32>
    %14 = vector.broadcast %13 : vector<1x64xf32> to vector<8x64xf32>
    %15 = arith.addf %12, %14 : vector<8x64xf32>
    %16 = vector.shape_cast %10 : vector<8x32xf32> to vector<1x8x32xf32>
    %17 = vector.extract_strided_slice %15 {offsets = [0, 0], sizes = [8, 32], strides = [1, 1]} : vector<8x64xf32> to vector<8x32xf32>
    %18 = vector.shape_cast %17 : vector<8x32xf32> to vector<1x8x32xf32>
    %19 = vector.extract_strided_slice %15 {offsets = [0, 32], sizes = [8, 32], strides = [1, 1]} : vector<8x64xf32> to vector<8x32xf32>
    %20 = vector.shape_cast %19 : vector<8x32xf32> to vector<1x8x32xf32>
    %21 = vector.extract_strided_slice %16 {offsets = [0, 0, 0], sizes = [1, 8, 8], strides = [1, 1, 1]} : vector<1x8x32xf32> to vector<1x8x8xf32>
    %22 = vector.extract_strided_slice %18 {offsets = [0, 0, 0], sizes = [1, 8, 8], strides = [1, 1, 1]} : vector<1x8x32xf32> to vector<1x8x8xf32>
    "tpu.trace_start"() <{level = 10 : i32, message = "bqd,bkd->bqk"}> : () -> ()
    %cst_15 = arith.constant dense<0.000000e+00> : vector<1x8x8xf32>
    %23 = tpu.matmul %21, %22, %cst_15 {dimension_numbers = #tpu.dot_dimension_numbers<[2], [2], [1], [1], [0, 0, 0, 1, 1, 1], [0], [0]>} : vector<1x8x8xf32>, vector<1x8x8xf32>, vector<1x8x8xf32> -> vector<1x8x8xf32>
    "tpu.trace_stop"() : () -> ()
    %cst_16 = arith.constant dense<0xFF800000> : vector<1x8xf32>
    %24 = vector.multi_reduction <maximumf>, %23, %cst_16 [2] : vector<1x8x8xf32> to vector<1x8xf32>
    %25 = vector.shape_cast %24 : vector<1x8xf32> to vector<1x8x1xf32>
    %26 = vector.broadcast %25 : vector<1x8x1xf32> to vector<1x8x8xf32>
    %27 = arith.subf %23, %26 : vector<1x8x8xf32>
    %28 = math.exp %27 : vector<1x8x8xf32>
    %cst_17 = arith.constant dense<0.000000e+00> : vector<1x8xf32>
    %29 = vector.multi_reduction <add>, %28, %cst_17 [2] : vector<1x8x8xf32> to vector<1x8xf32>
    %30 = vector.shape_cast %29 : vector<1x8xf32> to vector<1x8x1xf32>
    %31 = tpu.reciprocal %30 {approx = true} : vector<1x8x1xf32> -> vector<1x8x1xf32>
    %32 = vector.broadcast %31 : vector<1x8x1xf32> to vector<1x8x8xf32>
    %33 = arith.mulf %28, %32 : vector<1x8x8xf32>
    %34 = vector.extract_strided_slice %20 {offsets = [0, 0, 0], sizes = [1, 8, 8], strides = [1, 1, 1]} : vector<1x8x32xf32> to vector<1x8x8xf32>
    "tpu.trace_start"() <{level = 10 : i32, message = "bqk,bkd->bqd"}> : () -> ()
    %cst_18 = arith.constant dense<0.000000e+00> : vector<1x8x8xf32>
    %35 = tpu.matmul %33, %34, %cst_18 {dimension_numbers = #tpu.dot_dimension_numbers<[2], [1], [1], [2], [0, 0, 0, 1, 1, 2], [0], [0]>} : vector<1x8x8xf32>, vector<1x8x8xf32>, vector<1x8x8xf32> -> vector<1x8x8xf32>
    "tpu.trace_stop"() : () -> ()
    %36 = vector.shape_cast %35 : vector<1x8x8xf32> to vector<8x8xf32>
    %c0_19 = arith.constant 0 : index
    %c0_20 = arith.constant 0 : index
    %37 = vector.load %arg18[%c0_19, %c0_20] : memref<8x32xf32, #tpu.memory_space<vmem>>, vector<8x8xf32>
    tpu.vector_store %arg18[%c0_19, %c0_20], %36 {strides = array<i32>} : memref<8x32xf32, #tpu.memory_space<vmem>>, vector<8x8xf32>,
    %38 = vector.extract_strided_slice %16 {offsets = [0, 0, 8], sizes = [1, 8, 8], strides = [1, 1, 1]} : vector<1x8x32xf32> to vector<1x8x8xf32>
    %39 = vector.extract_strided_slice %18 {offsets = [0, 0, 8], sizes = [1, 8, 8], strides = [1, 1, 1]} : vector<1x8x32xf32> to vector<1x8x8xf32>
    "tpu.trace_start"() <{level = 10 : i32, message = "bqd,bkd->bqk"}> : () -> ()
    %cst_21 = arith.constant dense<0.000000e+00> : vector<1x8x8xf32>
    %40 = tpu.matmul %38, %39, %cst_21 {dimension_numbers = #tpu.dot_dimension_numbers<[2], [2], [1], [1], [0, 0, 0, 1, 1, 1], [0], [0]>} : vector<1x8x8xf32>, vector<1x8x8xf32>, vector<1x8x8xf32> -> vector<1x8x8xf32>
    "tpu.trace_stop"() : () -> ()
    %cst_22 = arith.constant dense<0xFF800000> : vector<1x8xf32>
    %41 = vector.multi_reduction <maximumf>, %40, %cst_22 [2] : vector<1x8x8xf32> to vector<1x8xf32>
    %42 = vector.shape_cast %41 : vector<1x8xf32> to vector<1x8x1xf32>
    %43 = vector.broadcast %42 : vector<1x8x1xf32> to vector<1x8x8xf32>
    %44 = arith.subf %40, %43 : vector<1x8x8xf32>
    %45 = math.exp %44 : vector<1x8x8xf32>
    %cst_23 = arith.constant dense<0.000000e+00> : vector<1x8xf32>
    %46 = vector.multi_reduction <add>, %45, %cst_23 [2] : vector<1x8x8xf32> to vector<1x8xf32>
    %47 = vector.shape_cast %46 : vector<1x8xf32> to vector<1x8x1xf32>
    %48 = tpu.reciprocal %47 {approx = true} : vector<1x8x1xf32> -> vector<1x8x1xf32>
    %49 = vector.broadcast %48 : vector<1x8x1xf32> to vector<1x8x8xf32>
    %50 = arith.mulf %45, %49 : vector<1x8x8xf32>
    %51 = vector.extract_strided_slice %20 {offsets = [0, 0, 8], sizes = [1, 8, 8], strides = [1, 1, 1]} : vector<1x8x32xf32> to vector<1x8x8xf32>
    "tpu.trace_start"() <{level = 10 : i32, message = "bqk,bkd->bqd"}> : () -> ()
    %cst_24 = arith.constant dense<0.000000e+00> : vector<1x8x8xf32>
    %52 = tpu.matmul %50, %51, %cst_24 {dimension_numbers = #tpu.dot_dimension_numbers<[2], [1], [1], [2], [0, 0, 0, 1, 1, 2], [0], [0]>} : vector<1x8x8xf32>, vector<1x8x8xf32>, vector<1x8x8xf32> -> vector<1x8x8xf32>
    "tpu.trace_stop"() : () -> ()
    %53 = vector.shape_cast %52 : vector<1x8x8xf32> to vector<8x8xf32>
    %c0_25 = arith.constant 0 : index
    %c8 = arith.constant 8 : index
    %54 = vector.load %arg18[%c0_25, %c8] : memref<8x32xf32, #tpu.memory_space<vmem>>, vector<8x8xf32>
    tpu.vector_store %arg18[%c0_25, %c8], %53 {strides = array<i32>} : memref<8x32xf32, #tpu.memory_space<vmem>>, vector<8x8xf32>,
    %55 = vector.extract_strided_slice %16 {offsets = [0, 0, 16], sizes = [1, 8, 8], strides = [1, 1, 1]} : vector<1x8x32xf32> to vector<1x8x8xf32>
    %56 = vector.extract_strided_slice %18 {offsets = [0, 0, 16], sizes = [1, 8, 8], strides = [1, 1, 1]} : vector<1x8x32xf32> to vector<1x8x8xf32>
    "tpu.trace_start"() <{level = 10 : i32, message = "bqd,bkd->bqk"}> : () -> ()
    %cst_26 = arith.constant dense<0.000000e+00> : vector<1x8x8xf32>
    %57 = tpu.matmul %55, %56, %cst_26 {dimension_numbers = #tpu.dot_dimension_numbers<[2], [2], [1], [1], [0, 0, 0, 1, 1, 1], [0], [0]>} : vector<1x8x8xf32>, vector<1x8x8xf32>, vector<1x8x8xf32> -> vector<1x8x8xf32>
    "tpu.trace_stop"() : () -> ()
    %cst_27 = arith.constant dense<0xFF800000> : vector<1x8xf32>
    %58 = vector.multi_reduction <maximumf>, %57, %cst_27 [2] : vector<1x8x8xf32> to vector<1x8xf32>
    %59 = vector.shape_cast %58 : vector<1x8xf32> to vector<1x8x1xf32>
    %60 = vector.broadcast %59 : vector<1x8x1xf32> to vector<1x8x8xf32>
    %61 = arith.subf %57, %60 : vector<1x8x8xf32>
    %62 = math.exp %61 : vector<1x8x8xf32>
    %cst_28 = arith.constant dense<0.000000e+00> : vector<1x8xf32>
    %63 = vector.multi_reduction <add>, %62, %cst_28 [2] : vector<1x8x8xf32> to vector<1x8xf32>
    %64 = vector.shape_cast %63 : vector<1x8xf32> to vector<1x8x1xf32>
    %65 = tpu.reciprocal %64 {approx = true} : vector<1x8x1xf32> -> vector<1x8x1xf32>
    %66 = vector.broadcast %65 : vector<1x8x1xf32> to vector<1x8x8xf32>
    %67 = arith.mulf %62, %66 : vector<1x8x8xf32>
    %68 = vector.extract_strided_slice %20 {offsets = [0, 0, 16], sizes = [1, 8, 8], strides = [1, 1, 1]} : vector<1x8x32xf32> to vector<1x8x8xf32>
    "tpu.trace_start"() <{level = 10 : i32, message = "bqk,bkd->bqd"}> : () -> ()
    %cst_29 = arith.constant dense<0.000000e+00> : vector<1x8x8xf32>
    %69 = tpu.matmul %67, %68, %cst_29 {dimension_numbers = #tpu.dot_dimension_numbers<[2], [1], [1], [2], [0, 0, 0, 1, 1, 2], [0], [0]>} : vector<1x8x8xf32>, vector<1x8x8xf32>, vector<1x8x8xf32> -> vector<1x8x8xf32>
    "tpu.trace_stop"() : () -> ()
    %70 = vector.shape_cast %69 : vector<1x8x8xf32> to vector<8x8xf32>
    %c0_30 = arith.constant 0 : index
    %c16 = arith.constant 16 : index
    %71 = vector.load %arg18[%c0_30, %c16] : memref<8x32xf32, #tpu.memory_space<vmem>>, vector<8x8xf32>
    tpu.vector_store %arg18[%c0_30, %c16], %70 {strides = array<i32>} : memref<8x32xf32, #tpu.memory_space<vmem>>, vector<8x8xf32>,
    %72 = vector.extract_strided_slice %16 {offsets = [0, 0, 24], sizes = [1, 8, 8], strides = [1, 1, 1]} : vector<1x8x32xf32> to vector<1x8x8xf32>
    %73 = vector.extract_strided_slice %18 {offsets = [0, 0, 24], sizes = [1, 8, 8], strides = [1, 1, 1]} : vector<1x8x32xf32> to vector<1x8x8xf32>
    "tpu.trace_start"() <{level = 10 : i32, message = "bqd,bkd->bqk"}> : () -> ()
    %cst_31 = arith.constant dense<0.000000e+00> : vector<1x8x8xf32>
    %74 = tpu.matmul %72, %73, %cst_31 {dimension_numbers = #tpu.dot_dimension_numbers<[2], [2], [1], [1], [0, 0, 0, 1, 1, 1], [0], [0]>} : vector<1x8x8xf32>, vector<1x8x8xf32>, vector<1x8x8xf32> -> vector<1x8x8xf32>
    "tpu.trace_stop"() : () -> ()
    %cst_32 = arith.constant dense<0xFF800000> : vector<1x8xf32>
    %75 = vector.multi_reduction <maximumf>, %74, %cst_32 [2] : vector<1x8x8xf32> to vector<1x8xf32>
    %76 = vector.shape_cast %75 : vector<1x8xf32> to vector<1x8x1xf32>
    %77 = vector.broadcast %76 : vector<1x8x1xf32> to vector<1x8x8xf32>
    %78 = arith.subf %74, %77 : vector<1x8x8xf32>
    %79 = math.exp %78 : vector<1x8x8xf32>
    %cst_33 = arith.constant dense<0.000000e+00> : vector<1x8xf32>
    %80 = vector.multi_reduction <add>, %79, %cst_33 [2] : vector<1x8x8xf32> to vector<1x8xf32>
    %81 = vector.shape_cast %80 : vector<1x8xf32> to vector<1x8x1xf32>
    %82 = tpu.reciprocal %81 {approx = true} : vector<1x8x1xf32> -> vector<1x8x1xf32>
    %83 = vector.broadcast %82 : vector<1x8x1xf32> to vector<1x8x8xf32>
    %84 = arith.mulf %79, %83 : vector<1x8x8xf32>
    %85 = vector.extract_strided_slice %20 {offsets = [0, 0, 24], sizes = [1, 8, 8], strides = [1, 1, 1]} : vector<1x8x32xf32> to vector<1x8x8xf32>
    "tpu.trace_start"() <{level = 10 : i32, message = "bqk,bkd->bqd"}> : () -> ()
    %cst_34 = arith.constant dense<0.000000e+00> : vector<1x8x8xf32>
    %86 = tpu.matmul %84, %85, %cst_34 {dimension_numbers = #tpu.dot_dimension_numbers<[2], [1], [1], [2], [0, 0, 0, 1, 1, 2], [0], [0]>} : vector<1x8x8xf32>, vector<1x8x8xf32>, vector<1x8x8xf32> -> vector<1x8x8xf32>
    "tpu.trace_stop"() : () -> ()
    %87 = vector.shape_cast %86 : vector<1x8x8xf32> to vector<8x8xf32>
    %c0_35 = arith.constant 0 : index
    %c24 = arith.constant 24 : index
    %88 = vector.load %arg18[%c0_35, %c24] : memref<8x32xf32, #tpu.memory_space<vmem>>, vector<8x8xf32>
    tpu.vector_store %arg18[%c0_35, %c24], %87 {strides = array<i32>} : memref<8x32xf32, #tpu.memory_space<vmem>>, vector<8x8xf32>,
    %c0_36 = arith.constant 0 : index
    %c0_37 = arith.constant 0 : index
    %89 = vector.load %arg18[%c0_36, %c0_37] : memref<8x32xf32, #tpu.memory_space<vmem>>, vector<8x32xf32>
    %c0_38 = arith.constant 0 : index
    %c0_39 = arith.constant 0 : index
    %90 = vector.load %arg7[%c0_38, %c0_39] : memref<32x32xf32, #tpu.memory_space<vmem>>, vector<32x32xf32>
    %cst_40 = arith.constant dense<0.000000e+00> : vector<8x32xf32>
    %91 = tpu.matmul %89, %90, %cst_40 {dimension_numbers = #tpu.dot_dimension_numbers<[1], [0], [0], [1], [0, 0, 1, 1], [], []>} : vector<8x32xf32>, vector<32x32xf32>, vector<8x32xf32> -> vector<8x32xf32>
    %c0_41 = arith.constant 0 : index
    %c0_42 = arith.constant 0 : index
    %92 = vector.load %arg8[%c0_41, %c0_42] : memref<1x32xf32, #tpu.memory_space<vmem>>, vector<1x32xf32>
    %93 = vector.broadcast %92 : vector<1x32xf32> to vector<8x32xf32>
    %94 = arith.addf %91, %93 : vector<8x32xf32>
    %95 = arith.addf %2, %94 : vector<8x32xf32>
    %cst_43 = arith.constant dense<0.000000e+00> : vector<8xf32>
    %96 = vector.multi_reduction <add>, %95, %cst_43 [1] : vector<8x32xf32> to vector<8xf32>
    %97 = vector.shape_cast %96 : vector<8xf32> to vector<8x1xf32>
    %cst_44 = arith.constant 3.200000e+01 : f32
    %98 = vector.broadcast %cst_44 : f32 to vector<8x1xf32>
    %99 = arith.divf %97, %98 : vector<8x1xf32>
    %100 = vector.broadcast %99 : vector<8x1xf32> to vector<8x32xf32>
    %101 = arith.subf %95, %100 : vector<8x32xf32>
    %102 = arith.mulf %101, %101 : vector<8x32xf32>
    %cst_45 = arith.constant dense<0.000000e+00> : vector<8xf32>
    %103 = vector.multi_reduction <add>, %102, %cst_45 [1] : vector<8x32xf32> to vector<8xf32>
    %104 = vector.shape_cast %103 : vector<8xf32> to vector<8x1xf32>
    %cst_46 = arith.constant 3.200000e+01 : f32
    %105 = vector.broadcast %cst_46 : f32 to vector<8x1xf32>
    %106 = arith.divf %104, %105 : vector<8x1xf32>
    %107 = vector.broadcast %99 : vector<8x1xf32> to vector<8x32xf32>
    %108 = arith.subf %95, %107 : vector<8x32xf32>
    %cst_47 = arith.constant 9.99999974E-6 : f32
    %109 = vector.broadcast %cst_47 : f32 to vector<8x1xf32>
    %110 = arith.addf %106, %109 : vector<8x1xf32>
    %111 = math.rsqrt %110 : vector<8x1xf32>
    %112 = vector.broadcast %111 : vector<8x1xf32> to vector<8x32xf32>
    %113 = arith.mulf %108, %112 : vector<8x32xf32>
    %c0_48 = arith.constant 0 : index
    %c0_49 = arith.constant 0 : index
    %114 = vector.load %arg13[%c0_48, %c0_49] : memref<1x32xf32, #tpu.memory_space<vmem>>, vector<1x32xf32>
    %115 = vector.broadcast %114 : vector<1x32xf32> to vector<8x32xf32>
    %116 = arith.mulf %113, %115 : vector<8x32xf32>
    %c0_50 = arith.constant 0 : index
    %c0_51 = arith.constant 0 : index
    %117 = vector.load %arg14[%c0_50, %c0_51] : memref<1x32xf32, #tpu.memory_space<vmem>>, vector<1x32xf32>
    %118 = vector.broadcast %117 : vector<1x32xf32> to vector<8x32xf32>
    %119 = arith.addf %116, %118 : vector<8x32xf32>
    %c0_52 = arith.constant 0 : index
    %c0_53 = arith.constant 0 : index
    %120 = vector.load %arg9[%c0_52, %c0_53] : memref<32x128xf32, #tpu.memory_space<vmem>>, vector<32x128xf32>
    %cst_54 = arith.constant dense<0.000000e+00> : vector<8x128xf32>
    %121 = tpu.matmul %119, %120, %cst_54 {dimension_numbers = #tpu.dot_dimension_numbers<[1], [0], [0], [1], [0, 0, 1, 1], [], []>} : vector<8x32xf32>, vector<32x128xf32>, vector<8x128xf32> -> vector<8x128xf32>
    %c0_55 = arith.constant 0 : index
    %c0_56 = arith.constant 0 : index
    %122 = vector.load %arg10[%c0_55, %c0_56] : memref<1x128xf32, #tpu.memory_space<vmem>>, vector<1x128xf32>
    %123 = vector.broadcast %122 : vector<1x128xf32> to vector<8x128xf32>
    %124 = arith.addf %121, %123 : vector<8x128xf32>
    %cst_57 = arith.constant 0.000000e+00 : f32
    %125 = vector.broadcast %cst_57 : f32 to vector<8x128xf32>
    %126 = arith.maximumf %124, %125 : vector<8x128xf32>
    %c0_58 = arith.constant 0 : index
    %c0_59 = arith.constant 0 : index
    %127 = vector.load %arg11[%c0_58, %c0_59] : memref<128x32xf32, #tpu.memory_space<vmem>>, vector<128x32xf32>
    %cst_60 = arith.constant dense<0.000000e+00> : vector<8x32xf32>
    %128 = tpu.matmul %126, %127, %cst_60 {dimension_numbers = #tpu.dot_dimension_numbers<[1], [0], [0], [1], [0, 0, 1, 1], [], []>} : vector<8x128xf32>, vector<128x32xf32>, vector<8x32xf32> -> vector<8x32xf32>
    %c0_61 = arith.constant 0 : index
    %c0_62 = arith.constant 0 : index
    %129 = vector.load %arg12[%c0_61, %c0_62] : memref<1x32xf32, #tpu.memory_space<vmem>>, vector<1x32xf32>
    %130 = vector.broadcast %129 : vector<1x32xf32> to vector<8x32xf32>
    %131 = arith.addf %128, %130 : vector<8x32xf32>
    %132 = arith.addf %119, %131 : vector<8x32xf32>
    %cst_63 = arith.constant dense<0.000000e+00> : vector<8xf32>
    %133 = vector.multi_reduction <add>, %132, %cst_63 [1] : vector<8x32xf32> to vector<8xf32>
    %134 = vector.shape_cast %133 : vector<8xf32> to vector<8x1xf32>
    %cst_64 = arith.constant 3.200000e+01 : f32
    %135 = vector.broadcast %cst_64 : f32 to vector<8x1xf32>
    %136 = arith.divf %134, %135 : vector<8x1xf32>
    %137 = vector.broadcast %136 : vector<8x1xf32> to vector<8x32xf32>
    %138 = arith.subf %132, %137 : vector<8x32xf32>
    %139 = arith.mulf %138, %138 : vector<8x32xf32>
    %cst_65 = arith.constant dense<0.000000e+00> : vector<8xf32>
    %140 = vector.multi_reduction <add>, %139, %cst_65 [1] : vector<8x32xf32> to vector<8xf32>
    %141 = vector.shape_cast %140 : vector<8xf32> to vector<8x1xf32>
    %cst_66 = arith.constant 3.200000e+01 : f32
    %142 = vector.broadcast %cst_66 : f32 to vector<8x1xf32>
    %143 = arith.divf %141, %142 : vector<8x1xf32>
    %144 = vector.broadcast %136 : vector<8x1xf32> to vector<8x32xf32>
    %145 = arith.subf %132, %144 : vector<8x32xf32>
    %cst_67 = arith.constant 9.99999974E-6 : f32
    %146 = vector.broadcast %cst_67 : f32 to vector<8x1xf32>
    %147 = arith.addf %143, %146 : vector<8x1xf32>
    %148 = math.rsqrt %147 : vector<8x1xf32>
    %149 = vector.broadcast %148 : vector<8x1xf32> to vector<8x32xf32>
    %150 = arith.mulf %145, %149 : vector<8x32xf32>
    %c0_68 = arith.constant 0 : index
    %c0_69 = arith.constant 0 : index
    %151 = vector.load %arg15[%c0_68, %c0_69] : memref<1x32xf32, #tpu.memory_space<vmem>>, vector<1x32xf32>
    %152 = vector.broadcast %151 : vector<1x32xf32> to vector<8x32xf32>
    %153 = arith.mulf %150, %152 : vector<8x32xf32>
    %c0_70 = arith.constant 0 : index
    %c0_71 = arith.constant 0 : index
    %154 = vector.load %arg16[%c0_70, %c0_71] : memref<1x32xf32, #tpu.memory_space<vmem>>, vector<1x32xf32>
    %155 = vector.broadcast %154 : vector<1x32xf32> to vector<8x32xf32>
    %156 = arith.addf %153, %155 : vector<8x32xf32>
    %157 = vector.shape_cast %156 : vector<8x32xf32> to vector<1x8x32xf32>
    %c0_72 = arith.constant 0 : index
    %c0_73 = arith.constant 0 : index
    %c0_74 = arith.constant 0 : index
    %158 = vector.load %arg17[%c0_72, %c0_73, %c0_74] : memref<1x8x32xf32, #tpu.memory_space<vmem>>, vector<1x8x32xf32>
    tpu.vector_store %arg17[%c0_72, %c0_73, %c0_74], %157 {strides = array<i32>} : memref<1x8x32xf32, #tpu.memory_space<vmem>>, vector<1x8x32xf32>,
    return
  }
  func.func @transform_0(%arg0: i32) -> (i32, i32, i32) {
    %c0_i32 = arith.constant 0 : i32
    %c0_i32_0 = arith.constant 0 : i32
    %c0_i32_1 = arith.constant 0 : i32
    return %arg0, %c0_i32, %c0_i32_0 : i32, i32, i32
  }
  func.func @transform_1(%arg0: i32) -> (i32, i32, i32) {
    %c0_i32 = arith.constant 0 : i32
    %c0_i32_0 = arith.constant 0 : i32
    %c0_i32_1 = arith.constant 0 : i32
    return %arg0, %c0_i32, %c0_i32_0 : i32, i32, i32
  }
  func.func @transform_2(%arg0: i32) -> (i32, i32) {
    %c0_i32 = arith.constant 0 : i32
    %c0_i32_0 = arith.constant 0 : i32
    %c0_i32_1 = arith.constant 0 : i32
    return %c0_i32, %c0_i32_0 : i32, i32
  }
  func.func @transform_3(%arg0: i32) -> (i32, i32) {
    %c0_i32 = arith.constant 0 : i32
    %c0_i32_0 = arith.constant 0 : i32
    %c0_i32_1 = arith.constant 0 : i32
    return %c0_i32, %c0_i32_0 : i32, i32
  }
  func.func @transform_4(%arg0: i32) -> (i32, i32) {
    %c0_i32 = arith.constant 0 : i32
    %c0_i32_0 = arith.constant 0 : i32
    %c0_i32_1 = arith.constant 0 : i32
    return %c0_i32, %c0_i32_0 : i32, i32
  }
  func.func @transform_5(%arg0: i32) -> (i32, i32) {
    %c0_i32 = arith.constant 0 : i32
    %c0_i32_0 = arith.constant 0 : i32
    %c0_i32_1 = arith.constant 0 : i32
    return %c0_i32, %c0_i32_0 : i32, i32
  }
  func.func @transform_6(%arg0: i32) -> (i32, i32) {
    %c0_i32 = arith.constant 0 : i32
    %c0_i32_0 = arith.constant 0 : i32
    %c0_i32_1 = arith.constant 0 : i32
    return %c0_i32, %c0_i32_0 : i32, i32
  }
  func.func @transform_7(%arg0: i32) -> (i32, i32) {
    %c0_i32 = arith.constant 0 : i32
    %c0_i32_0 = arith.constant 0 : i32
    %c0_i32_1 = arith.constant 0 : i32
    return %c0_i32, %c0_i32_0 : i32, i32
  }
  func.func @transform_8(%arg0: i32) -> (i32, i32) {
    %c0_i32 = arith.constant 0 : i32
    %c0_i32_0 = arith.constant 0 : i32
    %c0_i32_1 = arith.constant 0 : i32
    return %c0_i32, %c0_i32_0 : i32, i32
  }
  func.func @transform_9(%arg0: i32) -> (i32, i32) {
    %c0_i32 = arith.constant 0 : i32
    %c0_i32_0 = arith.constant 0 : i32
    %c0_i32_1 = arith.constant 0 : i32
    return %c0_i32, %c0_i32_0 : i32, i32
  }
  func.func @transform_10(%arg0: i32) -> (i32, i32) {
    %c0_i32 = arith.constant 0 : i32
    %c0_i32_0 = arith.constant 0 : i32
    %c0_i32_1 = arith.constant 0 : i32
    return %c0_i32, %c0_i32_0 : i32, i32
  }
  func.func @transform_11(%arg0: i32) -> (i32, i32) {
    %c0_i32 = arith.constant 0 : i32
    %c0_i32_0 = arith.constant 0 : i32
    %c0_i32_1 = arith.constant 0 : i32
    return %c0_i32, %c0_i32_0 : i32, i32
  }
  func.func @transform_12(%arg0: i32) -> (i32, i32) {
    %c0_i32 = arith.constant 0 : i32
    %c0_i32_0 = arith.constant 0 : i32
    %c0_i32_1 = arith.constant 0 : i32
    return %c0_i32, %c0_i32_0 : i32, i32
  }
  func.func @transform_13(%arg0: i32) -> (i32, i32) {
    %c0_i32 = arith.constant 0 : i32
    %c0_i32_0 = arith.constant 0 : i32
    %c0_i32_1 = arith.constant 0 : i32
    return %c0_i32, %c0_i32_0 : i32, i32
  }
  func.func @transform_14(%arg0: i32) -> (i32, i32) {
    %c0_i32 = arith.constant 0 : i32
    %c0_i32_0 = arith.constant 0 : i32
    %c0_i32_1 = arith.constant 0 : i32
    return %c0_i32, %c0_i32_0 : i32, i32
  }
  func.func @transform_15(%arg0: i32) -> (i32, i32) {
    %c0_i32 = arith.constant 0 : i32
    %c0_i32_0 = arith.constant 0 : i32
    %c0_i32_1 = arith.constant 0 : i32
    return %c0_i32, %c0_i32_0 : i32, i32
  }
  func.func @transform_16(%arg0: i32) -> (i32, i32, i32) {
    %c0_i32 = arith.constant 0 : i32
    %c0_i32_0 = arith.constant 0 : i32
    %c0_i32_1 = arith.constant 0 : i32
    return %arg0, %c0_i32, %c0_i32_0 : i32, i32, i32
  }
}

module attributes {stable_mosaic.version = 11 : i64} {
  func.func @_attention_layer_kernel(%arg0: i32, %arg1: memref<1x8x32xf32, #tpu.memory_space<vmem>>, %arg2: memref<1x8x32xf32, #tpu.memory_space<vmem>>, %arg3: memref<32x32xf32, #tpu.memory_space<vmem>>, %arg4: memref<1x32xf32, #tpu.memory_space<vmem>>, %arg5: memref<32x64xf32, #tpu.memory_space<vmem>>, %arg6: memref<1x64xf32, #tpu.memory_space<vmem>>, %arg7: memref<32x32xf32, #tpu.memory_space<vmem>>, %arg8: memref<1x32xf32, #tpu.memory_space<vmem>>, %arg9: memref<32x128xf32, #tpu.memory_space<vmem>>, %arg10: memref<1x128xf32, #tpu.memory_space<vmem>>, %arg11: memref<128x32xf32, #tpu.memory_space<vmem>>, %arg12: memref<1x32xf32, #tpu.memory_space<vmem>>, %arg13: memref<1x32xf32, #tpu.memory_space<vmem>>, %arg14: memref<1x32xf32, #tpu.memory_space<vmem>>, %arg15: memref<1x32xf32, #tpu.memory_space<vmem>>, %arg16: memref<1x32xf32, #tpu.memory_space<vmem>>, %arg17: memref<1x8x32xf32, #tpu.memory_space<vmem>>, %arg18: memref<8x32xf32, #tpu.memory_space<vmem>>) attributes {dimension_semantics = [#tpu.dimension_semantics<parallel>], iteration_bounds = array<i64: 2>, scalar_prefetch = 0 : i64, scratch_operands = 1 : i64, tpu.core_type = #tpu.core_type<tc>, window_params = [{transform_indices = @transform_0, window_bounds = array<i64: 1, 8, 32>}, {transform_indices = @transform_1, window_bounds = array<i64: 1, 8, 32>}, {pipeline_mode = #tpu.pipeline_mode<synchronous>, transform_indices = @transform_2, window_bounds = array<i64: 32, 32>}, {pipeline_mode = #tpu.pipeline_mode<synchronous>, transform_indices = @transform_3, window_bounds = array<i64: 1, 32>}, {pipeline_mode = #tpu.pipeline_mode<synchronous>, transform_indices = @transform_4, window_bounds = array<i64: 32, 64>}, {pipeline_mode = #tpu.pipeline_mode<synchronous>, transform_indices = @transform_5, window_bounds = array<i64: 1, 64>}, {pipeline_mode = #tpu.pipeline_mode<synchronous>, transform_indices = @transform_6, window_bounds = array<i64: 32, 32>}, {pipeline_mode = #tpu.pipeline_mode<synchronous>, transform_indices = @transform_7, window_bounds = array<i64: 1, 32>}, {pipeline_mode = #tpu.pipeline_mode<synchronous>, transform_indices = @transform_8, window_bounds = array<i64: 32, 128>}, {pipeline_mode = #tpu.pipeline_mode<synchronous>, transform_indices = @transform_9, window_bounds = array<i64: 1, 128>}, {pipeline_mode = #tpu.pipeline_mode<synchronous>, transform_indices = @transform_10, window_bounds = array<i64: 128, 32>}, {pipeline_mode = #tpu.pipeline_mode<synchronous>, transform_indices = @transform_11, window_bounds = array<i64: 1, 32>}, {pipeline_mode = #tpu.pipeline_mode<synchronous>, transform_indices = @transform_12, window_bounds = array<i64: 1, 32>}, {pipeline_mode = #tpu.pipeline_mode<synchronous>, transform_indices = @transform_13, window_bounds = array<i64: 1, 32>}, {pipeline_mode = #tpu.pipeline_mode<synchronous>, transform_indices = @transform_14, window_bounds = array<i64: 1, 32>}, {pipeline_mode = #tpu.pipeline_mode<synchronous>, transform_indices = @transform_15, window_bounds = array<i64: 1, 32>}, {transform_indices = @transform_16, window_bounds = array<i64: 1, 8, 32>}]} {
    %c0 = arith.constant 0 : index
    %c0_0 = arith.constant 0 : index
    %c0_1 = arith.constant 0 : index
    %0 = vector.load %arg1[%c0, %c0_0, %c0_1] : memref<1x8x32xf32, #tpu.memory_space<vmem>>, vector<1x8x32xf32>
    %c0_2 = arith.constant 0 : index
    %c0_3 = arith.constant 0 : index
    %c0_4 = arith.constant 0 : index
    %1 = vector.load %arg2[%c0_2, %c0_3, %c0_4] : memref<1x8x32xf32, #tpu.memory_space<vmem>>, vector<1x8x32xf32>
    %2 = vector.shape_cast %0 : vector<1x8x32xf32> to vector<8x32xf32>
    %3 = vector.shape_cast %1 : vector<1x8x32xf32> to vector<8x32xf32>
    %c0_5 = arith.constant 0 : index
    %c0_6 = arith.constant 0 : index
    %4 = vector.load %arg3[%c0_5, %c0_6] : memref<32x32xf32, #tpu.memory_space<vmem>>, vector<32x32xf32>
    %cst = arith.constant dense<0.000000e+00> : vector<8x32xf32>
    %5 = tpu.matmul %3, %4, %cst {dimension_numbers = #tpu.dot_dimension_numbers<[1], [0], [0], [1], [0, 0, 1, 1], [], []>} : vector<8x32xf32>, vector<32x32xf32>, vector<8x32xf32> -> vector<8x32xf32>
    %c0_7 = arith.constant 0 : index
    %c0_8 = arith.constant 0 : index
    %6 = vector.load %arg4[%c0_7, %c0_8] : memref<1x32xf32, #tpu.memory_space<vmem>>, vector<1x32xf32>
    %7 = vector.broadcast %6 : vector<1x32xf32> to vector<8x32xf32>
    %8 = arith.addf %5, %7 : vector<8x32xf32>
    %cst_9 = arith.constant 0.353553385 : f32
    %9 = vector.broadcast %cst_9 : f32 to vector<8x32xf32>
    %10 = arith.mulf %8, %9 : vector<8x32xf32>
    %c0_10 = arith.constant 0 : index
    %c0_11 = arith.constant 0 : index
    %11 = vector.load %arg5[%c0_10, %c0_11] : memref<32x64xf32, #tpu.memory_space<vmem>>, vector<32x64xf32>
    %cst_12 = arith.constant dense<0.000000e+00> : vector<8x64xf32>
    %12 = tpu.matmul %2, %11, %cst_12 {dimension_numbers = #tpu.dot_dimension_numbers<[1], [0], [0], [1], [0, 0, 1, 1], [], []>} : vector<8x32xf32>, vector<32x64xf32>, vector<8x64xf32> -> vector<8x64xf32>
    %c0_13 = arith.constant 0 : index
    %c0_14 = arith.constant 0 : index
    %13 = vector.load %arg6[%c0_13, %c0_14] : memref<1x64xf32, #tpu.memory_space<vmem>>, vector<1x64xf32>
    %14 = vector.broadcast %13 : vector<1x64xf32> to vector<8x64xf32>
    %15 = arith.addf %12, %14 : vector<8x64xf32>
    %16 = vector.shape_cast %10 : vector<8x32xf32> to vector<1x8x32xf32>
    %17 = vector.extract_strided_slice %15 {offsets = [0, 0], sizes = [8, 32], strides = [1, 1]} : vector<8x64xf32> to vector<8x32xf32>
    %18 = vector.shape_cast %17 : vector<8x32xf32> to vector<1x8x32xf32>
    %19 = vector.extract_strided_slice %15 {offsets = [0, 32], sizes = [8, 32], strides = [1, 1]} : vector<8x64xf32> to vector<8x32xf32>
    %20 = vector.shape_cast %19 : vector<8x32xf32> to vector<1x8x32xf32>
    %21 = vector.extract_strided_slice %16 {offsets = [0, 0, 0], sizes = [1, 8, 8], strides = [1, 1, 1]} : vector<1x8x32xf32> to vector<1x8x8xf32>
    %22 = vector.extract_strided_slice %18 {offsets = [0, 0, 0], sizes = [1, 8, 8], strides = [1, 1, 1]} : vector<1x8x32xf32> to vector<1x8x8xf32>
    "tpu.trace_start"() <{level = 10 : i32, message = "bqd,bkd->bqk"}> : () -> ()
    %cst_15 = arith.constant dense<0.000000e+00> : vector<1x8x8xf32>
    %23 = tpu.matmul %21, %22, %cst_15 {dimension_numbers = #tpu.dot_dimension_numbers<[2], [2], [1], [1], [0, 0, 0, 1, 1, 1], [0], [0]>} : vector<1x8x8xf32>, vector<1x8x8xf32>, vector<1x8x8xf32> -> vector<1x8x8xf32>
    "tpu.trace_stop"() : () -> ()
    %cst_16 = arith.constant dense<0xFF800000> : vector<1x8xf32>
    %24 = vector.multi_reduction <maximumf>, %23, %cst_16 [2] : vector<1x8x8xf32> to vector<1x8xf32>
    %25 = vector.shape_cast %24 : vector<1x8xf32> to vector<1x8x1xf32>
    %26 = vector.broadcast %25 : vector<1x8x1xf32> to vector<1x8x8xf32>
    %27 = arith.subf %23, %26 : vector<1x8x8xf32>
    %28 = math.exp %27 : vector<1x8x8xf32>
    %cst_17 = arith.constant dense<0.000000e+00> : vector<1x8xf32>
    %29 = vector.multi_reduction <add>, %28, %cst_17 [2] : vector<1x8x8xf32> to vector<1x8xf32>
    %30 = vector.shape_cast %29 : vector<1x8xf32> to vector<1x8x1xf32>
    %31 = tpu.reciprocal %30 {approx = true} : vector<1x8x1xf32> -> vector<1x8x1xf32>
    %32 = vector.broadcast %31 : vector<1x8x1xf32> to vector<1x8x8xf32>
    %33 = arith.mulf %28, %32 : vector<1x8x8xf32>
    %34 = vector.extract_strided_slice %20 {offsets = [0, 0, 0], sizes = [1, 8, 8], strides = [1, 1, 1]} : vector<1x8x32xf32> to vector<1x8x8xf32>
    "tpu.trace_start"() <{level = 10 : i32, message = "bqk,bkd->bqd"}> : () -> ()
    %cst_18 = arith.constant dense<0.000000e+00> : vector<1x8x8xf32>
    %35 = tpu.matmul %33, %34, %cst_18 {dimension_numbers = #tpu.dot_dimension_numbers<[2], [1], [1], [2], [0, 0, 0, 1, 1, 2], [0], [0]>} : vector<1x8x8xf32>, vector<1x8x8xf32>, vector<1x8x8xf32> -> vector<1x8x8xf32>
    "tpu.trace_stop"() : () -> ()
    %36 = vector.shape_cast %35 : vector<1x8x8xf32> to vector<8x8xf32>
    %c0_19 = arith.constant 0 : index
    %c0_20 = arith.constant 0 : index
    %37 = vector.load %arg18[%c0_19, %c0_20] : memref<8x32xf32, #tpu.memory_space<vmem>>, vector<8x8xf32>
    tpu.vector_store %arg18[%c0_19, %c0_20], %36 {strides = array<i32>} : memref<8x32xf32, #tpu.memory_space<vmem>>, vector<8x8xf32>,
    %38 = vector.extract_strided_slice %16 {offsets = [0, 0, 8], sizes = [1, 8, 8], strides = [1, 1, 1]} : vector<1x8x32xf32> to vector<1x8x8xf32>
    %39 = vector.extract_strided_slice %18 {offsets = [0, 0, 8], sizes = [1, 8, 8], strides = [1, 1, 1]} : vector<1x8x32xf32> to vector<1x8x8xf32>
    "tpu.trace_start"() <{level = 10 : i32, message = "bqd,bkd->bqk"}> : () -> ()
    %cst_21 = arith.constant dense<0.000000e+00> : vector<1x8x8xf32>
    %40 = tpu.matmul %38, %39, %cst_21 {dimension_numbers = #tpu.dot_dimension_numbers<[2], [2], [1], [1], [0, 0, 0, 1, 1, 1], [0], [0]>} : vector<1x8x8xf32>, vector<1x8x8xf32>, vector<1x8x8xf32> -> vector<1x8x8xf32>
    "tpu.trace_stop"() : () -> ()
    %cst_22 = arith.constant dense<0xFF800000> : vector<1x8xf32>
    %41 = vector.multi_reduction <maximumf>, %40, %cst_22 [2] : vector<1x8x8xf32> to vector<1x8xf32>
    %42 = vector.shape_cast %41 : vector<1x8xf32> to vector<1x8x1xf32>
    %43 = vector.broadcast %42 : vector<1x8x1xf32> to vector<1x8x8xf32>
    %44 = arith.subf %40, %43 : vector<1x8x8xf32>
    %45 = math.exp %44 : vector<1x8x8xf32>
    %cst_23 = arith.constant dense<0.000000e+00> : vector<1x8xf32>
    %46 = vector.multi_reduction <add>, %45, %cst_23 [2] : vector<1x8x8xf32> to vector<1x8xf32>
    %47 = vector.shape_cast %46 : vector<1x8xf32> to vector<1x8x1xf32>
    %48 = tpu.reciprocal %47 {approx = true} : vector<1x8x1xf32> -> vector<1x8x1xf32>
    %49 = vector.broadcast %48 : vector<1x8x1xf32> to vector<1x8x8xf32>
    %50 = arith.mulf %45, %49 : vector<1x8x8xf32>
    %51 = vector.extract_strided_slice %20 {offsets = [0, 0, 8], sizes = [1, 8, 8], strides = [1, 1, 1]} : vector<1x8x32xf32> to vector<1x8x8xf32>
    "tpu.trace_start"() <{level = 10 : i32, message = "bqk,bkd->bqd"}> : () -> ()
    %cst_24 = arith.constant dense<0.000000e+00> : vector<1x8x8xf32>
    %52 = tpu.matmul %50, %51, %cst_24 {dimension_numbers = #tpu.dot_dimension_numbers<[2], [1], [1], [2], [0, 0, 0, 1, 1, 2], [0], [0]>} : vector<1x8x8xf32>, vector<1x8x8xf32>, vector<1x8x8xf32> -> vector<1x8x8xf32>
    "tpu.trace_stop"() : () -> ()
    %53 = vector.shape_cast %52 : vector<1x8x8xf32> to vector<8x8xf32>
    %c0_25 = arith.constant 0 : index
    %c8 = arith.constant 8 : index
    %54 = vector.load %arg18[%c0_25, %c8] : memref<8x32xf32, #tpu.memory_space<vmem>>, vector<8x8xf32>
    tpu.vector_store %arg18[%c0_25, %c8], %53 {strides = array<i32>} : memref<8x32xf32, #tpu.memory_space<vmem>>, vector<8x8xf32>,
    %55 = vector.extract_strided_slice %16 {offsets = [0, 0, 16], sizes = [1, 8, 8], strides = [1, 1, 1]} : vector<1x8x32xf32> to vector<1x8x8xf32>
    %56 = vector.extract_strided_slice %18 {offsets = [0, 0, 16], sizes = [1, 8, 8], strides = [1, 1, 1]} : vector<1x8x32xf32> to vector<1x8x8xf32>
    "tpu.trace_start"() <{level = 10 : i32, message = "bqd,bkd->bqk"}> : () -> ()
    %cst_26 = arith.constant dense<0.000000e+00> : vector<1x8x8xf32>
    %57 = tpu.matmul %55, %56, %cst_26 {dimension_numbers = #tpu.dot_dimension_numbers<[2], [2], [1], [1], [0, 0, 0, 1, 1, 1], [0], [0]>} : vector<1x8x8xf32>, vector<1x8x8xf32>, vector<1x8x8xf32> -> vector<1x8x8xf32>
    "tpu.trace_stop"() : () -> ()
    %cst_27 = arith.constant dense<0xFF800000> : vector<1x8xf32>
    %58 = vector.multi_reduction <maximumf>, %57, %cst_27 [2] : vector<1x8x8xf32> to vector<1x8xf32>
    %59 = vector.shape_cast %58 : vector<1x8xf32> to vector<1x8x1xf32>
    %60 = vector.broadcast %59 : vector<1x8x1xf32> to vector<1x8x8xf32>
    %61 = arith.subf %57, %60 : vector<1x8x8xf32>
    %62 = math.exp %61 : vector<1x8x8xf32>
    %cst_28 = arith.constant dense<0.000000e+00> : vector<1x8xf32>
    %63 = vector.multi_reduction <add>, %62, %cst_28 [2] : vector<1x8x8xf32> to vector<1x8xf32>
    %64 = vector.shape_cast %63 : vector<1x8xf32> to vector<1x8x1xf32>
    %65 = tpu.reciprocal %64 {approx = true} : vector<1x8x1xf32> -> vector<1x8x1xf32>
    %66 = vector.broadcast %65 : vector<1x8x1xf32> to vector<1x8x8xf32>
    %67 = arith.mulf %62, %66 : vector<1x8x8xf32>
    %68 = vector.extract_strided_slice %20 {offsets = [0, 0, 16], sizes = [1, 8, 8], strides = [1, 1, 1]} : vector<1x8x32xf32> to vector<1x8x8xf32>
    "tpu.trace_start"() <{level = 10 : i32, message = "bqk,bkd->bqd"}> : () -> ()
    %cst_29 = arith.constant dense<0.000000e+00> : vector<1x8x8xf32>
    %69 = tpu.matmul %67, %68, %cst_29 {dimension_numbers = #tpu.dot_dimension_numbers<[2], [1], [1], [2], [0, 0, 0, 1, 1, 2], [0], [0]>} : vector<1x8x8xf32>, vector<1x8x8xf32>, vector<1x8x8xf32> -> vector<1x8x8xf32>
    "tpu.trace_stop"() : () -> ()
    %70 = vector.shape_cast %69 : vector<1x8x8xf32> to vector<8x8xf32>
    %c0_30 = arith.constant 0 : index
    %c16 = arith.constant 16 : index
    %71 = vector.load %arg18[%c0_30, %c16] : memref<8x32xf32, #tpu.memory_space<vmem>>, vector<8x8xf32>
    tpu.vector_store %arg18[%c0_30, %c16], %70 {strides = array<i32>} : memref<8x32xf32, #tpu.memory_space<vmem>>, vector<8x8xf32>,
    %72 = vector.extract_strided_slice %16 {offsets = [0, 0, 24], sizes = [1, 8, 8], strides = [1, 1, 1]} : vector<1x8x32xf32> to vector<1x8x8xf32>
    %73 = vector.extract_strided_slice %18 {offsets = [0, 0, 24], sizes = [1, 8, 8], strides = [1, 1, 1]} : vector<1x8x32xf32> to vector<1x8x8xf32>
    "tpu.trace_start"() <{level = 10 : i32, message = "bqd,bkd->bqk"}> : () -> ()
    %cst_31 = arith.constant dense<0.000000e+00> : vector<1x8x8xf32>
    %74 = tpu.matmul %72, %73, %cst_31 {dimension_numbers = #tpu.dot_dimension_numbers<[2], [2], [1], [1], [0, 0, 0, 1, 1, 1], [0], [0]>} : vector<1x8x8xf32>, vector<1x8x8xf32>, vector<1x8x8xf32> -> vector<1x8x8xf32>
    "tpu.trace_stop"() : () -> ()
    %cst_32 = arith.constant dense<0xFF800000> : vector<1x8xf32>
    %75 = vector.multi_reduction <maximumf>, %74, %cst_32 [2] : vector<1x8x8xf32> to vector<1x8xf32>
    %76 = vector.shape_cast %75 : vector<1x8xf32> to vector<1x8x1xf32>
    %77 = vector.broadcast %76 : vector<1x8x1xf32> to vector<1x8x8xf32>
    %78 = arith.subf %74, %77 : vector<1x8x8xf32>
    %79 = math.exp %78 : vector<1x8x8xf32>
    %cst_33 = arith.constant dense<0.000000e+00> : vector<1x8xf32>
    %80 = vector.multi_reduction <add>, %79, %cst_33 [2] : vector<1x8x8xf32> to vector<1x8xf32>
    %81 = vector.shape_cast %80 : vector<1x8xf32> to vector<1x8x1xf32>
    %82 = tpu.reciprocal %81 {approx = true} : vector<1x8x1xf32> -> vector<1x8x1xf32>
    %83 = vector.broadcast %82 : vector<1x8x1xf32> to vector<1x8x8xf32>
    %84 = arith.mulf %79, %83 : vector<1x8x8xf32>
    %85 = vector.extract_strided_slice %20 {offsets = [0, 0, 24], sizes = [1, 8, 8], strides = [1, 1, 1]} : vector<1x8x32xf32> to vector<1x8x8xf32>
    "tpu.trace_start"() <{level = 10 : i32, message = "bqk,bkd->bqd"}> : () -> ()
    %cst_34 = arith.constant dense<0.000000e+00> : vector<1x8x8xf32>
    %86 = tpu.matmul %84, %85, %cst_34 {dimension_numbers = #tpu.dot_dimension_numbers<[2], [1], [1], [2], [0, 0, 0, 1, 1, 2], [0], [0]>} : vector<1x8x8xf32>, vector<1x8x8xf32>, vector<1x8x8xf32> -> vector<1x8x8xf32>
    "tpu.trace_stop"() : () -> ()
    %87 = vector.shape_cast %86 : vector<1x8x8xf32> to vector<8x8xf32>
    %c0_35 = arith.constant 0 : index
    %c24 = arith.constant 24 : index
    %88 = vector.load %arg18[%c0_35, %c24] : memref<8x32xf32, #tpu.memory_space<vmem>>, vector<8x8xf32>
    tpu.vector_store %arg18[%c0_35, %c24], %87 {strides = array<i32>} : memref<8x32xf32, #tpu.memory_space<vmem>>, vector<8x8xf32>,
    %c0_36 = arith.constant 0 : index
    %c0_37 = arith.constant 0 : index
    %89 = vector.load %arg18[%c0_36, %c0_37] : memref<8x32xf32, #tpu.memory_space<vmem>>, vector<8x32xf32>
    %c0_38 = arith.constant 0 : index
    %c0_39 = arith.constant 0 : index
    %90 = vector.load %arg7[%c0_38, %c0_39] : memref<32x32xf32, #tpu.memory_space<vmem>>, vector<32x32xf32>
    %cst_40 = arith.constant dense<0.000000e+00> : vector<8x32xf32>
    %91 = tpu.matmul %89, %90, %cst_40 {dimension_numbers = #tpu.dot_dimension_numbers<[1], [0], [0], [1], [0, 0, 1, 1], [], []>} : vector<8x32xf32>, vector<32x32xf32>, vector<8x32xf32> -> vector<8x32xf32>
    %c0_41 = arith.constant 0 : index
    %c0_42 = arith.constant 0 : index
    %92 = vector.load %arg8[%c0_41, %c0_42] : memref<1x32xf32, #tpu.memory_space<vmem>>, vector<1x32xf32>
    %93 = vector.broadcast %92 : vector<1x32xf32> to vector<8x32xf32>
    %94 = arith.addf %91, %93 : vector<8x32xf32>
    %95 = arith.addf %2, %94 : vector<8x32xf32>
    %cst_43 = arith.constant dense<0.000000e+00> : vector<8xf32>
    %96 = vector.multi_reduction <add>, %95, %cst_43 [1] : vector<8x32xf32> to vector<8xf32>
    %97 = vector.shape_cast %96 : vector<8xf32> to vector<8x1xf32>
    %cst_44 = arith.constant 3.200000e+01 : f32
    %98 = vector.broadcast %cst_44 : f32 to vector<8x1xf32>
    %99 = arith.divf %97, %98 : vector<8x1xf32>
    %100 = vector.broadcast %99 : vector<8x1xf32> to vector<8x32xf32>
    %101 = arith.subf %95, %100 : vector<8x32xf32>
    %102 = arith.mulf %101, %101 : vector<8x32xf32>
    %cst_45 = arith.constant dense<0.000000e+00> : vector<8xf32>
    %103 = vector.multi_reduction <add>, %102, %cst_45 [1] : vector<8x32xf32> to vector<8xf32>
    %104 = vector.shape_cast %103 : vector<8xf32> to vector<8x1xf32>
    %cst_46 = arith.constant 3.200000e+01 : f32
    %105 = vector.broadcast %cst_46 : f32 to vector<8x1xf32>
    %106 = arith.divf %104, %105 : vector<8x1xf32>
    %107 = vector.broadcast %99 : vector<8x1xf32> to vector<8x32xf32>
    %108 = arith.subf %95, %107 : vector<8x32xf32>
    %cst_47 = arith.constant 9.99999974E-6 : f32
    %109 = vector.broadcast %cst_47 : f32 to vector<8x1xf32>
    %110 = arith.addf %106, %109 : vector<8x1xf32>
    %111 = math.rsqrt %110 : vector<8x1xf32>
    %112 = vector.broadcast %111 : vector<8x1xf32> to vector<8x32xf32>
    %113 = arith.mulf %108, %112 : vector<8x32xf32>
    %c0_48 = arith.constant 0 : index
    %c0_49 = arith.constant 0 : index
    %114 = vector.load %arg13[%c0_48, %c0_49] : memref<1x32xf32, #tpu.memory_space<vmem>>, vector<1x32xf32>
    %115 = vector.broadcast %114 : vector<1x32xf32> to vector<8x32xf32>
    %116 = arith.mulf %113, %115 : vector<8x32xf32>
    %c0_50 = arith.constant 0 : index
    %c0_51 = arith.constant 0 : index
    %117 = vector.load %arg14[%c0_50, %c0_51] : memref<1x32xf32, #tpu.memory_space<vmem>>, vector<1x32xf32>
    %118 = vector.broadcast %117 : vector<1x32xf32> to vector<8x32xf32>
    %119 = arith.addf %116, %118 : vector<8x32xf32>
    %c0_52 = arith.constant 0 : index
    %c0_53 = arith.constant 0 : index
    %120 = vector.load %arg9[%c0_52, %c0_53] : memref<32x128xf32, #tpu.memory_space<vmem>>, vector<32x128xf32>
    %cst_54 = arith.constant dense<0.000000e+00> : vector<8x128xf32>
    %121 = tpu.matmul %119, %120, %cst_54 {dimension_numbers = #tpu.dot_dimension_numbers<[1], [0], [0], [1], [0, 0, 1, 1], [], []>} : vector<8x32xf32>, vector<32x128xf32>, vector<8x128xf32> -> vector<8x128xf32>
    %c0_55 = arith.constant 0 : index
    %c0_56 = arith.constant 0 : index
    %122 = vector.load %arg10[%c0_55, %c0_56] : memref<1x128xf32, #tpu.memory_space<vmem>>, vector<1x128xf32>
    %123 = vector.broadcast %122 : vector<1x128xf32> to vector<8x128xf32>
    %124 = arith.addf %121, %123 : vector<8x128xf32>
    %cst_57 = arith.constant 0.000000e+00 : f32
    %125 = vector.broadcast %cst_57 : f32 to vector<8x128xf32>
    %126 = arith.maximumf %124, %125 : vector<8x128xf32>
    %c0_58 = arith.constant 0 : index
    %c0_59 = arith.constant 0 : index
    %127 = vector.load %arg11[%c0_58, %c0_59] : memref<128x32xf32, #tpu.memory_space<vmem>>, vector<128x32xf32>
    %cst_60 = arith.constant dense<0.000000e+00> : vector<8x32xf32>
    %128 = tpu.matmul %126, %127, %cst_60 {dimension_numbers = #tpu.dot_dimension_numbers<[1], [0], [0], [1], [0, 0, 1, 1], [], []>} : vector<8x128xf32>, vector<128x32xf32>, vector<8x32xf32> -> vector<8x32xf32>
    %c0_61 = arith.constant 0 : index
    %c0_62 = arith.constant 0 : index
    %129 = vector.load %arg12[%c0_61, %c0_62] : memref<1x32xf32, #tpu.memory_space<vmem>>, vector<1x32xf32>
    %130 = vector.broadcast %129 : vector<1x32xf32> to vector<8x32xf32>
    %131 = arith.addf %128, %130 : vector<8x32xf32>
    %132 = arith.addf %119, %131 : vector<8x32xf32>
    %cst_63 = arith.constant dense<0.000000e+00> : vector<8xf32>
    %133 = vector.multi_reduction <add>, %132, %cst_63 [1] : vector<8x32xf32> to vector<8xf32>
    %134 = vector.shape_cast %133 : vector<8xf32> to vector<8x1xf32>
    %cst_64 = arith.constant 3.200000e+01 : f32
    %135 = vector.broadcast %cst_64 : f32 to vector<8x1xf32>
    %136 = arith.divf %134, %135 : vector<8x1xf32>
    %137 = vector.broadcast %136 : vector<8x1xf32> to vector<8x32xf32>
    %138 = arith.subf %132, %137 : vector<8x32xf32>
    %139 = arith.mulf %138, %138 : vector<8x32xf32>
    %cst_65 = arith.constant dense<0.000000e+00> : vector<8xf32>
    %140 = vector.multi_reduction <add>, %139, %cst_65 [1] : vector<8x32xf32> to vector<8xf32>
    %141 = vector.shape_cast %140 : vector<8xf32> to vector<8x1xf32>
    %cst_66 = arith.constant 3.200000e+01 : f32
    %142 = vector.broadcast %cst_66 : f32 to vector<8x1xf32>
    %143 = arith.divf %141, %142 : vector<8x1xf32>
    %144 = vector.broadcast %136 : vector<8x1xf32> to vector<8x32xf32>
    %145 = arith.subf %132, %144 : vector<8x32xf32>
    %cst_67 = arith.constant 9.99999974E-6 : f32
    %146 = vector.broadcast %cst_67 : f32 to vector<8x1xf32>
    %147 = arith.addf %143, %146 : vector<8x1xf32>
    %148 = math.rsqrt %147 : vector<8x1xf32>
    %149 = vector.broadcast %148 : vector<8x1xf32> to vector<8x32xf32>
    %150 = arith.mulf %145, %149 : vector<8x32xf32>
    %c0_68 = arith.constant 0 : index
    %c0_69 = arith.constant 0 : index
    %151 = vector.load %arg15[%c0_68, %c0_69] : memref<1x32xf32, #tpu.memory_space<vmem>>, vector<1x32xf32>
    %152 = vector.broadcast %151 : vector<1x32xf32> to vector<8x32xf32>
    %153 = arith.mulf %150, %152 : vector<8x32xf32>
    %c0_70 = arith.constant 0 : index
    %c0_71 = arith.constant 0 : index
    %154 = vector.load %arg16[%c0_70, %c0_71] : memref<1x32xf32, #tpu.memory_space<vmem>>, vector<1x32xf32>
    %155 = vector.broadcast %154 : vector<1x32xf32> to vector<8x32xf32>
    %156 = arith.addf %153, %155 : vector<8x32xf32>
    %157 = vector.shape_cast %156 : vector<8x32xf32> to vector<1x8x32xf32>
    %c0_72 = arith.constant 0 : index
    %c0_73 = arith.constant 0 : index
    %c0_74 = arith.constant 0 : index
    %158 = vector.load %arg17[%c0_72, %c0_73, %c0_74] : memref<1x8x32xf32, #tpu.memory_space<vmem>>, vector<1x8x32xf32>
    tpu.vector_store %arg17[%c0_72, %c0_73, %c0_74], %157 {strides = array<i32>} : memref<1x8x32xf32, #tpu.memory_space<vmem>>, vector<1x8x32xf32>,
    return
  }
  func.func @transform_0(%arg0: i32) -> (i32, i32, i32) {
    %c0_i32 = arith.constant 0 : i32
    %c0_i32_0 = arith.constant 0 : i32
    %c0_i32_1 = arith.constant 0 : i32
    return %arg0, %c0_i32, %c0_i32_0 : i32, i32, i32
  }
  func.func @transform_1(%arg0: i32) -> (i32, i32, i32) {
    %c0_i32 = arith.constant 0 : i32
    %c0_i32_0 = arith.constant 0 : i32
    %c0_i32_1 = arith.constant 0 : i32
    return %arg0, %c0_i32, %c0_i32_0 : i32, i32, i32
  }
  func.func @transform_2(%arg0: i32) -> (i32, i32) {
    %c0_i32 = arith.constant 0 : i32
    %c0_i32_0 = arith.constant 0 : i32
    %c0_i32_1 = arith.constant 0 : i32
    return %c0_i32, %c0_i32_0 : i32, i32
  }
  func.func @transform_3(%arg0: i32) -> (i32, i32) {
    %c0_i32 = arith.constant 0 : i32
    %c0_i32_0 = arith.constant 0 : i32
    %c0_i32_1 = arith.constant 0 : i32
    return %c0_i32, %c0_i32_0 : i32, i32
  }
  func.func @transform_4(%arg0: i32) -> (i32, i32) {
    %c0_i32 = arith.constant 0 : i32
    %c0_i32_0 = arith.constant 0 : i32
    %c0_i32_1 = arith.constant 0 : i32
    return %c0_i32, %c0_i32_0 : i32, i32
  }
  func.func @transform_5(%arg0: i32) -> (i32, i32) {
    %c0_i32 = arith.constant 0 : i32
    %c0_i32_0 = arith.constant 0 : i32
    %c0_i32_1 = arith.constant 0 : i32
    return %c0_i32, %c0_i32_0 : i32, i32
  }
  func.func @transform_6(%arg0: i32) -> (i32, i32) {
    %c0_i32 = arith.constant 0 : i32
    %c0_i32_0 = arith.constant 0 : i32
    %c0_i32_1 = arith.constant 0 : i32
    return %c0_i32, %c0_i32_0 : i32, i32
  }
  func.func @transform_7(%arg0: i32) -> (i32, i32) {
    %c0_i32 = arith.constant 0 : i32
    %c0_i32_0 = arith.constant 0 : i32
    %c0_i32_1 = arith.constant 0 : i32
    return %c0_i32, %c0_i32_0 : i32, i32
  }
  func.func @transform_8(%arg0: i32) -> (i32, i32) {
    %c0_i32 = arith.constant 0 : i32
    %c0_i32_0 = arith.constant 0 : i32
    %c0_i32_1 = arith.constant 0 : i32
    return %c0_i32, %c0_i32_0 : i32, i32
  }
  func.func @transform_9(%arg0: i32) -> (i32, i32) {
    %c0_i32 = arith.constant 0 : i32
    %c0_i32_0 = arith.constant 0 : i32
    %c0_i32_1 = arith.constant 0 : i32
    return %c0_i32, %c0_i32_0 : i32, i32
  }
  func.func @transform_10(%arg0: i32) -> (i32, i32) {
    %c0_i32 = arith.constant 0 : i32
    %c0_i32_0 = arith.constant 0 : i32
    %c0_i32_1 = arith.constant 0 : i32
    return %c0_i32, %c0_i32_0 : i32, i32
  }
  func.func @transform_11(%arg0: i32) -> (i32, i32) {
    %c0_i32 = arith.constant 0 : i32
    %c0_i32_0 = arith.constant 0 : i32
    %c0_i32_1 = arith.constant 0 : i32
    return %c0_i32, %c0_i32_0 : i32, i32
  }
  func.func @transform_12(%arg0: i32) -> (i32, i32) {
    %c0_i32 = arith.constant 0 : i32
    %c0_i32_0 = arith.constant 0 : i32
    %c0_i32_1 = arith.constant 0 : i32
    return %c0_i32, %c0_i32_0 : i32, i32
  }
  func.func @transform_13(%arg0: i32) -> (i32, i32) {
    %c0_i32 = arith.constant 0 : i32
    %c0_i32_0 = arith.constant 0 : i32
    %c0_i32_1 = arith.constant 0 : i32
    return %c0_i32, %c0_i32_0 : i32, i32
  }
  func.func @transform_14(%arg0: i32) -> (i32, i32) {
    %c0_i32 = arith.constant 0 : i32
    %c0_i32_0 = arith.constant 0 : i32
    %c0_i32_1 = arith.constant 0 : i32
    return %c0_i32, %c0_i32_0 : i32, i32
  }
  func.func @transform_15(%arg0: i32) -> (i32, i32) {
    %c0_i32 = arith.constant 0 : i32
    %c0_i32_0 = arith.constant 0 : i32
    %c0_i32_1 = arith.constant 0 : i32
    return %c0_i32, %c0_i32_0 : i32, i32
  }
  func.func @transform_16(%arg0: i32) -> (i32, i32, i32) {
    %c0_i32 = arith.constant 0 : i32
    %c0_i32_0 = arith.constant 0 : i32
    %c0_i32_1 = arith.constant 0 : i32
    return %arg0, %c0_i32, %c0_i32_0 : i32, i32, i32
  }
}

</mosaic_0001>

<llo_original>
// kernel: tpu_custom_call.1
$region0: #{tpu_custom_call.1}
  #allocation0 [shape = 'u32[]', space=smem, size = 0x4, offset = 0x4, fixed_abs, tag = 'smem constant byte address 0x4 - core index']
  #allocation1 [shape = 'u32[144,128]{1,0:T(1,128)}', space=vmem, size = 0x12000, scoped, tag = 'internal scratch']
  #allocation2 [shape = 'f32[8,32]{1,0:T(8,128)}', space=vmem, size = 0x1000, scoped, tag = 'scratch operand']
  %s0 = inlined_call_operand.vmem [shape: f32[2,8,32], index: 0, kind: input, shape index: {}]
  %s1 = inlined_call_operand.vmem [shape: f32[2,8,32], index: 1, kind: input, shape index: {}]
  %s2 = inlined_call_operand.vmem [shape: f32[32,32], index: 2, kind: input, shape index: {}]
  %s3 = inlined_call_operand.vmem [shape: f32[1,32], index: 3, kind: input, shape index: {}]
  %s4 = inlined_call_operand.vmem [shape: f32[32,64], index: 4, kind: input, shape index: {}]
  %s5 = inlined_call_operand.vmem [shape: f32[1,64], index: 5, kind: input, shape index: {}]
  %s6 = inlined_call_operand.vmem [shape: f32[32,32], index: 6, kind: input, shape index: {}]
  %s7 = inlined_call_operand.vmem [shape: f32[1,32], index: 7, kind: input, shape index: {}]
  %s8 = inlined_call_operand.vmem [shape: f32[32,128], index: 8, kind: input, shape index: {}]
  %s9 = inlined_call_operand.vmem [shape: f32[1,128], index: 9, kind: input, shape index: {}]
  %s10 = inlined_call_operand.vmem [shape: f32[128,32], index: 10, kind: input, shape index: {}]
  %s11 = inlined_call_operand.vmem [shape: f32[1,32], index: 11, kind: input, shape index: {}]
  %s12 = inlined_call_operand.vmem [shape: f32[1,32], index: 12, kind: input, shape index: {}]
  %s13 = inlined_call_operand.vmem [shape: f32[1,32], index: 13, kind: input, shape index: {}]
  %s14 = inlined_call_operand.vmem [shape: f32[1,32], index: 14, kind: input, shape index: {}]
  %s15 = inlined_call_operand.vmem [shape: f32[1,32], index: 15, kind: input, shape index: {}]
  %s16 = inlined_call_operand.hbm [shape: f32[2,8,32], index: 16, kind: output, shape index: {}]
  %s17 = sld [smem:[#allocation0]]
  $region97: #{tpu_custom_call.1} parent=0
    _
  %s19 = ssub.s32 1, %s17
  %s20 = scalar_select 0, %s19, %s17
  $region1: #{tpu_custom_call.1} parent=0
    #allocation3 [shape = 'u8[8192]{0}', space=vmem, size = 0x2000, scoped, tag = 'output window, operand 0']
    #allocation4 [shape = 's32[2]{0}', space=sflag, size = 0x8, scoped, tag = 'scoped memory for tpu_custom_call.1']
    %21 = vsyncpa [#allocation4], 0
    %s22 = scalar_lea.sflag [#allocation4], 1
    %23 = vsyncpa %s22, 0
    loop: start=0, step=1, limit=4
    $region2: #{tpu_custom_call.1} parent=1 // loop_pre_header
      _
    $region3: #{tpu_custom_call.1} parent=1 // loop_header
      %s25 = sphi 0, %s29
      %p26 = scmp.ge.s32.totalorder %s25, 4
      %s35 = sphi 0, %s37
      %s38 = sphi 0, %s35
      %s39 = sphi 0, %s38
      %s55 = sphi 0, %s39
      %s61 = sphi 0, %s63
      %s64 = sphi 0, %s61
      %s65 = sphi 0, %s64
      %s81 = sphi 0, %s65
      %s85 = sphi 0, %s85
      %s87 = sphi 0, %s85
      %s88 = sphi 0, %s87
      %s102 = sphi 0, %s88
      %s106 = sphi 0, %s106
      %s108 = sphi 0, %s106
      %s109 = sphi 0, %s108
      %s123 = sphi 0, %s109
      %s127 = sphi 0, %s127
      %s129 = sphi 0, %s127
      %s130 = sphi 0, %s129
      %s144 = sphi 0, %s130
      %s148 = sphi 0, %s148
      %s150 = sphi 0, %s148
      %s151 = sphi 0, %s150
      %s165 = sphi 0, %s151
      %s169 = sphi 0, %s169
      %s171 = sphi 0, %s169
      %s172 = sphi 0, %s171
      %s186 = sphi 0, %s172
      %s190 = sphi 0, %s190
      %s192 = sphi 0, %s190
      %s193 = sphi 0, %s192
      %s207 = sphi 0, %s193
      %s211 = sphi 0, %s211
      %s213 = sphi 0, %s211
      %s214 = sphi 0, %s213
      %s228 = sphi 0, %s214
      %s232 = sphi 0, %s232
      %s234 = sphi 0, %s232
      %s235 = sphi 0, %s234
      %s249 = sphi 0, %s235
      %s253 = sphi 0, %s253
      %s255 = sphi 0, %s253
      %s256 = sphi 0, %s255
      %s270 = sphi 0, %s256
      %s274 = sphi 0, %s274
      %s276 = sphi 0, %s274
      %s277 = sphi 0, %s276
      %s291 = sphi 0, %s277
      %s295 = sphi 0, %s295
      %s297 = sphi 0, %s295
      %s298 = sphi 0, %s297
      %s312 = sphi 0, %s298
      %s316 = sphi 0, %s316
      %s318 = sphi 0, %s316
      %s319 = sphi 0, %s318
      %s333 = sphi 0, %s319
      %s337 = sphi 0, %s337
      %s339 = sphi 0, %s337
      %s340 = sphi 0, %s339
      %s354 = sphi 0, %s340
      %s358 = sphi 0, %s358
      %s360 = sphi 0, %s358
      %s361 = sphi 0, %s360
      %s375 = sphi 0, %s361
      %s381 = sphi 0, %s383
      %s384 = sphi 0, %s381
      %s385 = sphi 0, %s384
      %s401 = sphi 0, %s385
    $region4: #{tpu_custom_call.1} parent=1 // loop_header_branch
      %28 = sbr.rel (%p26) target = $region8
    $region5: #{tpu_custom_call.1} parent=1 // loop_body
      %s30 = ssub.s32 %s25, 1
      %s31 = ssub.s32 %s25, 2
      %s32 = sadd.s32 %s25, 1
      %s33 = ssub.s32 %s25, %s32
      %p34 = scmp.eq.s32.totalorder %s33, 0
      %s36 = sadd.s32 %s35, 1
      %s37 = scalar_select %p34, %s35, %s36
      %p40 = pneg %p34
      %p41 = scmp.eq.s32.totalorder %s25, 1
      %p42 = por %p40, %p41
      %p43 = scmp.ne.s32.totalorder %s35, %s38
      %p44 = scmp.eq.s32.totalorder %s25, 0
      %p45 = por %p43, %p44
      %p46 = scmp.ne.s32.totalorder %s35, %s38
      %p47 = scmp.eq.s32.totalorder %s30, 1
      %p48 = por %p46, %p47
      %p49 = scmp.ne.s32.totalorder %s38, %s39
      %p50 = scmp.eq.s32.totalorder %s30, 0
      %p51 = por %p49, %p50
      %p52 = scmp.ne.s32.totalorder %s38, %s39
      %p53 = scmp.eq.s32.totalorder %s31, 1
      %p54 = por %p52, %p53
      %p56 = scmp.ne.s32.totalorder %s39, %s55
      %p57 = scmp.eq.s32.totalorder %s31, 0
      %p58 = por %p56, %p57
      %s59 = ssub.s32 %s25, %s32
      %p60 = scmp.eq.s32.totalorder %s59, 0
      %s62 = sadd.s32 %s61, 1
      %s63 = scalar_select %p60, %s61, %s62
      %p66 = pneg %p60
      %p67 = scmp.eq.s32.totalorder %s25, 1
      %p68 = por %p66, %p67
      %p69 = scmp.ne.s32.totalorder %s61, %s64
      %p70 = scmp.eq.s32.totalorder %s25, 0
      %p71 = por %p69, %p70
      %p72 = scmp.ne.s32.totalorder %s61, %s64
      %p73 = scmp.eq.s32.totalorder %s30, 1
      %p74 = por %p72, %p73
      %p75 = scmp.ne.s32.totalorder %s64, %s65
      %p76 = scmp.eq.s32.totalorder %s30, 0
      %p77 = por %p75, %p76
      %p78 = scmp.ne.s32.totalorder %s64, %s65
      %p79 = scmp.eq.s32.totalorder %s31, 1
      %p80 = por %p78, %p79
      %p82 = scmp.ne.s32.totalorder %s65, %s81
      %p83 = scmp.eq.s32.totalorder %s31, 0
      %p84 = por %p82, %p83
      %s86 = sadd.s32 %s85, 1
      %p89 = scmp.eq.s32.totalorder %s25, 1
      %p90 = scmp.ne.s32.totalorder %s85, %s87
      %p91 = scmp.eq.s32.totalorder %s25, 0
      %p92 = por %p90, %p91
      %p93 = scmp.ne.s32.totalorder %s85, %s87
      %p94 = scmp.eq.s32.totalorder %s30, 1
      %p95 = por %p93, %p94
      %p96 = scmp.ne.s32.totalorder %s87, %s88
      %p97 = scmp.eq.s32.totalorder %s30, 0
      %p98 = por %p96, %p97
      %p99 = scmp.ne.s32.totalorder %s87, %s88
      %p100 = scmp.eq.s32.totalorder %s31, 1
      %p101 = por %p99, %p100
      %p103 = scmp.ne.s32.totalorder %s88, %s102
      %p104 = scmp.eq.s32.totalorder %s31, 0
      %p105 = por %p103, %p104
      %s107 = sadd.s32 %s106, 1
      %p110 = scmp.eq.s32.totalorder %s25, 1
      %p111 = scmp.ne.s32.totalorder %s106, %s108
      %p112 = scmp.eq.s32.totalorder %s25, 0
      %p113 = por %p111, %p112
      %p114 = scmp.ne.s32.totalorder %s106, %s108
      %p115 = scmp.eq.s32.totalorder %s30, 1
      %p116 = por %p114, %p115
      %p117 = scmp.ne.s32.totalorder %s108, %s109
      %p118 = scmp.eq.s32.totalorder %s30, 0
      %p119 = por %p117, %p118
      %p120 = scmp.ne.s32.totalorder %s108, %s109
      %p121 = scmp.eq.s32.totalorder %s31, 1
      %p122 = por %p120, %p121
      %p124 = scmp.ne.s32.totalorder %s109, %s123
      %p125 = scmp.eq.s32.totalorder %s31, 0
      %p126 = por %p124, %p125
      %s128 = sadd.s32 %s127, 1
      %p131 = scmp.eq.s32.totalorder %s25, 1
      %p132 = scmp.ne.s32.totalorder %s127, %s129
      %p133 = scmp.eq.s32.totalorder %s25, 0
      %p134 = por %p132, %p133
      %p135 = scmp.ne.s32.totalorder %s127, %s129
      %p136 = scmp.eq.s32.totalorder %s30, 1
      %p137 = por %p135, %p136
      %p138 = scmp.ne.s32.totalorder %s129, %s130
      %p139 = scmp.eq.s32.totalorder %s30, 0
      %p140 = por %p138, %p139
      %p141 = scmp.ne.s32.totalorder %s129, %s130
      %p142 = scmp.eq.s32.totalorder %s31, 1
      %p143 = por %p141, %p142
      %p145 = scmp.ne.s32.totalorder %s130, %s144
      %p146 = scmp.eq.s32.totalorder %s31, 0
      %p147 = por %p145, %p146
      %s149 = sadd.s32 %s148, 1
      %p152 = scmp.eq.s32.totalorder %s25, 1
      %p153 = scmp.ne.s32.totalorder %s148, %s150
      %p154 = scmp.eq.s32.totalorder %s25, 0
      %p155 = por %p153, %p154
      %p156 = scmp.ne.s32.totalorder %s148, %s150
      %p157 = scmp.eq.s32.totalorder %s30, 1
      %p158 = por %p156, %p157
      %p159 = scmp.ne.s32.totalorder %s150, %s151
      %p160 = scmp.eq.s32.totalorder %s30, 0
      %p161 = por %p159, %p160
      %p162 = scmp.ne.s32.totalorder %s150, %s151
      %p163 = scmp.eq.s32.totalorder %s31, 1
      %p164 = por %p162, %p163
      %p166 = scmp.ne.s32.totalorder %s151, %s165
      %p167 = scmp.eq.s32.totalorder %s31, 0
      %p168 = por %p166, %p167
      %s170 = sadd.s32 %s169, 1
      %p173 = scmp.eq.s32.totalorder %s25, 1
      %p174 = scmp.ne.s32.totalorder %s169, %s171
      %p175 = scmp.eq.s32.totalorder %s25, 0
      %p176 = por %p174, %p175
      %p177 = scmp.ne.s32.totalorder %s169, %s171
      %p178 = scmp.eq.s32.totalorder %s30, 1
      %p179 = por %p177, %p178
      %p180 = scmp.ne.s32.totalorder %s171, %s172
      %p181 = scmp.eq.s32.totalorder %s30, 0
      %p182 = por %p180, %p181
      %p183 = scmp.ne.s32.totalorder %s171, %s172
      %p184 = scmp.eq.s32.totalorder %s31, 1
      %p185 = por %p183, %p184
      %p187 = scmp.ne.s32.totalorder %s172, %s186
      %p188 = scmp.eq.s32.totalorder %s31, 0
      %p189 = por %p187, %p188
      %s191 = sadd.s32 %s190, 1
      %p194 = scmp.eq.s32.totalorder %s25, 1
      %p195 = scmp.ne.s32.totalorder %s190, %s192
      %p196 = scmp.eq.s32.totalorder %s25, 0
      %p197 = por %p195, %p196
      %p198 = scmp.ne.s32.totalorder %s190, %s192
      %p199 = scmp.eq.s32.totalorder %s30, 1
      %p200 = por %p198, %p199
      %p201 = scmp.ne.s32.totalorder %s192, %s193
      %p202 = scmp.eq.s32.totalorder %s30, 0
      %p203 = por %p201, %p202
      %p204 = scmp.ne.s32.totalorder %s192, %s193
      %p205 = scmp.eq.s32.totalorder %s31, 1
      %p206 = por %p204, %p205
      %p208 = scmp.ne.s32.totalorder %s193, %s207
      %p209 = scmp.eq.s32.totalorder %s31, 0
      %p210 = por %p208, %p209
      %s212 = sadd.s32 %s211, 1
      %p215 = scmp.eq.s32.totalorder %s25, 1
      %p216 = scmp.ne.s32.totalorder %s211, %s213
      %p217 = scmp.eq.s32.totalorder %s25, 0
      %p218 = por %p216, %p217
      %p219 = scmp.ne.s32.totalorder %s211, %s213
      %p220 = scmp.eq.s32.totalorder %s30, 1
      %p221 = por %p219, %p220
      %p222 = scmp.ne.s32.totalorder %s213, %s214
      %p223 = scmp.eq.s32.totalorder %s30, 0
      %p224 = por %p222, %p223
      %p225 = scmp.ne.s32.totalorder %s213, %s214
      %p226 = scmp.eq.s32.totalorder %s31, 1
      %p227 = por %p225, %p226
      %p229 = scmp.ne.s32.totalorder %s214, %s228
      %p230 = scmp.eq.s32.totalorder %s31, 0
      %p231 = por %p229, %p230
      %s233 = sadd.s32 %s232, 1
      %p236 = scmp.eq.s32.totalorder %s25, 1
      %p237 = scmp.ne.s32.totalorder %s232, %s234
      %p238 = scmp.eq.s32.totalorder %s25, 0
      %p239 = por %p237, %p238
      %p240 = scmp.ne.s32.totalorder %s232, %s234
      %p241 = scmp.eq.s32.totalorder %s30, 1
      %p242 = por %p240, %p241
      %p243 = scmp.ne.s32.totalorder %s234, %s235
      %p244 = scmp.eq.s32.totalorder %s30, 0
      %p245 = por %p243, %p244
      %p246 = scmp.ne.s32.totalorder %s234, %s235
      %p247 = scmp.eq.s32.totalorder %s31, 1
      %p248 = por %p246, %p247
      %p250 = scmp.ne.s32.totalorder %s235, %s249
      %p251 = scmp.eq.s32.totalorder %s31, 0
      %p252 = por %p250, %p251
      %s254 = sadd.s32 %s253, 1
      %p257 = scmp.eq.s32.totalorder %s25, 1
      %p258 = scmp.ne.s32.totalorder %s253, %s255
      %p259 = scmp.eq.s32.totalorder %s25, 0
      %p260 = por %p258, %p259
      %p261 = scmp.ne.s32.totalorder %s253, %s255
      %p262 = scmp.eq.s32.totalorder %s30, 1
      %p263 = por %p261, %p262
      %p264 = scmp.ne.s32.totalorder %s255, %s256
      %p265 = scmp.eq.s32.totalorder %s30, 0
      %p266 = por %p264, %p265
      %p267 = scmp.ne.s32.totalorder %s255, %s256
      %p268 = scmp.eq.s32.totalorder %s31, 1
      %p269 = por %p267, %p268
      %p271 = scmp.ne.s32.totalorder %s256, %s270
      %p272 = scmp.eq.s32.totalorder %s31, 0
      %p273 = por %p271, %p272
      %s275 = sadd.s32 %s274, 1
      %p278 = scmp.eq.s32.totalorder %s25, 1
      %p279 = scmp.ne.s32.totalorder %s274, %s276
      %p280 = scmp.eq.s32.totalorder %s25, 0
      %p281 = por %p279, %p280
      %p282 = scmp.ne.s32.totalorder %s274, %s276
      %p283 = scmp.eq.s32.totalorder %s30, 1
      %p284 = por %p282, %p283
      %p285 = scmp.ne.s32.totalorder %s276, %s277
      %p286 = scmp.eq.s32.totalorder %s30, 0
      %p287 = por %p285, %p286
      %p288 = scmp.ne.s32.totalorder %s276, %s277
      %p289 = scmp.eq.s32.totalorder %s31, 1
      %p290 = por %p288, %p289
      %p292 = scmp.ne.s32.totalorder %s277, %s291
      %p293 = scmp.eq.s32.totalorder %s31, 0
      %p294 = por %p292, %p293
      %s296 = sadd.s32 %s295, 1
      %p299 = scmp.eq.s32.totalorder %s25, 1
      %p300 = scmp.ne.s32.totalorder %s295, %s297
      %p301 = scmp.eq.s32.totalorder %s25, 0
      %p302 = por %p300, %p301
      %p303 = scmp.ne.s32.totalorder %s295, %s297
      %p304 = scmp.eq.s32.totalorder %s30, 1
      %p305 = por %p303, %p304
      %p306 = scmp.ne.s32.totalorder %s297, %s298
      %p307 = scmp.eq.s32.totalorder %s30, 0
      %p308 = por %p306, %p307
      %p309 = scmp.ne.s32.totalorder %s297, %s298
      %p310 = scmp.eq.s32.totalorder %s31, 1
      %p311 = por %p309, %p310
      %p313 = scmp.ne.s32.totalorder %s298, %s312
      %p314 = scmp.eq.s32.totalorder %s31, 0
      %p315 = por %p313, %p314
      %s317 = sadd.s32 %s316, 1
      %p320 = scmp.eq.s32.totalorder %s25, 1
      %p321 = scmp.ne.s32.totalorder %s316, %s318
      %p322 = scmp.eq.s32.totalorder %s25, 0
      %p323 = por %p321, %p322
      %p324 = scmp.ne.s32.totalorder %s316, %s318
      %p325 = scmp.eq.s32.totalorder %s30, 1
      %p326 = por %p324, %p325
      %p327 = scmp.ne.s32.totalorder %s318, %s319
      %p328 = scmp.eq.s32.totalorder %s30, 0
      %p329 = por %p327, %p328
      %p330 = scmp.ne.s32.totalorder %s318, %s319
      %p331 = scmp.eq.s32.totalorder %s31, 1
      %p332 = por %p330, %p331
      %p334 = scmp.ne.s32.totalorder %s319, %s333
      %p335 = scmp.eq.s32.totalorder %s31, 0
      %p336 = por %p334, %p335
      %s338 = sadd.s32 %s337, 1
      %p341 = scmp.eq.s32.totalorder %s25, 1
      %p342 = scmp.ne.s32.totalorder %s337, %s339
      %p343 = scmp.eq.s32.totalorder %s25, 0
      %p344 = por %p342, %p343
      %p345 = scmp.ne.s32.totalorder %s337, %s339
      %p346 = scmp.eq.s32.totalorder %s30, 1
      %p347 = por %p345, %p346
      %p348 = scmp.ne.s32.totalorder %s339, %s340
      %p349 = scmp.eq.s32.totalorder %s30, 0
      %p350 = por %p348, %p349
      %p351 = scmp.ne.s32.totalorder %s339, %s340
      %p352 = scmp.eq.s32.totalorder %s31, 1
      %p353 = por %p351, %p352
      %p355 = scmp.ne.s32.totalorder %s340, %s354
      %p356 = scmp.eq.s32.totalorder %s31, 0
      %p357 = por %p355, %p356
      %s359 = sadd.s32 %s358, 1
      %p362 = scmp.eq.s32.totalorder %s25, 1
      %p363 = scmp.ne.s32.totalorder %s358, %s360
      %p364 = scmp.eq.s32.totalorder %s25, 0
      %p365 = por %p363, %p364
      %p366 = scmp.ne.s32.totalorder %s358, %s360
      %p367 = scmp.eq.s32.totalorder %s30, 1
      %p368 = por %p366, %p367
      %p369 = scmp.ne.s32.totalorder %s360, %s361
      %p370 = scmp.eq.s32.totalorder %s30, 0
      %p371 = por %p369, %p370
      %p372 = scmp.ne.s32.totalorder %s360, %s361
      %p373 = scmp.eq.s32.totalorder %s31, 1
      %p374 = por %p372, %p373
      %p376 = scmp.ne.s32.totalorder %s361, %s375
      %p377 = scmp.eq.s32.totalorder %s31, 0
      %p378 = por %p376, %p377
      %s379 = ssub.s32 %s25, %s32
      %p380 = scmp.eq.s32.totalorder %s379, 0
      %s382 = sadd.s32 %s381, 1
      %s383 = scalar_select %p380, %s381, %s382
      %p386 = pneg %p380
      %p387 = scmp.eq.s32.totalorder %s25, 1
      %p388 = por %p386, %p387
      %p389 = scmp.ne.s32.totalorder %s381, %s384
      %p390 = scmp.eq.s32.totalorder %s25, 0
      %p391 = por %p389, %p390
      %p392 = scmp.ne.s32.totalorder %s381, %s384
      %p393 = scmp.eq.s32.totalorder %s30, 1
      %p394 = por %p392, %p393
      %p395 = scmp.ne.s32.totalorder %s384, %s385
      %p396 = scmp.eq.s32.totalorder %s30, 0
      %p397 = por %p395, %p396
      %p398 = scmp.ne.s32.totalorder %s384, %s385
      %p399 = scmp.eq.s32.totalorder %s31, 1
      %p400 = por %p398, %p399
      %p402 = scmp.ne.s32.totalorder %s385, %s401
      %p403 = scmp.eq.s32.totalorder %s31, 0
      %p404 = por %p402, %p403
      %p405 = scmp.le.s32.totalorder 1, %s25
      %p406 = scmp.lt.s32.totalorder %s25, 3
      %p407 = pnand %p405, %p406
      %p408 = pneg %p407
      // Predicated region
      $region9: #{tpu_custom_call.1} parent=5 // pred_check
        _
      $region10: #{tpu_custom_call.1} parent=5 // pred_check_branch
        %410 = sbr.rel (%p407) target = $region12
      $region11: #{tpu_custom_call.1} parent=5 // pred_region
        %s411 = ssub.s32 %s25, 1
        // Predicated region
        $region13: #{tpu_custom_call.1} parent=11 // pred_check
          %p412 = pneg %p98
        $region14: #{tpu_custom_call.1} parent=11 // pred_check_branch
          %414 = sbr.rel (%p412) target = $region16
        $region15: #{tpu_custom_call.1} parent=11 // pred_region
          _
        $region16: #{tpu_custom_call.1} parent=11 // pred_fallthru
          _
        // Predicated region
        $region17: #{tpu_custom_call.1} parent=11 // pred_check
          %p415 = pneg %p119
        $region18: #{tpu_custom_call.1} parent=11 // pred_check_branch
          %417 = sbr.rel (%p415) target = $region20
        $region19: #{tpu_custom_call.1} parent=11 // pred_region
          _
        $region20: #{tpu_custom_call.1} parent=11 // pred_fallthru
          _
        // Predicated region
        $region21: #{tpu_custom_call.1} parent=11 // pred_check
          %p418 = pneg %p140
        $region22: #{tpu_custom_call.1} parent=11 // pred_check_branch
          %420 = sbr.rel (%p418) target = $region24
        $region23: #{tpu_custom_call.1} parent=11 // pred_region
          _
        $region24: #{tpu_custom_call.1} parent=11 // pred_fallthru
          _
        // Predicated region
        $region25: #{tpu_custom_call.1} parent=11 // pred_check
          %p421 = pneg %p161
        $region26: #{tpu_custom_call.1} parent=11 // pred_check_branch
          %423 = sbr.rel (%p421) target = $region28
        $region27: #{tpu_custom_call.1} parent=11 // pred_region
          _
        $region28: #{tpu_custom_call.1} parent=11 // pred_fallthru
          _
        // Predicated region
        $region29: #{tpu_custom_call.1} parent=11 // pred_check
          %p424 = pneg %p182
        $region30: #{tpu_custom_call.1} parent=11 // pred_check_branch
          %426 = sbr.rel (%p424) target = $region32
        $region31: #{tpu_custom_call.1} parent=11 // pred_region
          _
        $region32: #{tpu_custom_call.1} parent=11 // pred_fallthru
          _
        // Predicated region
        $region33: #{tpu_custom_call.1} parent=11 // pred_check
          %p427 = pneg %p203
        $region34: #{tpu_custom_call.1} parent=11 // pred_check_branch
          %429 = sbr.rel (%p427) target = $region36
        $region35: #{tpu_custom_call.1} parent=11 // pred_region
          _
        $region36: #{tpu_custom_call.1} parent=11 // pred_fallthru
          _
        // Predicated region
        $region37: #{tpu_custom_call.1} parent=11 // pred_check
          %p430 = pneg %p224
        $region38: #{tpu_custom_call.1} parent=11 // pred_check_branch
          %432 = sbr.rel (%p430) target = $region40
        $region39: #{tpu_custom_call.1} parent=11 // pred_region
          _
        $region40: #{tpu_custom_call.1} parent=11 // pred_fallthru
          _
        // Predicated region
        $region41: #{tpu_custom_call.1} parent=11 // pred_check
          %p433 = pneg %p245
        $region42: #{tpu_custom_call.1} parent=11 // pred_check_branch
          %435 = sbr.rel (%p433) target = $region44
        $region43: #{tpu_custom_call.1} parent=11 // pred_region
          _
        $region44: #{tpu_custom_call.1} parent=11 // pred_fallthru
          _
        // Predicated region
        $region45: #{tpu_custom_call.1} parent=11 // pred_check
          %p436 = pneg %p266
        $region46: #{tpu_custom_call.1} parent=11 // pred_check_branch
          %438 = sbr.rel (%p436) target = $region48
        $region47: #{tpu_custom_call.1} parent=11 // pred_region
          _
        $region48: #{tpu_custom_call.1} parent=11 // pred_fallthru
          _
        // Predicated region
        $region49: #{tpu_custom_call.1} parent=11 // pred_check
          %p439 = pneg %p287
        $region50: #{tpu_custom_call.1} parent=11 // pred_check_branch
          %441 = sbr.rel (%p439) target = $region52
        $region51: #{tpu_custom_call.1} parent=11 // pred_region
          _
        $region52: #{tpu_custom_call.1} parent=11 // pred_fallthru
          _
        // Predicated region
        $region53: #{tpu_custom_call.1} parent=11 // pred_check
          %p442 = pneg %p308
        $region54: #{tpu_custom_call.1} parent=11 // pred_check_branch
          %444 = sbr.rel (%p442) target = $region56
        $region55: #{tpu_custom_call.1} parent=11 // pred_region
          _
        $region56: #{tpu_custom_call.1} parent=11 // pred_fallthru
          _
        // Predicated region
        $region57: #{tpu_custom_call.1} parent=11 // pred_check
          %p445 = pneg %p329
        $region58: #{tpu_custom_call.1} parent=11 // pred_check_branch
          %447 = sbr.rel (%p445) target = $region60
        $region59: #{tpu_custom_call.1} parent=11 // pred_region
          _
        $region60: #{tpu_custom_call.1} parent=11 // pred_fallthru
          _
        // Predicated region
        $region61: #{tpu_custom_call.1} parent=11 // pred_check
          %p448 = pneg %p350
        $region62: #{tpu_custom_call.1} parent=11 // pred_check_branch
          %450 = sbr.rel (%p448) target = $region64
        $region63: #{tpu_custom_call.1} parent=11 // pred_region
          _
        $region64: #{tpu_custom_call.1} parent=11 // pred_fallthru
          _
        // Predicated region
        $region65: #{tpu_custom_call.1} parent=11 // pred_check
          %p451 = pneg %p371
        $region66: #{tpu_custom_call.1} parent=11 // pred_check_branch
          %453 = sbr.rel (%p451) target = $region68
        $region67: #{tpu_custom_call.1} parent=11 // pred_region
          _
        $region68: #{tpu_custom_call.1} parent=11 // pred_fallthru
          _
      $region12: #{tpu_custom_call.1} parent=5 // pred_fallthru
        _
      %p454 = scmp.lt.s32.totalorder %s25, 2
      // Predicated region
      $region69: #{tpu_custom_call.1} parent=5 // pred_check
        %p455 = pneg %p454
      $region70: #{tpu_custom_call.1} parent=5 // pred_check_branch
        %457 = sbr.rel (%p455) target = $region72
      $region71: #{tpu_custom_call.1} parent=5 // pred_region
        // Predicated region
        $region73: #{tpu_custom_call.1} parent=71 // pred_check
          %p458 = pneg %p45
        $region74: #{tpu_custom_call.1} parent=71 // pred_check_branch
          %460 = sbr.rel (%p458) target = $region76
        $region75: #{tpu_custom_call.1} parent=71 // pred_region
          %p461 = scmp.lt.s32.totalorder %s25, 1
          %s462 = scalar_select %p461, %s25, 1
          %s463 = smul.addr %s462, 8
          %s464 = scalar_lea.vmem %s0, %s463
        $region76: #{tpu_custom_call.1} parent=71 // pred_fallthru
          _
        // Predicated region
        $region77: #{tpu_custom_call.1} parent=71 // pred_check
          %p465 = pneg %p71
        $region78: #{tpu_custom_call.1} parent=71 // pred_check_branch
          %467 = sbr.rel (%p465) target = $region80
        $region79: #{tpu_custom_call.1} parent=71 // pred_region
          %p468 = scmp.lt.s32.totalorder %s25, 1
          %s469 = scalar_select %p468, %s25, 1
          %s470 = smul.addr %s469, 8
          %s471 = scalar_lea.vmem %s1, %s470
        $region80: #{tpu_custom_call.1} parent=71 // pred_fallthru
          _
      $region72: #{tpu_custom_call.1} parent=5 // pred_fallthru
        _
      %p472 = scmp.le.s32.totalorder 1, %s25
      %p473 = scmp.lt.s32.totalorder %s25, 3
      %p474 = pnand %p472, %p473
      %p475 = pneg %p474
      // Predicated region
      $region81: #{tpu_custom_call.1} parent=5 // pred_check
        _
      $region82: #{tpu_custom_call.1} parent=5 // pred_check_branch
        %477 = sbr.rel (%p474) target = $region84
      $region83: #{tpu_custom_call.1} parent=5 // pred_region
        %s478 = ssub.s32 %s25, 1
        %p479 = scmp.lt.s32.totalorder %s30, 1
        %s480 = scalar_select %p479, %s30, 1
        %s481 = smul.addr %s480, 8
        %s482 = scalar_lea.vmem %s0, %s481
        %p483 = pneg %p51
        %p484 = pneg %p48
        %p485 = scmp.lt.s32.totalorder %s30, 1
        %s486 = scalar_select %p485, %s30, 1
        %s487 = smul.addr %s486, 8
        %s488 = scalar_lea.vmem %s1, %s487
        %p489 = pneg %p77
        %p490 = pneg %p74
        %p491 = pneg %p98
        %p492 = pneg %p95
        %p493 = pneg %p119
        %p494 = pneg %p116
        %p495 = pneg %p140
        %p496 = pneg %p137
        %p497 = pneg %p161
        %p498 = pneg %p158
        %p499 = pneg %p182
        %p500 = pneg %p179
        %p501 = pneg %p203
        %p502 = pneg %p200
        %p503 = pneg %p224
        %p504 = pneg %p221
        %p505 = pneg %p245
        %p506 = pneg %p242
        %p507 = pneg %p266
        %p508 = pneg %p263
        %p509 = pneg %p287
        %p510 = pneg %p284
        %p511 = pneg %p308
        %p512 = pneg %p305
        %p513 = pneg %p329
        %p514 = pneg %p326
        %p515 = pneg %p350
        %p516 = pneg %p347
        %p517 = pneg %p371
        %p518 = pneg %p368
        %p519 = pneg %p397
        %p520 = pneg %p394
        %s521 = sand.u32 %s384, 1
        %s522 = scalar_lea.sflag [#allocation4], %s521
        %s523 = sand.u32 %s384, 1
        %s524 = smul.addr %s523, 8
        %s525 = scalar_lea.vmem [#allocation3], %s524
        %p526 = scmp.lt.s32.totalorder %s30, 1
        %s527 = scalar_select %p526, %s30, 1
        %s528 = smul.addr %s527, 8
        %s529 = scalar_lea.vmem %s0, %s528
        %p530 = scmp.lt.s32.totalorder %s30, 1
        %s531 = scalar_select %p530, %s30, 1
        %s532 = smul.addr %s531, 8
        %s533 = scalar_lea.vmem %s1, %s532
        %v534 = vld [vmem:[%s529] sm:$0xff]
        %v535 = vld [vmem:[%s533] sm:$0xff]
        %v536 = vld [vmem:[%s2] sm:$0xff]
        %v537 = vld [vmem:[%s2 + $0x8] sm:$0xff]
        %v538 = vld [vmem:[%s2 + $0x10] sm:$0xff]
        %v539 = vld [vmem:[%s2 + $0x18] sm:$0xff]
        %v540 = vld [vmem:[%s3] sm:$0x1]
        %v542 = vlaneseq
        %v543 = vshrl.u32 %v542, 7
        %v544 = vsub.s32 0, %v543
        %v545 = vrot.slane %v540, %v544
        %vm547 = vcmask 261120
        %v549 = vsel %vm547, %v535, 0
        %551 = vmatprep.subr.mxu0 0.0
        %552 = vmatpush1.msra.mxu0 %v536
        %553 = vmatprep.subr.mxu0 0.0
        %554 = vmatpush1.msra.mxu0 %v537
        %555 = vmatprep.subr.mxu0 0.0
        %556 = vmatpush1.msra.mxu0 %v538
        %557 = vmatprep.subr.mxu0 0.0
        %558 = vmatpush1.msra.mxu0 %v539
        %559 = vmatprep.subr.mxu0 0.0
        %560 = vmatpush1.msra.mxu0 0.0
        %561 = vmatprep.subr.mxu0 0.0
        %562 = vmatpush1.msra.mxu0 0.0
        %563 = vmatprep.subr.mxu0 0.0
        %564 = vmatpush1.msra.mxu0 0.0
        %565 = vmatprep.subr.mxu0 0.0
        %566 = vmatpush1.msra.mxu0 0.0
        %567 = vmatprep.subr.mxu0 0.0
        %568 = vmatpush1.msra.mxu0 0.0
        %569 = vmatprep.subr.mxu0 0.0
        %570 = vmatpush1.msra.mxu0 0.0
        %571 = vmatprep.subr.mxu0 0.0
        %572 = vmatpush1.msra.mxu0 0.0
        %573 = vmatprep.subr.mxu0 0.0
        %574 = vmatpush1.msra.mxu0 0.0
        %575 = vmatprep.subr.mxu0 0.0
        %576 = vmatpush1.msra.mxu0 0.0
        %577 = vmatprep.subr.mxu0 0.0
        %578 = vmatpush1.msra.mxu0 0.0
        %579 = vmatprep.subr.mxu0 0.0
        %580 = vmatpush1.msra.mxu0 0.0
        %581 = vmatprep.subr.mxu0 0.0
        %582 = vmatpush1.msra.mxu0 0.0
        %583 = vmatprep.subr.mxu0 0.0
        %584 = vmatpush1.msra.mxu0 0.0
        %585 = vmatprep.subr.mxu0 0.0
        %586 = vmatpush1.msra.mxu0 0.0
        %587 = vmatprep.subr.mxu0 0.0
        %588 = vmatpush1.msra.mxu0 0.0
        %589 = vmatprep.subr.mxu0 0.0
        %590 = vmatpush1.msra.mxu0 0.0
        %591 = vmatprep.subr.mxu0 0.0
        %592 = vmatpush1.msra.mxu0 0.0
        %593 = vmatprep.subr.mxu0 0.0
        %594 = vmatpush1.msra.mxu0 0.0
        %595 = vmatprep.subr.mxu0 0.0
        %596 = vmatpush1.msra.mxu0 0.0
        %597 = vmatprep.subr.mxu0 0.0
        %598 = vmatpush1.msra.mxu0 0.0
        %599 = vmatprep.subr.mxu0 0.0
        %600 = vmatpush1.msra.mxu0 0.0
        %601 = vmatprep.subr.mxu0 0.0
        %602 = vmatpush1.msra.mxu0 0.0
        %603 = vmatprep.subr.mxu0 0.0
        %604 = vmatpush1.msra.mxu0 0.0
        %605 = vmatprep.subr.mxu0 0.0
        %606 = vmatpush1.msra.mxu0 0.0
        %607 = vmatprep.subr.mxu0 0.0
        %608 = vmatpush1.msra.mxu0 0.0
        %609 = vmatprep.subr.mxu0 0.0
        %610 = vmatpush1.msra.mxu0 0.0
        %611 = vmatprep.subr.mxu0 0.0
        %612 = vmatpush1.msra.mxu0 0.0
        %613 = vmatprep.subr.mxu0 0.0
        %614 = vmatpush1.msra.mxu0 0.0
        %615 = vmatprep.mubr.f32.mxu0 0.0
        %616 = vmatmul.mubr.f32.gmra.mrb[0].mxu0 %v549
        %v617 = vpop.f32.mrb[0].mxu0
        %v618 = vadd.f32 %v545, %v617
        %v619 = vpop.f32.mrb[0].mxu0
        %620 = vdwg.mxu0
        %v621 = vmul.f32 %v618, 0.35355338
        %v622 = vld [vmem:[%s4] sm:$0xff]
        %v623 = vld [vmem:[%s4 + $0x8] sm:$0xff]
        %v624 = vld [vmem:[%s4 + $0x10] sm:$0xff]
        %v625 = vld [vmem:[%s4 + $0x18] sm:$0xff]
        %v626 = vld [vmem:[%s5] sm:$0x1]
        %v628 = vlaneseq
        %v629 = vshrl.u32 %v628, 7
        %v630 = vsub.s32 0, %v629
        %v631 = vrot.slane %v626, %v630
        %v634 = vsel %vm547, %v534, 0
        %636 = vmatprep.subr.mxu0 0.0
        %637 = vmatpush1.msra.mxu0 %v622
        %638 = vmatprep.subr.mxu0 0.0
        %639 = vmatpush1.msra.mxu0 %v623
        %640 = vmatprep.subr.mxu0 0.0
        %641 = vmatpush1.msra.mxu0 %v624
        %642 = vmatprep.subr.mxu0 0.0
        %643 = vmatpush1.msra.mxu0 %v625
        %644 = vmatprep.subr.mxu0 0.0
        %645 = vmatpush1.msra.mxu0 0.0
        %646 = vmatprep.subr.mxu0 0.0
        %647 = vmatpush1.msra.mxu0 0.0
        %648 = vmatprep.subr.mxu0 0.0
        %649 = vmatpush1.msra.mxu0 0.0
        %650 = vmatprep.subr.mxu0 0.0
        %651 = vmatpush1.msra.mxu0 0.0
        %652 = vmatprep.subr.mxu0 0.0
        %653 = vmatpush1.msra.mxu0 0.0
        %654 = vmatprep.subr.mxu0 0.0
        %655 = vmatpush1.msra.mxu0 0.0
        %656 = vmatprep.subr.mxu0 0.0
        %657 = vmatpush1.msra.mxu0 0.0
        %658 = vmatprep.subr.mxu0 0.0
        %659 = vmatpush1.msra.mxu0 0.0
        %660 = vmatprep.subr.mxu0 0.0
        %661 = vmatpush1.msra.mxu0 0.0
        %662 = vmatprep.subr.mxu0 0.0
        %663 = vmatpush1.msra.mxu0 0.0
        %664 = vmatprep.subr.mxu0 0.0
        %665 = vmatpush1.msra.mxu0 0.0
        %666 = vmatprep.subr.mxu0 0.0
        %667 = vmatpush1.msra.mxu0 0.0
        %668 = vmatprep.subr.mxu0 0.0
        %669 = vmatpush1.msra.mxu0 0.0
        %670 = vmatprep.subr.mxu0 0.0
        %671 = vmatpush1.msra.mxu0 0.0
        %672 = vmatprep.subr.mxu0 0.0
        %673 = vmatpush1.msra.mxu0 0.0
        %674 = vmatprep.subr.mxu0 0.0
        %675 = vmatpush1.msra.mxu0 0.0
        %676 = vmatprep.subr.mxu0 0.0
        %677 = vmatpush1.msra.mxu0 0.0
        %678 = vmatprep.subr.mxu0 0.0
        %679 = vmatpush1.msra.mxu0 0.0
        %680 = vmatprep.subr.mxu0 0.0
        %681 = vmatpush1.msra.mxu0 0.0
        %682 = vmatprep.subr.mxu0 0.0
        %683 = vmatpush1.msra.mxu0 0.0
        %684 = vmatprep.subr.mxu0 0.0
        %685 = vmatpush1.msra.mxu0 0.0
        %686 = vmatprep.subr.mxu0 0.0
        %687 = vmatpush1.msra.mxu0 0.0
        %688 = vmatprep.subr.mxu0 0.0
        %689 = vmatpush1.msra.mxu0 0.0
        %690 = vmatprep.subr.mxu0 0.0
        %691 = vmatpush1.msra.mxu0 0.0
        %692 = vmatprep.subr.mxu0 0.0
        %693 = vmatpush1.msra.mxu0 0.0
        %694 = vmatprep.subr.mxu0 0.0
        %695 = vmatpush1.msra.mxu0 0.0
        %696 = vmatprep.subr.mxu0 0.0
        %697 = vmatpush1.msra.mxu0 0.0
        %698 = vmatprep.subr.mxu0 0.0
        %699 = vmatpush1.msra.mxu0 0.0
        %700 = vmatprep.mubr.f32.mxu0 0.0
        %701 = vmatmul.mubr.f32.gmra.mrb[0].mxu0 %v634
        %v702 = vpop.f32.mrb[0].mxu0
        %v703 = vadd.f32 %v631, %v702
        %v704 = vpop.f32.mrb[0].mxu0
        %705 = vdwg.mxu0
        %vm706 = vcmask 64512
        %v708 = vsel %vm706, %v621, 0
        %v711 = vsel %vm706, %v703, 0
        %713 = vmatprep.subr.mxu0 0.0
        %714 = vmatpush1.xpose.msra.mxu0 %v711
        %715 = vmatprep.subr.mxu0 0.0
        %716 = vmatpush1.xpose.msra.mxu0 0.0
        %717 = vmatprep.subr.mxu0 0.0
        %718 = vmatpush1.xpose.msra.mxu0 0.0
        %719 = vmatprep.subr.mxu0 0.0
        %720 = vmatpush1.xpose.msra.mxu0 0.0
        %721 = vmatprep.subr.mxu0 0.0
        %722 = vmatpush1.xpose.msra.mxu0 0.0
        %723 = vmatprep.subr.mxu0 0.0
        %724 = vmatpush1.xpose.msra.mxu0 0.0
        %725 = vmatprep.subr.mxu0 0.0
        %726 = vmatpush1.xpose.msra.mxu0 0.0
        %727 = vmatprep.subr.mxu0 0.0
        %728 = vmatpush1.xpose.msra.mxu0 0.0
        %729 = vmatprep.subr.mxu0 0.0
        %730 = vmatpush1.xpose.msra.mxu0 0.0
        %731 = vmatprep.subr.mxu0 0.0
        %732 = vmatpush1.xpose.msra.mxu0 0.0
        %733 = vmatprep.subr.mxu0 0.0
        %734 = vmatpush1.xpose.msra.mxu0 0.0
        %735 = vmatprep.subr.mxu0 0.0
        %736 = vmatpush1.xpose.msra.mxu0 0.0
        %737 = vmatprep.subr.mxu0 0.0
        %738 = vmatpush1.xpose.msra.mxu0 0.0
        %739 = vmatprep.subr.mxu0 0.0
        %740 = vmatpush1.xpose.msra.mxu0 0.0
        %741 = vmatprep.subr.mxu0 0.0
        %742 = vmatpush1.xpose.msra.mxu0 0.0
        %743 = vmatprep.subr.mxu0 0.0
        %744 = vmatpush1.xpose.msra.mxu0 0.0
        %745 = vmatprep.subr.mxu0 0.0
        %746 = vmatpush1.xpose.msra.mxu0 0.0
        %747 = vmatprep.subr.mxu0 0.0
        %748 = vmatpush1.xpose.msra.mxu0 0.0
        %749 = vmatprep.subr.mxu0 0.0
        %750 = vmatpush1.xpose.msra.mxu0 0.0
        %751 = vmatprep.subr.mxu0 0.0
        %752 = vmatpush1.xpose.msra.mxu0 0.0
        %753 = vmatprep.subr.mxu0 0.0
        %754 = vmatpush1.xpose.msra.mxu0 0.0
        %755 = vmatprep.subr.mxu0 0.0
        %756 = vmatpush1.xpose.msra.mxu0 0.0
        %757 = vmatprep.subr.mxu0 0.0
        %758 = vmatpush1.xpose.msra.mxu0 0.0
        %759 = vmatprep.subr.mxu0 0.0
        %760 = vmatpush1.xpose.msra.mxu0 0.0
        %761 = vmatprep.subr.mxu0 0.0
        %762 = vmatpush1.xpose.msra.mxu0 0.0
        %763 = vmatprep.subr.mxu0 0.0
        %764 = vmatpush1.xpose.msra.mxu0 0.0
        %765 = vmatprep.subr.mxu0 0.0
        %766 = vmatpush1.xpose.msra.mxu0 0.0
        %767 = vmatprep.subr.mxu0 0.0
        %768 = vmatpush1.xpose.msra.mxu0 0.0
        %769 = vmatprep.subr.mxu0 0.0
        %770 = vmatpush1.xpose.msra.mxu0 0.0
        %771 = vmatprep.subr.mxu0 0.0
        %772 = vmatpush1.xpose.msra.mxu0 0.0
        %773 = vmatprep.subr.mxu0 0.0
        %774 = vmatpush1.xpose.msra.mxu0 0.0
        %775 = vmatprep.subr.mxu0 0.0
        %776 = vmatpush1.xpose.msra.mxu0 0.0
        %777 = vmatprep.mubr.f32.mxu0 0.0
        %778 = vmatmul.mubr.f32.gmra.mrb[0].mxu0 %v708
        %v779 = vpop.f32.mrb[0].mxu0
        %v780 = vadd.f32 0.0, %v779
        %v781 = vpop.f32.mrb[0].mxu0
        %782 = vdwg.mxu0
        %v783 = vsel %vm706, %v780, -inf
        %784 = vmax.xlane.f32.xlu0 %v783
        %v785 = vpop.xlane.xlu0 %784
        %v786 = vsub.f32 %v780, %v785
        %v787 = vmul.f32 %v786, 1.442695
        %v788 = vpow.pop %v787
        %v789 = vsel %vm706, %v788, 0.0
        %790 = vadd.xlane.f32.xlu0 %v789
        %v791 = vpop.xlane.xlu0 %790
        %v792 = vrcp.pop %v791
        %v793 = vmul.f32 %v788, %v792
        %794 = vrot.lane.b32.xlu0 %v703, 96
        %v795 = vpop.permute.xlu0 %794
        %v798 = vsel %vm706, %v793, 0
        %800 = vmatprep.subr.mxu0 0.0
        %801 = vmatpush1.msra.mxu0 %v795
        %802 = vmatprep.subr.mxu0 0.0
        %803 = vmatpush1.msra.mxu0 0.0
        %804 = vmatprep.subr.mxu0 0.0
        %805 = vmatpush1.msra.mxu0 0.0
        %806 = vmatprep.subr.mxu0 0.0
        %807 = vmatpush1.msra.mxu0 0.0
        %808 = vmatprep.subr.mxu0 0.0
        %809 = vmatpush1.msra.mxu0 0.0
        %810 = vmatprep.subr.mxu0 0.0
        %811 = vmatpush1.msra.mxu0 0.0
        %812 = vmatprep.subr.mxu0 0.0
        %813 = vmatpush1.msra.mxu0 0.0
        %814 = vmatprep.subr.mxu0 0.0
        %815 = vmatpush1.msra.mxu0 0.0
        %816 = vmatprep.subr.mxu0 0.0
        %817 = vmatpush1.msra.mxu0 0.0
        %818 = vmatprep.subr.mxu0 0.0
        %819 = vmatpush1.msra.mxu0 0.0
        %820 = vmatprep.subr.mxu0 0.0
        %821 = vmatpush1.msra.mxu0 0.0
        %822 = vmatprep.subr.mxu0 0.0
        %823 = vmatpush1.msra.mxu0 0.0
        %824 = vmatprep.subr.mxu0 0.0
        %825 = vmatpush1.msra.mxu0 0.0
        %826 = vmatprep.subr.mxu0 0.0
        %827 = vmatpush1.msra.mxu0 0.0
        %828 = vmatprep.subr.mxu0 0.0
        %829 = vmatpush1.msra.mxu0 0.0
        %830 = vmatprep.subr.mxu0 0.0
        %831 = vmatpush1.msra.mxu0 0.0
        %832 = vmatprep.subr.mxu0 0.0
        %833 = vmatpush1.msra.mxu0 0.0
        %834 = vmatprep.subr.mxu0 0.0
        %835 = vmatpush1.msra.mxu0 0.0
        %836 = vmatprep.subr.mxu0 0.0
        %837 = vmatpush1.msra.mxu0 0.0
        %838 = vmatprep.subr.mxu0 0.0
        %839 = vmatpush1.msra.mxu0 0.0
        %840 = vmatprep.subr.mxu0 0.0
        %841 = vmatpush1.msra.mxu0 0.0
        %842 = vmatprep.subr.mxu0 0.0
        %843 = vmatpush1.msra.mxu0 0.0
        %844 = vmatprep.subr.mxu0 0.0
        %845 = vmatpush1.msra.mxu0 0.0
        %846 = vmatprep.subr.mxu0 0.0
        %847 = vmatpush1.msra.mxu0 0.0
        %848 = vmatprep.subr.mxu0 0.0
        %849 = vmatpush1.msra.mxu0 0.0
        %850 = vmatprep.subr.mxu0 0.0
        %851 = vmatpush1.msra.mxu0 0.0
        %852 = vmatprep.subr.mxu0 0.0
        %853 = vmatpush1.msra.mxu0 0.0
        %854 = vmatprep.subr.mxu0 0.0
        %855 = vmatpush1.msra.mxu0 0.0
        %856 = vmatprep.subr.mxu0 0.0
        %857 = vmatpush1.msra.mxu0 0.0
        %858 = vmatprep.subr.mxu0 0.0
        %859 = vmatpush1.msra.mxu0 0.0
        %860 = vmatprep.subr.mxu0 0.0
        %861 = vmatpush1.msra.mxu0 0.0
        %862 = vmatprep.subr.mxu0 0.0
        %863 = vmatpush1.msra.mxu0 0.0
        %864 = vmatprep.mubr.f32.mxu0 0.0
        %865 = vmatmul.mubr.f32.gmra.mrb[0].mxu0 %v798
        %v866 = vpop.f32.mrb[0].mxu0
        %v867 = vadd.f32 0.0, %v866
        %v868 = vpop.f32.mrb[0].mxu0
        %869 = vdwg.mxu0
        %870 = vst.msk [vmem:[#allocation2] sm:$0xff] %vm706, %v867
        %871 = vrot.lane.b32.xlu0 %v621, 120
        %v872 = vpop.permute.xlu0 %871
        %873 = vrot.lane.b32.xlu0 %v703, 120
        %v874 = vpop.permute.xlu0 %873
        %v875 = vsel %vm706, %v872, 0
        %v877 = vsel %vm706, %v874, 0
        %879 = vmatprep.subr.mxu0 0.0
        %880 = vmatpush1.xpose.msra.mxu0 %v877
        %881 = vmatprep.subr.mxu0 0.0
        %882 = vmatpush1.xpose.msra.mxu0 0.0
        %883 = vmatprep.subr.mxu0 0.0
        %884 = vmatpush1.xpose.msra.mxu0 0.0
        %885 = vmatprep.subr.mxu0 0.0
        %886 = vmatpush1.xpose.msra.mxu0 0.0
        %887 = vmatprep.subr.mxu0 0.0
        %888 = vmatpush1.xpose.msra.mxu0 0.0
        %889 = vmatprep.subr.mxu0 0.0
        %890 = vmatpush1.xpose.msra.mxu0 0.0
        %891 = vmatprep.subr.mxu0 0.0
        %892 = vmatpush1.xpose.msra.mxu0 0.0
        %893 = vmatprep.subr.mxu0 0.0
        %894 = vmatpush1.xpose.msra.mxu0 0.0
        %895 = vmatprep.subr.mxu0 0.0
        %896 = vmatpush1.xpose.msra.mxu0 0.0
        %897 = vmatprep.subr.mxu0 0.0
        %898 = vmatpush1.xpose.msra.mxu0 0.0
        %899 = vmatprep.subr.mxu0 0.0
        %900 = vmatpush1.xpose.msra.mxu0 0.0
        %901 = vmatprep.subr.mxu0 0.0
        %902 = vmatpush1.xpose.msra.mxu0 0.0
        %903 = vmatprep.subr.mxu0 0.0
        %904 = vmatpush1.xpose.msra.mxu0 0.0
        %905 = vmatprep.subr.mxu0 0.0
        %906 = vmatpush1.xpose.msra.mxu0 0.0
        %907 = vmatprep.subr.mxu0 0.0
        %908 = vmatpush1.xpose.msra.mxu0 0.0
        %909 = vmatprep.subr.mxu0 0.0
        %910 = vmatpush1.xpose.msra.mxu0 0.0
        %911 = vmatprep.subr.mxu0 0.0
        %912 = vmatpush1.xpose.msra.mxu0 0.0
        %913 = vmatprep.subr.mxu0 0.0
        %914 = vmatpush1.xpose.msra.mxu0 0.0
        %915 = vmatprep.subr.mxu0 0.0
        %916 = vmatpush1.xpose.msra.mxu0 0.0
        %917 = vmatprep.subr.mxu0 0.0
        %918 = vmatpush1.xpose.msra.mxu0 0.0
        %919 = vmatprep.subr.mxu0 0.0
        %920 = vmatpush1.xpose.msra.mxu0 0.0
        %921 = vmatprep.subr.mxu0 0.0
        %922 = vmatpush1.xpose.msra.mxu0 0.0
        %923 = vmatprep.subr.mxu0 0.0
        %924 = vmatpush1.xpose.msra.mxu0 0.0
        %925 = vmatprep.subr.mxu0 0.0
        %926 = vmatpush1.xpose.msra.mxu0 0.0
        %927 = vmatprep.subr.mxu0 0.0
        %928 = vmatpush1.xpose.msra.mxu0 0.0
        %929 = vmatprep.subr.mxu0 0.0
        %930 = vmatpush1.xpose.msra.mxu0 0.0
        %931 = vmatprep.subr.mxu0 0.0
        %932 = vmatpush1.xpose.msra.mxu0 0.0
        %933 = vmatprep.subr.mxu0 0.0
        %934 = vmatpush1.xpose.msra.mxu0 0.0
        %935 = vmatprep.subr.mxu0 0.0
        %936 = vmatpush1.xpose.msra.mxu0 0.0
        %937 = vmatprep.subr.mxu0 0.0
        %938 = vmatpush1.xpose.msra.mxu0 0.0
        %939 = vmatprep.subr.mxu0 0.0
        %940 = vmatpush1.xpose.msra.mxu0 0.0
        %941 = vmatprep.subr.mxu0 0.0
        %942 = vmatpush1.xpose.msra.mxu0 0.0
        %943 = vmatprep.mubr.f32.mxu0 0.0
        %944 = vmatmul.mubr.f32.gmra.mrb[0].mxu0 %v875
        %v945 = vpop.f32.mrb[0].mxu0
        %v946 = vadd.f32 0.0, %v945
        %v947 = vpop.f32.mrb[0].mxu0
        %948 = vdwg.mxu0
        %v949 = vsel %vm706, %v946, -inf
        %950 = vmax.xlane.f32.xlu0 %v949
        %v951 = vpop.xlane.xlu0 %950
        %v952 = vsub.f32 %v946, %v951
        %v953 = vmul.f32 %v952, 1.442695
        %v954 = vpow.pop %v953
        %v955 = vsel %vm706, %v954, 0.0
        %956 = vadd.xlane.f32.xlu0 %v955
        %v957 = vpop.xlane.xlu0 %956
        %v958 = vrcp.pop %v957
        %v959 = vmul.f32 %v954, %v958
        %960 = vrot.lane.b32.xlu0 %v703, 88
        %v961 = vpop.permute.xlu0 %960
        %v964 = vsel %vm706, %v959, 0
        %966 = vmatprep.subr.mxu0 0.0
        %967 = vmatpush1.msra.mxu0 %v961
        %968 = vmatprep.subr.mxu0 0.0
        %969 = vmatpush1.msra.mxu0 0.0
        %970 = vmatprep.subr.mxu0 0.0
        %971 = vmatpush1.msra.mxu0 0.0
        %972 = vmatprep.subr.mxu0 0.0
        %973 = vmatpush1.msra.mxu0 0.0
        %974 = vmatprep.subr.mxu0 0.0
        %975 = vmatpush1.msra.mxu0 0.0
        %976 = vmatprep.subr.mxu0 0.0
        %977 = vmatpush1.msra.mxu0 0.0
        %978 = vmatprep.subr.mxu0 0.0
        %979 = vmatpush1.msra.mxu0 0.0
        %980 = vmatprep.subr.mxu0 0.0
        %981 = vmatpush1.msra.mxu0 0.0
        %982 = vmatprep.subr.mxu0 0.0
        %983 = vmatpush1.msra.mxu0 0.0
        %984 = vmatprep.subr.mxu0 0.0
        %985 = vmatpush1.msra.mxu0 0.0
        %986 = vmatprep.subr.mxu0 0.0
        %987 = vmatpush1.msra.mxu0 0.0
        %988 = vmatprep.subr.mxu0 0.0
        %989 = vmatpush1.msra.mxu0 0.0
        %990 = vmatprep.subr.mxu0 0.0
        %991 = vmatpush1.msra.mxu0 0.0
        %992 = vmatprep.subr.mxu0 0.0
        %993 = vmatpush1.msra.mxu0 0.0
        %994 = vmatprep.subr.mxu0 0.0
        %995 = vmatpush1.msra.mxu0 0.0
        %996 = vmatprep.subr.mxu0 0.0
        %997 = vmatpush1.msra.mxu0 0.0
        %998 = vmatprep.subr.mxu0 0.0
        %999 = vmatpush1.msra.mxu0 0.0
        %1000 = vmatprep.subr.mxu0 0.0
        %1001 = vmatpush1.msra.mxu0 0.0
        %1002 = vmatprep.subr.mxu0 0.0
        %1003 = vmatpush1.msra.mxu0 0.0
        %1004 = vmatprep.subr.mxu0 0.0
        %1005 = vmatpush1.msra.mxu0 0.0
        %1006 = vmatprep.subr.mxu0 0.0
        %1007 = vmatpush1.msra.mxu0 0.0
        %1008 = vmatprep.subr.mxu0 0.0
        %1009 = vmatpush1.msra.mxu0 0.0
        %1010 = vmatprep.subr.mxu0 0.0
        %1011 = vmatpush1.msra.mxu0 0.0
        %1012 = vmatprep.subr.mxu0 0.0
        %1013 = vmatpush1.msra.mxu0 0.0
        %1014 = vmatprep.subr.mxu0 0.0
        %1015 = vmatpush1.msra.mxu0 0.0
        %1016 = vmatprep.subr.mxu0 0.0
        %1017 = vmatpush1.msra.mxu0 0.0
        %1018 = vmatprep.subr.mxu0 0.0
        %1019 = vmatpush1.msra.mxu0 0.0
        %1020 = vmatprep.subr.mxu0 0.0
        %1021 = vmatpush1.msra.mxu0 0.0
        %1022 = vmatprep.subr.mxu0 0.0
        %1023 = vmatpush1.msra.mxu0 0.0
        %1024 = vmatprep.subr.mxu0 0.0
        %1025 = vmatpush1.msra.mxu0 0.0
        %1026 = vmatprep.subr.mxu0 0.0
        %1027 = vmatpush1.msra.mxu0 0.0
        %1028 = vmatprep.subr.mxu0 0.0
        %1029 = vmatpush1.msra.mxu0 0.0
        %1030 = vmatprep.mubr.f32.mxu0 0.0
        %1031 = vmatmul.mubr.f32.gmra.mrb[0].mxu0 %v964
        %v1032 = vpop.f32.mrb[0].mxu0
        %v1033 = vadd.f32 0.0, %v1032
        %v1034 = vpop.f32.mrb[0].mxu0
        %1035 = vdwg.mxu0
        %1037 = vrot.lane.b32.xlu0 %v1033, 8
        %v1038 = vpop.permute.xlu0 %1037
        %vm1040 = vcmask 130112
        %1041 = vst.msk [vmem:[#allocation2] sm:$0xff] %vm1040, %v1038
        %1042 = vrot.lane.b32.xlu0 %v621, 112
        %v1043 = vpop.permute.xlu0 %1042
        %1044 = vrot.lane.b32.xlu0 %v703, 112
        %v1045 = vpop.permute.xlu0 %1044
        %v1046 = vsel %vm706, %v1043, 0
        %v1048 = vsel %vm706, %v1045, 0
        %1050 = vmatprep.subr.mxu0 0.0
        %1051 = vmatpush1.xpose.msra.mxu0 %v1048
        %1052 = vmatprep.subr.mxu0 0.0
        %1053 = vmatpush1.xpose.msra.mxu0 0.0
        %1054 = vmatprep.subr.mxu0 0.0
        %1055 = vmatpush1.xpose.msra.mxu0 0.0
        %1056 = vmatprep.subr.mxu0 0.0
        %1057 = vmatpush1.xpose.msra.mxu0 0.0
        %1058 = vmatprep.subr.mxu0 0.0
        %1059 = vmatpush1.xpose.msra.mxu0 0.0
        %1060 = vmatprep.subr.mxu0 0.0
        %1061 = vmatpush1.xpose.msra.mxu0 0.0
        %1062 = vmatprep.subr.mxu0 0.0
        %1063 = vmatpush1.xpose.msra.mxu0 0.0
        %1064 = vmatprep.subr.mxu0 0.0
        %1065 = vmatpush1.xpose.msra.mxu0 0.0
        %1066 = vmatprep.subr.mxu0 0.0
        %1067 = vmatpush1.xpose.msra.mxu0 0.0
        %1068 = vmatprep.subr.mxu0 0.0
        %1069 = vmatpush1.xpose.msra.mxu0 0.0
        %1070 = vmatprep.subr.mxu0 0.0
        %1071 = vmatpush1.xpose.msra.mxu0 0.0
        %1072 = vmatprep.subr.mxu0 0.0
        %1073 = vmatpush1.xpose.msra.mxu0 0.0
        %1074 = vmatprep.subr.mxu0 0.0
        %1075 = vmatpush1.xpose.msra.mxu0 0.0
        %1076 = vmatprep.subr.mxu0 0.0
        %1077 = vmatpush1.xpose.msra.mxu0 0.0
        %1078 = vmatprep.subr.mxu0 0.0
        %1079 = vmatpush1.xpose.msra.mxu0 0.0
        %1080 = vmatprep.subr.mxu0 0.0
        %1081 = vmatpush1.xpose.msra.mxu0 0.0
        %1082 = vmatprep.subr.mxu0 0.0
        %1083 = vmatpush1.xpose.msra.mxu0 0.0
        %1084 = vmatprep.subr.mxu0 0.0
        %1085 = vmatpush1.xpose.msra.mxu0 0.0
        %1086 = vmatprep.subr.mxu0 0.0
        %1087 = vmatpush1.xpose.msra.mxu0 0.0
        %1088 = vmatprep.subr.mxu0 0.0
        %1089 = vmatpush1.xpose.msra.mxu0 0.0
        %1090 = vmatprep.subr.mxu0 0.0
        %1091 = vmatpush1.xpose.msra.mxu0 0.0
        %1092 = vmatprep.subr.mxu0 0.0
        %1093 = vmatpush1.xpose.msra.mxu0 0.0
        %1094 = vmatprep.subr.mxu0 0.0
        %1095 = vmatpush1.xpose.msra.mxu0 0.0
        %1096 = vmatprep.subr.mxu0 0.0
        %1097 = vmatpush1.xpose.msra.mxu0 0.0
        %1098 = vmatprep.subr.mxu0 0.0
        %1099 = vmatpush1.xpose.msra.mxu0 0.0
        %1100 = vmatprep.subr.mxu0 0.0
        %1101 = vmatpush1.xpose.msra.mxu0 0.0
        %1102 = vmatprep.subr.mxu0 0.0
        %1103 = vmatpush1.xpose.msra.mxu0 0.0
        %1104 = vmatprep.subr.mxu0 0.0
        %1105 = vmatpush1.xpose.msra.mxu0 0.0
        %1106 = vmatprep.subr.mxu0 0.0
        %1107 = vmatpush1.xpose.msra.mxu0 0.0
        %1108 = vmatprep.subr.mxu0 0.0
        %1109 = vmatpush1.xpose.msra.mxu0 0.0
        %1110 = vmatprep.subr.mxu0 0.0
        %1111 = vmatpush1.xpose.msra.mxu0 0.0
        %1112 = vmatprep.subr.mxu0 0.0
        %1113 = vmatpush1.xpose.msra.mxu0 0.0
        %1114 = vmatprep.mubr.f32.mxu0 0.0
        %1115 = vmatmul.mubr.f32.gmra.mrb[0].mxu0 %v1046
        %v1116 = vpop.f32.mrb[0].mxu0
        %v1117 = vadd.f32 0.0, %v1116
        %v1118 = vpop.f32.mrb[0].mxu0
        %1119 = vdwg.mxu0
        %v1120 = vsel %vm706, %v1117, -inf
        %1121 = vmax.xlane.f32.xlu0 %v1120
        %v1122 = vpop.xlane.xlu0 %1121
        %v1123 = vsub.f32 %v1117, %v1122
        %v1124 = vmul.f32 %v1123, 1.442695
        %v1125 = vpow.pop %v1124
        %v1126 = vsel %vm706, %v1125, 0.0
        %1127 = vadd.xlane.f32.xlu0 %v1126
        %v1128 = vpop.xlane.xlu0 %1127
        %v1129 = vrcp.pop %v1128
        %v1130 = vmul.f32 %v1125, %v1129
        %1131 = vrot.lane.b32.xlu0 %v703, 80
        %v1132 = vpop.permute.xlu0 %1131
        %v1135 = vsel %vm706, %v1130, 0
        %1137 = vmatprep.subr.mxu0 0.0
        %1138 = vmatpush1.msra.mxu0 %v1132
        %1139 = vmatprep.subr.mxu0 0.0
        %1140 = vmatpush1.msra.mxu0 0.0
        %1141 = vmatprep.subr.mxu0 0.0
        %1142 = vmatpush1.msra.mxu0 0.0
        %1143 = vmatprep.subr.mxu0 0.0
        %1144 = vmatpush1.msra.mxu0 0.0
        %1145 = vmatprep.subr.mxu0 0.0
        %1146 = vmatpush1.msra.mxu0 0.0
        %1147 = vmatprep.subr.mxu0 0.0
        %1148 = vmatpush1.msra.mxu0 0.0
        %1149 = vmatprep.subr.mxu0 0.0
        %1150 = vmatpush1.msra.mxu0 0.0
        %1151 = vmatprep.subr.mxu0 0.0
        %1152 = vmatpush1.msra.mxu0 0.0
        %1153 = vmatprep.subr.mxu0 0.0
        %1154 = vmatpush1.msra.mxu0 0.0
        %1155 = vmatprep.subr.mxu0 0.0
        %1156 = vmatpush1.msra.mxu0 0.0
        %1157 = vmatprep.subr.mxu0 0.0
        %1158 = vmatpush1.msra.mxu0 0.0
        %1159 = vmatprep.subr.mxu0 0.0
        %1160 = vmatpush1.msra.mxu0 0.0
        %1161 = vmatprep.subr.mxu0 0.0
        %1162 = vmatpush1.msra.mxu0 0.0
        %1163 = vmatprep.subr.mxu0 0.0
        %1164 = vmatpush1.msra.mxu0 0.0
        %1165 = vmatprep.subr.mxu0 0.0
        %1166 = vmatpush1.msra.mxu0 0.0
        %1167 = vmatprep.subr.mxu0 0.0
        %1168 = vmatpush1.msra.mxu0 0.0
        %1169 = vmatprep.subr.mxu0 0.0
        %1170 = vmatpush1.msra.mxu0 0.0
        %1171 = vmatprep.subr.mxu0 0.0
        %1172 = vmatpush1.msra.mxu0 0.0
        %1173 = vmatprep.subr.mxu0 0.0
        %1174 = vmatpush1.msra.mxu0 0.0
        %1175 = vmatprep.subr.mxu0 0.0
        %1176 = vmatpush1.msra.mxu0 0.0
        %1177 = vmatprep.subr.mxu0 0.0
        %1178 = vmatpush1.msra.mxu0 0.0
        %1179 = vmatprep.subr.mxu0 0.0
        %1180 = vmatpush1.msra.mxu0 0.0
        %1181 = vmatprep.subr.mxu0 0.0
        %1182 = vmatpush1.msra.mxu0 0.0
        %1183 = vmatprep.subr.mxu0 0.0
        %1184 = vmatpush1.msra.mxu0 0.0
        %1185 = vmatprep.subr.mxu0 0.0
        %1186 = vmatpush1.msra.mxu0 0.0
        %1187 = vmatprep.subr.mxu0 0.0
        %1188 = vmatpush1.msra.mxu0 0.0
        %1189 = vmatprep.subr.mxu0 0.0
        %1190 = vmatpush1.msra.mxu0 0.0
        %1191 = vmatprep.subr.mxu0 0.0
        %1192 = vmatpush1.msra.mxu0 0.0
        %1193 = vmatprep.subr.mxu0 0.0
        %1194 = vmatpush1.msra.mxu0 0.0
        %1195 = vmatprep.subr.mxu0 0.0
        %1196 = vmatpush1.msra.mxu0 0.0
        %1197 = vmatprep.subr.mxu0 0.0
        %1198 = vmatpush1.msra.mxu0 0.0
        %1199 = vmatprep.subr.mxu0 0.0
        %1200 = vmatpush1.msra.mxu0 0.0
        %1201 = vmatprep.mubr.f32.mxu0 0.0
        %1202 = vmatmul.mubr.f32.gmra.mrb[0].mxu0 %v1135
        %v1203 = vpop.f32.mrb[0].mxu0
        %v1204 = vadd.f32 0.0, %v1203
        %v1205 = vpop.f32.mrb[0].mxu0
        %1206 = vdwg.mxu0
        %1208 = vrot.lane.b32.xlu0 %v1204, 16
        %v1209 = vpop.permute.xlu0 %1208
        %vm1211 = vcmask 195712
        %1212 = vst.msk [vmem:[#allocation2] sm:$0xff] %vm1211, %v1209
        %1213 = vrot.lane.b32.xlu0 %v621, 104
        %v1214 = vpop.permute.xlu0 %1213
        %1215 = vrot.lane.b32.xlu0 %v703, 104
        %v1216 = vpop.permute.xlu0 %1215
        %v1217 = vsel %vm706, %v1214, 0
        %v1219 = vsel %vm706, %v1216, 0
        %1221 = vmatprep.subr.mxu0 0.0
        %1222 = vmatpush1.xpose.msra.mxu0 %v1219
        %1223 = vmatprep.subr.mxu0 0.0
        %1224 = vmatpush1.xpose.msra.mxu0 0.0
        %1225 = vmatprep.subr.mxu0 0.0
        %1226 = vmatpush1.xpose.msra.mxu0 0.0
        %1227 = vmatprep.subr.mxu0 0.0
        %1228 = vmatpush1.xpose.msra.mxu0 0.0
        %1229 = vmatprep.subr.mxu0 0.0
        %1230 = vmatpush1.xpose.msra.mxu0 0.0
        %1231 = vmatprep.subr.mxu0 0.0
        %1232 = vmatpush1.xpose.msra.mxu0 0.0
        %1233 = vmatprep.subr.mxu0 0.0
        %1234 = vmatpush1.xpose.msra.mxu0 0.0
        %1235 = vmatprep.subr.mxu0 0.0
        %1236 = vmatpush1.xpose.msra.mxu0 0.0
        %1237 = vmatprep.subr.mxu0 0.0
        %1238 = vmatpush1.xpose.msra.mxu0 0.0
        %1239 = vmatprep.subr.mxu0 0.0
        %1240 = vmatpush1.xpose.msra.mxu0 0.0
        %1241 = vmatprep.subr.mxu0 0.0
        %1242 = vmatpush1.xpose.msra.mxu0 0.0
        %1243 = vmatprep.subr.mxu0 0.0
        %1244 = vmatpush1.xpose.msra.mxu0 0.0
        %1245 = vmatprep.subr.mxu0 0.0
        %1246 = vmatpush1.xpose.msra.mxu0 0.0
        %1247 = vmatprep.subr.mxu0 0.0
        %1248 = vmatpush1.xpose.msra.mxu0 0.0
        %1249 = vmatprep.subr.mxu0 0.0
        %1250 = vmatpush1.xpose.msra.mxu0 0.0
        %1251 = vmatprep.subr.mxu0 0.0
        %1252 = vmatpush1.xpose.msra.mxu0 0.0
        %1253 = vmatprep.subr.mxu0 0.0
        %1254 = vmatpush1.xpose.msra.mxu0 0.0
        %1255 = vmatprep.subr.mxu0 0.0
        %1256 = vmatpush1.xpose.msra.mxu0 0.0
        %1257 = vmatprep.subr.mxu0 0.0
        %1258 = vmatpush1.xpose.msra.mxu0 0.0
        %1259 = vmatprep.subr.mxu0 0.0
        %1260 = vmatpush1.xpose.msra.mxu0 0.0
        %1261 = vmatprep.subr.mxu0 0.0
        %1262 = vmatpush1.xpose.msra.mxu0 0.0
        %1263 = vmatprep.subr.mxu0 0.0
        %1264 = vmatpush1.xpose.msra.mxu0 0.0
        %1265 = vmatprep.subr.mxu0 0.0
        %1266 = vmatpush1.xpose.msra.mxu0 0.0
        %1267 = vmatprep.subr.mxu0 0.0
        %1268 = vmatpush1.xpose.msra.mxu0 0.0
        %1269 = vmatprep.subr.mxu0 0.0
        %1270 = vmatpush1.xpose.msra.mxu0 0.0
        %1271 = vmatprep.subr.mxu0 0.0
        %1272 = vmatpush1.xpose.msra.mxu0 0.0
        %1273 = vmatprep.subr.mxu0 0.0
        %1274 = vmatpush1.xpose.msra.mxu0 0.0
        %1275 = vmatprep.subr.mxu0 0.0
        %1276 = vmatpush1.xpose.msra.mxu0 0.0
        %1277 = vmatprep.subr.mxu0 0.0
        %1278 = vmatpush1.xpose.msra.mxu0 0.0
        %1279 = vmatprep.subr.mxu0 0.0
        %1280 = vmatpush1.xpose.msra.mxu0 0.0
        %1281 = vmatprep.subr.mxu0 0.0
        %1282 = vmatpush1.xpose.msra.mxu0 0.0
        %1283 = vmatprep.subr.mxu0 0.0
        %1284 = vmatpush1.xpose.msra.mxu0 0.0
        %1285 = vmatprep.mubr.f32.mxu0 0.0
        %1286 = vmatmul.mubr.f32.gmra.mrb[0].mxu0 %v1217
        %v1287 = vpop.f32.mrb[0].mxu0
        %v1288 = vadd.f32 0.0, %v1287
        %v1289 = vpop.f32.mrb[0].mxu0
        %1290 = vdwg.mxu0
        %v1291 = vsel %vm706, %v1288, -inf
        %1292 = vmax.xlane.f32.xlu0 %v1291
        %v1293 = vpop.xlane.xlu0 %1292
        %v1294 = vsub.f32 %v1288, %v1293
        %v1295 = vmul.f32 %v1294, 1.442695
        %v1296 = vpow.pop %v1295
        %v1297 = vsel %vm706, %v1296, 0.0
        %1298 = vadd.xlane.f32.xlu0 %v1297
        %v1299 = vpop.xlane.xlu0 %1298
        %v1300 = vrcp.pop %v1299
        %v1301 = vmul.f32 %v1296, %v1300
        %1302 = vrot.lane.b32.xlu0 %v703, 72
        %v1303 = vpop.permute.xlu0 %1302
        %v1306 = vsel %vm706, %v1301, 0
        %1308 = vmatprep.subr.mxu0 0.0
        %1309 = vmatpush1.msra.mxu0 %v1303
        %1310 = vmatprep.subr.mxu0 0.0
        %1311 = vmatpush1.msra.mxu0 0.0
        %1312 = vmatprep.subr.mxu0 0.0
        %1313 = vmatpush1.msra.mxu0 0.0
        %1314 = vmatprep.subr.mxu0 0.0
        %1315 = vmatpush1.msra.mxu0 0.0
        %1316 = vmatprep.subr.mxu0 0.0
        %1317 = vmatpush1.msra.mxu0 0.0
        %1318 = vmatprep.subr.mxu0 0.0
        %1319 = vmatpush1.msra.mxu0 0.0
        %1320 = vmatprep.subr.mxu0 0.0
        %1321 = vmatpush1.msra.mxu0 0.0
        %1322 = vmatprep.subr.mxu0 0.0
        %1323 = vmatpush1.msra.mxu0 0.0
        %1324 = vmatprep.subr.mxu0 0.0
        %1325 = vmatpush1.msra.mxu0 0.0
        %1326 = vmatprep.subr.mxu0 0.0
        %1327 = vmatpush1.msra.mxu0 0.0
        %1328 = vmatprep.subr.mxu0 0.0
        %1329 = vmatpush1.msra.mxu0 0.0
        %1330 = vmatprep.subr.mxu0 0.0
        %1331 = vmatpush1.msra.mxu0 0.0
        %1332 = vmatprep.subr.mxu0 0.0
        %1333 = vmatpush1.msra.mxu0 0.0
        %1334 = vmatprep.subr.mxu0 0.0
        %1335 = vmatpush1.msra.mxu0 0.0
        %1336 = vmatprep.subr.mxu0 0.0
        %1337 = vmatpush1.msra.mxu0 0.0
        %1338 = vmatprep.subr.mxu0 0.0
        %1339 = vmatpush1.msra.mxu0 0.0
        %1340 = vmatprep.subr.mxu0 0.0
        %1341 = vmatpush1.msra.mxu0 0.0
        %1342 = vmatprep.subr.mxu0 0.0
        %1343 = vmatpush1.msra.mxu0 0.0
        %1344 = vmatprep.subr.mxu0 0.0
        %1345 = vmatpush1.msra.mxu0 0.0
        %1346 = vmatprep.subr.mxu0 0.0
        %1347 = vmatpush1.msra.mxu0 0.0
        %1348 = vmatprep.subr.mxu0 0.0
        %1349 = vmatpush1.msra.mxu0 0.0
        %1350 = vmatprep.subr.mxu0 0.0
        %1351 = vmatpush1.msra.mxu0 0.0
        %1352 = vmatprep.subr.mxu0 0.0
        %1353 = vmatpush1.msra.mxu0 0.0
        %1354 = vmatprep.subr.mxu0 0.0
        %1355 = vmatpush1.msra.mxu0 0.0
        %1356 = vmatprep.subr.mxu0 0.0
        %1357 = vmatpush1.msra.mxu0 0.0
        %1358 = vmatprep.subr.mxu0 0.0
        %1359 = vmatpush1.msra.mxu0 0.0
        %1360 = vmatprep.subr.mxu0 0.0
        %1361 = vmatpush1.msra.mxu0 0.0
        %1362 = vmatprep.subr.mxu0 0.0
        %1363 = vmatpush1.msra.mxu0 0.0
        %1364 = vmatprep.subr.mxu0 0.0
        %1365 = vmatpush1.msra.mxu0 0.0
        %1366 = vmatprep.subr.mxu0 0.0
        %1367 = vmatpush1.msra.mxu0 0.0
        %1368 = vmatprep.subr.mxu0 0.0
        %1369 = vmatpush1.msra.mxu0 0.0
        %1370 = vmatprep.subr.mxu0 0.0
        %1371 = vmatpush1.msra.mxu0 0.0
        %1372 = vmatprep.mubr.f32.mxu0 0.0
        %1373 = vmatmul.mubr.f32.gmra.mrb[0].mxu0 %v1306
        %v1374 = vpop.f32.mrb[0].mxu0
        %v1375 = vadd.f32 0.0, %v1374
        %v1376 = vpop.f32.mrb[0].mxu0
        %1377 = vdwg.mxu0
        %1379 = vrot.lane.b32.xlu0 %v1375, 24
        %v1380 = vpop.permute.xlu0 %1379
        %vm1382 = vcmask 261312
        %1383 = vst.msk [vmem:[#allocation2] sm:$0xff] %vm1382, %v1380
        %v1384 = vld [vmem:[#allocation2] sm:$0xff]
        %v1385 = vld [vmem:[%s6] sm:$0xff]
        %v1386 = vld [vmem:[%s6 + $0x8] sm:$0xff]
        %v1387 = vld [vmem:[%s6 + $0x10] sm:$0xff]
        %v1388 = vld [vmem:[%s6 + $0x18] sm:$0xff]
        %v1389 = vld [vmem:[%s7] sm:$0x1]
        %v1391 = vlaneseq
        %v1392 = vshrl.u32 %v1391, 7
        %v1393 = vsub.s32 0, %v1392
        %v1394 = vrot.slane %v1389, %v1393
        %v1397 = vsel %vm547, %v1384, 0
        %1399 = vmatprep.subr.mxu0 0.0
        %1400 = vmatpush1.msra.mxu0 %v1385
        %1401 = vmatprep.subr.mxu0 0.0
        %1402 = vmatpush1.msra.mxu0 %v1386
        %1403 = vmatprep.subr.mxu0 0.0
        %1404 = vmatpush1.msra.mxu0 %v1387
        %1405 = vmatprep.subr.mxu0 0.0
        %1406 = vmatpush1.msra.mxu0 %v1388
        %1407 = vmatprep.subr.mxu0 0.0
        %1408 = vmatpush1.msra.mxu0 0.0
        %1409 = vmatprep.subr.mxu0 0.0
        %1410 = vmatpush1.msra.mxu0 0.0
        %1411 = vmatprep.subr.mxu0 0.0
        %1412 = vmatpush1.msra.mxu0 0.0
        %1413 = vmatprep.subr.mxu0 0.0
        %1414 = vmatpush1.msra.mxu0 0.0
        %1415 = vmatprep.subr.mxu0 0.0
        %1416 = vmatpush1.msra.mxu0 0.0
        %1417 = vmatprep.subr.mxu0 0.0
        %1418 = vmatpush1.msra.mxu0 0.0
        %1419 = vmatprep.subr.mxu0 0.0
        %1420 = vmatpush1.msra.mxu0 0.0
        %1421 = vmatprep.subr.mxu0 0.0
        %1422 = vmatpush1.msra.mxu0 0.0
        %1423 = vmatprep.subr.mxu0 0.0
        %1424 = vmatpush1.msra.mxu0 0.0
        %1425 = vmatprep.subr.mxu0 0.0
        %1426 = vmatpush1.msra.mxu0 0.0
        %1427 = vmatprep.subr.mxu0 0.0
        %1428 = vmatpush1.msra.mxu0 0.0
        %1429 = vmatprep.subr.mxu0 0.0
        %1430 = vmatpush1.msra.mxu0 0.0
        %1431 = vmatprep.subr.mxu0 0.0
        %1432 = vmatpush1.msra.mxu0 0.0
        %1433 = vmatprep.subr.mxu0 0.0
        %1434 = vmatpush1.msra.mxu0 0.0
        %1435 = vmatprep.subr.mxu0 0.0
        %1436 = vmatpush1.msra.mxu0 0.0
        %1437 = vmatprep.subr.mxu0 0.0
        %1438 = vmatpush1.msra.mxu0 0.0
        %1439 = vmatprep.subr.mxu0 0.0
        %1440 = vmatpush1.msra.mxu0 0.0
        %1441 = vmatprep.subr.mxu0 0.0
        %1442 = vmatpush1.msra.mxu0 0.0
        %1443 = vmatprep.subr.mxu0 0.0
        %1444 = vmatpush1.msra.mxu0 0.0
        %1445 = vmatprep.subr.mxu0 0.0
        %1446 = vmatpush1.msra.mxu0 0.0
        %1447 = vmatprep.subr.mxu0 0.0
        %1448 = vmatpush1.msra.mxu0 0.0
        %1449 = vmatprep.subr.mxu0 0.0
        %1450 = vmatpush1.msra.mxu0 0.0
        %1451 = vmatprep.subr.mxu0 0.0
        %1452 = vmatpush1.msra.mxu0 0.0
        %1453 = vmatprep.subr.mxu0 0.0
        %1454 = vmatpush1.msra.mxu0 0.0
        %1455 = vmatprep.subr.mxu0 0.0
        %1456 = vmatpush1.msra.mxu0 0.0
        %1457 = vmatprep.subr.mxu0 0.0
        %1458 = vmatpush1.msra.mxu0 0.0
        %1459 = vmatprep.subr.mxu0 0.0
        %1460 = vmatpush1.msra.mxu0 0.0
        %1461 = vmatprep.subr.mxu0 0.0
        %1462 = vmatpush1.msra.mxu0 0.0
        %1463 = vmatprep.mubr.f32.mxu0 0.0
        %1464 = vmatmul.mubr.f32.gmra.mrb[0].mxu0 %v1397
        %v1465 = vpop.f32.mrb[0].mxu0
        %v1466 = vadd.f32 %v1394, %v1465
        %v1467 = vpop.f32.mrb[0].mxu0
        %1468 = vdwg.mxu0
        %v1469 = vadd.f32 %v534, %v1466
        %v1470 = vsel %vm547, %v1469, 0.0
        %1471 = vadd.xlane.f32.xlu0 %v1470
        %v1472 = vpop.xlane.xlu0 %1471
        %v1473 = vrcp.pop 32.0
        %v1474 = vmul.f32 %v1472, %v1473
        %v1475 = vsub.f32 %v1469, %v1474
        %v1476 = vmul.f32 %v1475, %v1475
        %v1477 = vsel %vm547, %v1476, 0.0
        %1478 = vadd.xlane.f32.xlu0 %v1477
        %v1479 = vpop.xlane.xlu0 %1478
        %v1480 = vmul.f32 %v1479, %v1473
        %v1481 = vadd.f32 %v1480, 1e-05
        %v1482 = vrsqrt.pop %v1481
        %v1483 = vmul.f32 %v1475, %v1482
        %v1484 = vld [vmem:[%s12] sm:$0x1]
        %v1486 = vlaneseq
        %v1487 = vshrl.u32 %v1486, 7
        %v1488 = vsub.s32 0, %v1487
        %v1489 = vrot.slane %v1484, %v1488
        %v1491 = vmul.f32 %v1483, %v1489
        %v1492 = vld [vmem:[%s13] sm:$0x1]
        %v1494 = vlaneseq
        %v1495 = vshrl.u32 %v1494, 7
        %v1496 = vsub.s32 0, %v1495
        %v1497 = vrot.slane %v1492, %v1496
        %v1499 = vadd.f32 %v1491, %v1497
        %v1500 = vld [vmem:[%s8] sm:$0xff]
        %v1501 = vld [vmem:[%s8 + $0x8] sm:$0xff]
        %v1502 = vld [vmem:[%s8 + $0x10] sm:$0xff]
        %v1503 = vld [vmem:[%s8 + $0x18] sm:$0xff]
        %v1504 = vld [vmem:[%s9] sm:$0x1]
        %v1506 = vlaneseq
        %v1507 = vshrl.u32 %v1506, 7
        %v1508 = vsub.s32 0, %v1507
        %v1509 = vrot.slane %v1504, %v1508
        %v1512 = vsel %vm547, %v1499, 0
        %1514 = vmatprep.subr.mxu0 0.0
        %1515 = vmatpush1.msra.mxu0 %v1500
        %1516 = vmatprep.subr.mxu0 0.0
        %1517 = vmatpush1.msra.mxu0 %v1501
        %1518 = vmatprep.subr.mxu0 0.0
        %1519 = vmatpush1.msra.mxu0 %v1502
        %1520 = vmatprep.subr.mxu0 0.0
        %1521 = vmatpush1.msra.mxu0 %v1503
        %1522 = vmatprep.subr.mxu0 0.0
        %1523 = vmatpush1.msra.mxu0 0.0
        %1524 = vmatprep.subr.mxu0 0.0
        %1525 = vmatpush1.msra.mxu0 0.0
        %1526 = vmatprep.subr.mxu0 0.0
        %1527 = vmatpush1.msra.mxu0 0.0
        %1528 = vmatprep.subr.mxu0 0.0
        %1529 = vmatpush1.msra.mxu0 0.0
        %1530 = vmatprep.subr.mxu0 0.0
        %1531 = vmatpush1.msra.mxu0 0.0
        %1532 = vmatprep.subr.mxu0 0.0
        %1533 = vmatpush1.msra.mxu0 0.0
        %1534 = vmatprep.subr.mxu0 0.0
        %1535 = vmatpush1.msra.mxu0 0.0
        %1536 = vmatprep.subr.mxu0 0.0
        %1537 = vmatpush1.msra.mxu0 0.0
        %1538 = vmatprep.subr.mxu0 0.0
        %1539 = vmatpush1.msra.mxu0 0.0
        %1540 = vmatprep.subr.mxu0 0.0
        %1541 = vmatpush1.msra.mxu0 0.0
        %1542 = vmatprep.subr.mxu0 0.0
        %1543 = vmatpush1.msra.mxu0 0.0
        %1544 = vmatprep.subr.mxu0 0.0
        %1545 = vmatpush1.msra.mxu0 0.0
        %1546 = vmatprep.subr.mxu0 0.0
        %1547 = vmatpush1.msra.mxu0 0.0
        %1548 = vmatprep.subr.mxu0 0.0
        %1549 = vmatpush1.msra.mxu0 0.0
        %1550 = vmatprep.subr.mxu0 0.0
        %1551 = vmatpush1.msra.mxu0 0.0
        %1552 = vmatprep.subr.mxu0 0.0
        %1553 = vmatpush1.msra.mxu0 0.0
        %1554 = vmatprep.subr.mxu0 0.0
        %1555 = vmatpush1.msra.mxu0 0.0
        %1556 = vmatprep.subr.mxu0 0.0
        %1557 = vmatpush1.msra.mxu0 0.0
        %1558 = vmatprep.subr.mxu0 0.0
        %1559 = vmatpush1.msra.mxu0 0.0
        %1560 = vmatprep.subr.mxu0 0.0
        %1561 = vmatpush1.msra.mxu0 0.0
        %1562 = vmatprep.subr.mxu0 0.0
        %1563 = vmatpush1.msra.mxu0 0.0
        %1564 = vmatprep.subr.mxu0 0.0
        %1565 = vmatpush1.msra.mxu0 0.0
        %1566 = vmatprep.subr.mxu0 0.0
        %1567 = vmatpush1.msra.mxu0 0.0
        %1568 = vmatprep.subr.mxu0 0.0
        %1569 = vmatpush1.msra.mxu0 0.0
        %1570 = vmatprep.subr.mxu0 0.0
        %1571 = vmatpush1.msra.mxu0 0.0
        %1572 = vmatprep.subr.mxu0 0.0
        %1573 = vmatpush1.msra.mxu0 0.0
        %1574 = vmatprep.subr.mxu0 0.0
        %1575 = vmatpush1.msra.mxu0 0.0
        %1576 = vmatprep.subr.mxu0 0.0
        %1577 = vmatpush1.msra.mxu0 0.0
        %1578 = vmatprep.mubr.f32.mxu0 0.0
        %1579 = vmatmul.mubr.f32.gmra.mrb[0].mxu0 %v1512
        %v1580 = vpop.f32.mrb[0].mxu0
        %v1581 = vadd.f32 %v1509, %v1580
        %v1582 = vpop.f32.mrb[0].mxu0
        %1583 = vdwg.mxu0
        %v1584 = vmax.f32 %v1581, 0.0
        %v1585 = vld [vmem:[%s10] sm:$0xff]
        %v1586 = vld [vmem:[%s10 + $0x8] sm:$0xff]
        %v1587 = vld [vmem:[%s10 + $0x10] sm:$0xff]
        %v1588 = vld [vmem:[%s10 + $0x18] sm:$0xff]
        %v1589 = vld [vmem:[%s10 + $0x20] sm:$0xff]
        %v1590 = vld [vmem:[%s10 + $0x28] sm:$0xff]
        %v1591 = vld [vmem:[%s10 + $0x30] sm:$0xff]
        %v1592 = vld [vmem:[%s10 + $0x38] sm:$0xff]
        %v1593 = vld [vmem:[%s10 + $0x40] sm:$0xff]
        %v1594 = vld [vmem:[%s10 + $0x48] sm:$0xff]
        %v1595 = vld [vmem:[%s10 + $0x50] sm:$0xff]
        %v1596 = vld [vmem:[%s10 + $0x58] sm:$0xff]
        %v1597 = vld [vmem:[%s10 + $0x60] sm:$0xff]
        %v1598 = vld [vmem:[%s10 + $0x68] sm:$0xff]
        %v1599 = vld [vmem:[%s10 + $0x70] sm:$0xff]
        %v1600 = vld [vmem:[%s10 + $0x78] sm:$0xff]
        %v1601 = vld [vmem:[%s11] sm:$0x1]
        %v1603 = vlaneseq
        %v1604 = vshrl.u32 %v1603, 7
        %v1605 = vsub.s32 0, %v1604
        %v1606 = vrot.slane %v1601, %v1605
        %1608 = vmatprep.subr.mxu0 0.0
        %1609 = vmatpush1.msra.mxu0 %v1585
        %1610 = vmatprep.subr.mxu0 0.0
        %1611 = vmatpush1.msra.mxu0 %v1586
        %1612 = vmatprep.subr.mxu0 0.0
        %1613 = vmatpush1.msra.mxu0 %v1587
        %1614 = vmatprep.subr.mxu0 0.0
        %1615 = vmatpush1.msra.mxu0 %v1588
        %1616 = vmatprep.subr.mxu0 0.0
        %1617 = vmatpush1.msra.mxu0 %v1589
        %1618 = vmatprep.subr.mxu0 0.0
        %1619 = vmatpush1.msra.mxu0 %v1590
        %1620 = vmatprep.subr.mxu0 0.0
        %1621 = vmatpush1.msra.mxu0 %v1591
        %1622 = vmatprep.subr.mxu0 0.0
        %1623 = vmatpush1.msra.mxu0 %v1592
        %1624 = vmatprep.subr.mxu0 0.0
        %1625 = vmatpush1.msra.mxu0 %v1593
        %1626 = vmatprep.subr.mxu0 0.0
        %1627 = vmatpush1.msra.mxu0 %v1594
        %1628 = vmatprep.subr.mxu0 0.0
        %1629 = vmatpush1.msra.mxu0 %v1595
        %1630 = vmatprep.subr.mxu0 0.0
        %1631 = vmatpush1.msra.mxu0 %v1596
        %1632 = vmatprep.subr.mxu0 0.0
        %1633 = vmatpush1.msra.mxu0 %v1597
        %1634 = vmatprep.subr.mxu0 0.0
        %1635 = vmatpush1.msra.mxu0 %v1598
        %1636 = vmatprep.subr.mxu0 0.0
        %1637 = vmatpush1.msra.mxu0 %v1599
        %1638 = vmatprep.subr.mxu0 0.0
        %1639 = vmatpush1.msra.mxu0 %v1600
        %1640 = vmatprep.subr.mxu0 0.0
        %1641 = vmatpush1.msra.mxu0 0.0
        %1642 = vmatprep.subr.mxu0 0.0
        %1643 = vmatpush1.msra.mxu0 0.0
        %1644 = vmatprep.subr.mxu0 0.0
        %1645 = vmatpush1.msra.mxu0 0.0
        %1646 = vmatprep.subr.mxu0 0.0
        %1647 = vmatpush1.msra.mxu0 0.0
        %1648 = vmatprep.subr.mxu0 0.0
        %1649 = vmatpush1.msra.mxu0 0.0
        %1650 = vmatprep.subr.mxu0 0.0
        %1651 = vmatpush1.msra.mxu0 0.0
        %1652 = vmatprep.subr.mxu0 0.0
        %1653 = vmatpush1.msra.mxu0 0.0
        %1654 = vmatprep.subr.mxu0 0.0
        %1655 = vmatpush1.msra.mxu0 0.0
        %1656 = vmatprep.subr.mxu0 0.0
        %1657 = vmatpush1.msra.mxu0 0.0
        %1658 = vmatprep.subr.mxu0 0.0
        %1659 = vmatpush1.msra.mxu0 0.0
        %1660 = vmatprep.subr.mxu0 0.0
        %1661 = vmatpush1.msra.mxu0 0.0
        %1662 = vmatprep.subr.mxu0 0.0
        %1663 = vmatpush1.msra.mxu0 0.0
        %1664 = vmatprep.subr.mxu0 0.0
        %1665 = vmatpush1.msra.mxu0 0.0
        %1666 = vmatprep.subr.mxu0 0.0
        %1667 = vmatpush1.msra.mxu0 0.0
        %1668 = vmatprep.subr.mxu0 0.0
        %1669 = vmatpush1.msra.mxu0 0.0
        %1670 = vmatprep.subr.mxu0 0.0
        %1671 = vmatpush1.msra.mxu0 0.0
        %1672 = vmatprep.mubr.f32.mxu0 0.0
        %1673 = vmatmul.mubr.f32.gmra.mrb[0].mxu0 %v1584
        %v1674 = vpop.f32.mrb[0].mxu0
        %v1675 = vadd.f32 %v1606, %v1674
        %v1676 = vpop.f32.mrb[0].mxu0
        %1677 = vdwg.mxu0
        %v1678 = vadd.f32 %v1499, %v1675
        %v1679 = vsel %vm547, %v1678, 0.0
        %1680 = vadd.xlane.f32.xlu0 %v1679
        %v1681 = vpop.xlane.xlu0 %1680
        %v1682 = vmul.f32 %v1681, %v1473
        %v1683 = vsub.f32 %v1678, %v1682
        %v1684 = vmul.f32 %v1683, %v1683
        %v1685 = vsel %vm547, %v1684, 0.0
        %1686 = vadd.xlane.f32.xlu0 %v1685
        %v1687 = vpop.xlane.xlu0 %1686
        %v1688 = vmul.f32 %v1687, %v1473
        %v1689 = vadd.f32 %v1688, 1e-05
        %v1690 = vrsqrt.pop %v1689
        %v1691 = vmul.f32 %v1683, %v1690
        %v1692 = vld [vmem:[%s14] sm:$0x1]
        %v1694 = vlaneseq
        %v1695 = vshrl.u32 %v1694, 7
        %v1696 = vsub.s32 0, %v1695
        %v1697 = vrot.slane %v1692, %v1696
        %v1699 = vmul.f32 %v1691, %v1697
        %v1700 = vld [vmem:[%s15] sm:$0x1]
        %v1702 = vlaneseq
        %v1703 = vshrl.u32 %v1702, 7
        %v1704 = vsub.s32 0, %v1703
        %v1705 = vrot.slane %v1700, %v1704
        %v1707 = vadd.f32 %v1699, %v1705
        %1708 = vst.msk [vmem:[%s525] sm:$0xff] %vm547, %v1707
        %s1709 = sand.u32 %s384, 1
        %s1710 = scalar_lea.sflag [#allocation4], %s1709
        %s1711 = sand.u32 %s384, 1
        %s1712 = smul.addr %s1711, 8
        %s1713 = scalar_lea.vmem [#allocation3], %s1712
        // Predicated region
        $region85: #{tpu_custom_call.1} parent=83 // pred_check
          %p1714 = pneg %p394
        $region86: #{tpu_custom_call.1} parent=83 // pred_check_branch
          %1716 = sbr.rel (%p1714) target = $region88
        $region87: #{tpu_custom_call.1} parent=83 // pred_region
          %s1718 = ssub.s32 128, 128
          %1719 = vsyncadd %s1710, %s1718
          %s1720 = smul.addr %s30, 128
          %s1721 = scalar_lea.hbm %s16, %s1720
          %s1723 = sshll.u32 %s1713, 4
          %s1724 = int_to_ptr.vmem [resolvable:$true] %s1723
          %1726 = dma.vmem_to_hbm [thread:$0]  %s1724, 128, %s1721, %s1710
        $region88: #{tpu_custom_call.1} parent=83 // pred_fallthru
          _
      $region84: #{tpu_custom_call.1} parent=5 // pred_fallthru
        _
      %p1727 = scmp.le.s32.totalorder 2, %s25
      // Predicated region
      $region89: #{tpu_custom_call.1} parent=5 // pred_check
        %p1728 = pneg %p1727
      $region90: #{tpu_custom_call.1} parent=5 // pred_check_branch
        %1730 = sbr.rel (%p1728) target = $region92
      $region91: #{tpu_custom_call.1} parent=5 // pred_region
        %s1731 = ssub.s32 %s25, 2
        // Predicated region
        $region93: #{tpu_custom_call.1} parent=91 // pred_check
          %p1732 = pneg %p400
        $region94: #{tpu_custom_call.1} parent=91 // pred_check_branch
          %1734 = sbr.rel (%p1732) target = $region96
        $region95: #{tpu_custom_call.1} parent=91 // pred_region
          %s1735 = sand.u32 %s385, 1
          %s1736 = scalar_lea.sflag [#allocation4], %s1735
          %s1737 = sand.u32 %s385, 1
          %s1738 = smul.addr %s1737, 8
          %s1739 = scalar_lea.vmem [#allocation3], %s1738
          %1740 = dma.done %s1736, 128
        $region96: #{tpu_custom_call.1} parent=91 // pred_fallthru
          _
      $region92: #{tpu_custom_call.1} parent=5 // pred_fallthru
        _
    $region6: #{tpu_custom_call.1} parent=1 // loop_footer
      %s29 = sadd.s32 1, %s25
    $region7: #{tpu_custom_call.1} parent=1 // loop_footer_branch
      %24 = sbr.rel target = $region3
    $region8: #{tpu_custom_call.1} parent=1 // loop_exit
      _
    %1741 = vsyncpa [#allocation4], 1
    %s1742 = scalar_lea.sflag [#allocation4], 1
    %1743 = vsyncpa %s1742, 1

// kernel: tpu_custom_call.1
$region0: #{tpu_custom_call.1}
  #allocation0 [shape = 'u32[]', space=smem, size = 0x4, offset = 0x4, fixed_abs, tag = 'smem constant byte address 0x4 - core index']
  #allocation1 [shape = 'u32[144,128]{1,0:T(1,128)}', space=vmem, size = 0x12000, scoped, tag = 'internal scratch']
  #allocation2 [shape = 'f32[8,32]{1,0:T(8,128)}', space=vmem, size = 0x1000, scoped, tag = 'scratch operand']
  %s0 = inlined_call_operand.vmem [shape: f32[2,8,32], index: 0, kind: input, shape index: {}]
  %s1 = inlined_call_operand.vmem [shape: f32[2,8,32], index: 1, kind: input, shape index: {}]
  %s2 = inlined_call_operand.vmem [shape: f32[32,32], index: 2, kind: input, shape index: {}]
  %s3 = inlined_call_operand.vmem [shape: f32[1,32], index: 3, kind: input, shape index: {}]
  %s4 = inlined_call_operand.vmem [shape: f32[32,64], index: 4, kind: input, shape index: {}]
  %s5 = inlined_call_operand.vmem [shape: f32[1,64], index: 5, kind: input, shape index: {}]
  %s6 = inlined_call_operand.vmem [shape: f32[32,32], index: 6, kind: input, shape index: {}]
  %s7 = inlined_call_operand.vmem [shape: f32[1,32], index: 7, kind: input, shape index: {}]
  %s8 = inlined_call_operand.vmem [shape: f32[32,128], index: 8, kind: input, shape index: {}]
  %s9 = inlined_call_operand.vmem [shape: f32[1,128], index: 9, kind: input, shape index: {}]
  %s10 = inlined_call_operand.vmem [shape: f32[128,32], index: 10, kind: input, shape index: {}]
  %s11 = inlined_call_operand.vmem [shape: f32[1,32], index: 11, kind: input, shape index: {}]
  %s12 = inlined_call_operand.vmem [shape: f32[1,32], index: 12, kind: input, shape index: {}]
  %s13 = inlined_call_operand.vmem [shape: f32[1,32], index: 13, kind: input, shape index: {}]
  %s14 = inlined_call_operand.vmem [shape: f32[1,32], index: 14, kind: input, shape index: {}]
  %s15 = inlined_call_operand.vmem [shape: f32[1,32], index: 15, kind: input, shape index: {}]
  %s16 = inlined_call_operand.hbm [shape: f32[2,8,32], index: 16, kind: output, shape index: {}]
  %s17 = sld [smem:[#allocation0]]
  $region97: #{tpu_custom_call.1} parent=0
    _
  %s19 = ssub.s32 1, %s17
  %s20 = scalar_select 0, %s19, %s17
  $region1: #{tpu_custom_call.1} parent=0
    #allocation3 [shape = 'u8[8192]{0}', space=vmem, size = 0x2000, scoped, tag = 'output window, operand 0']
    #allocation4 [shape = 's32[2]{0}', space=sflag, size = 0x8, scoped, tag = 'scoped memory for tpu_custom_call.1']
    %21 = vsyncpa [#allocation4], 0
    %s22 = scalar_lea.sflag [#allocation4], 1
    %23 = vsyncpa %s22, 0
    loop: start=0, step=1, limit=4
    $region2: #{tpu_custom_call.1} parent=1 // loop_pre_header
      _
    $region3: #{tpu_custom_call.1} parent=1 // loop_header
      %s25 = sphi 0, %s29
      %p26 = scmp.ge.s32.totalorder %s25, 4
      %s35 = sphi 0, %s37
      %s38 = sphi 0, %s35
      %s39 = sphi 0, %s38
      %s55 = sphi 0, %s39
      %s61 = sphi 0, %s63
      %s64 = sphi 0, %s61
      %s65 = sphi 0, %s64
      %s81 = sphi 0, %s65
      %s85 = sphi 0, %s85
      %s87 = sphi 0, %s85
      %s88 = sphi 0, %s87
      %s102 = sphi 0, %s88
      %s106 = sphi 0, %s106
      %s108 = sphi 0, %s106
      %s109 = sphi 0, %s108
      %s123 = sphi 0, %s109
      %s127 = sphi 0, %s127
      %s129 = sphi 0, %s127
      %s130 = sphi 0, %s129
      %s144 = sphi 0, %s130
      %s148 = sphi 0, %s148
      %s150 = sphi 0, %s148
      %s151 = sphi 0, %s150
      %s165 = sphi 0, %s151
      %s169 = sphi 0, %s169
      %s171 = sphi 0, %s169
      %s172 = sphi 0, %s171
      %s186 = sphi 0, %s172
      %s190 = sphi 0, %s190
      %s192 = sphi 0, %s190
      %s193 = sphi 0, %s192
      %s207 = sphi 0, %s193
      %s211 = sphi 0, %s211
      %s213 = sphi 0, %s211
      %s214 = sphi 0, %s213
      %s228 = sphi 0, %s214
      %s232 = sphi 0, %s232
      %s234 = sphi 0, %s232
      %s235 = sphi 0, %s234
      %s249 = sphi 0, %s235
      %s253 = sphi 0, %s253
      %s255 = sphi 0, %s253
      %s256 = sphi 0, %s255
      %s270 = sphi 0, %s256
      %s274 = sphi 0, %s274
      %s276 = sphi 0, %s274
      %s277 = sphi 0, %s276
      %s291 = sphi 0, %s277
      %s295 = sphi 0, %s295
      %s297 = sphi 0, %s295
      %s298 = sphi 0, %s297
      %s312 = sphi 0, %s298
      %s316 = sphi 0, %s316
      %s318 = sphi 0, %s316
      %s319 = sphi 0, %s318
      %s333 = sphi 0, %s319
      %s337 = sphi 0, %s337
      %s339 = sphi 0, %s337
      %s340 = sphi 0, %s339
      %s354 = sphi 0, %s340
      %s358 = sphi 0, %s358
      %s360 = sphi 0, %s358
      %s361 = sphi 0, %s360
      %s375 = sphi 0, %s361
      %s381 = sphi 0, %s383
      %s384 = sphi 0, %s381
      %s385 = sphi 0, %s384
      %s401 = sphi 0, %s385
    $region4: #{tpu_custom_call.1} parent=1 // loop_header_branch
      %28 = sbr.rel (%p26) target = $region8
    $region5: #{tpu_custom_call.1} parent=1 // loop_body
      %s30 = ssub.s32 %s25, 1
      %s31 = ssub.s32 %s25, 2
      %s32 = sadd.s32 %s25, 1
      %s33 = ssub.s32 %s25, %s32
      %p34 = scmp.eq.s32.totalorder %s33, 0
      %s36 = sadd.s32 %s35, 1
      %s37 = scalar_select %p34, %s35, %s36
      %p40 = pneg %p34
      %p41 = scmp.eq.s32.totalorder %s25, 1
      %p42 = por %p40, %p41
      %p43 = scmp.ne.s32.totalorder %s35, %s38
      %p44 = scmp.eq.s32.totalorder %s25, 0
      %p45 = por %p43, %p44
      %p46 = scmp.ne.s32.totalorder %s35, %s38
      %p47 = scmp.eq.s32.totalorder %s30, 1
      %p48 = por %p46, %p47
      %p49 = scmp.ne.s32.totalorder %s38, %s39
      %p50 = scmp.eq.s32.totalorder %s30, 0
      %p51 = por %p49, %p50
      %p52 = scmp.ne.s32.totalorder %s38, %s39
      %p53 = scmp.eq.s32.totalorder %s31, 1
      %p54 = por %p52, %p53
      %p56 = scmp.ne.s32.totalorder %s39, %s55
      %p57 = scmp.eq.s32.totalorder %s31, 0
      %p58 = por %p56, %p57
      %s59 = ssub.s32 %s25, %s32
      %p60 = scmp.eq.s32.totalorder %s59, 0
      %s62 = sadd.s32 %s61, 1
      %s63 = scalar_select %p60, %s61, %s62
      %p66 = pneg %p60
      %p67 = scmp.eq.s32.totalorder %s25, 1
      %p68 = por %p66, %p67
      %p69 = scmp.ne.s32.totalorder %s61, %s64
      %p70 = scmp.eq.s32.totalorder %s25, 0
      %p71 = por %p69, %p70
      %p72 = scmp.ne.s32.totalorder %s61, %s64
      %p73 = scmp.eq.s32.totalorder %s30, 1
      %p74 = por %p72, %p73
      %p75 = scmp.ne.s32.totalorder %s64, %s65
      %p76 = scmp.eq.s32.totalorder %s30, 0
      %p77 = por %p75, %p76
      %p78 = scmp.ne.s32.totalorder %s64, %s65
      %p79 = scmp.eq.s32.totalorder %s31, 1
      %p80 = por %p78, %p79
      %p82 = scmp.ne.s32.totalorder %s65, %s81
      %p83 = scmp.eq.s32.totalorder %s31, 0
      %p84 = por %p82, %p83
      %s86 = sadd.s32 %s85, 1
      %p89 = scmp.eq.s32.totalorder %s25, 1
      %p90 = scmp.ne.s32.totalorder %s85, %s87
      %p91 = scmp.eq.s32.totalorder %s25, 0
      %p92 = por %p90, %p91
      %p93 = scmp.ne.s32.totalorder %s85, %s87
      %p94 = scmp.eq.s32.totalorder %s30, 1
      %p95 = por %p93, %p94
      %p96 = scmp.ne.s32.totalorder %s87, %s88
      %p97 = scmp.eq.s32.totalorder %s30, 0
      %p98 = por %p96, %p97
      %p99 = scmp.ne.s32.totalorder %s87, %s88
      %p100 = scmp.eq.s32.totalorder %s31, 1
      %p101 = por %p99, %p100
      %p103 = scmp.ne.s32.totalorder %s88, %s102
      %p104 = scmp.eq.s32.totalorder %s31, 0
      %p105 = por %p103, %p104
      %s107 = sadd.s32 %s106, 1
      %p110 = scmp.eq.s32.totalorder %s25, 1
      %p111 = scmp.ne.s32.totalorder %s106, %s108
      %p112 = scmp.eq.s32.totalorder %s25, 0
      %p113 = por %p111, %p112
      %p114 = scmp.ne.s32.totalorder %s106, %s108
      %p115 = scmp.eq.s32.totalorder %s30, 1
      %p116 = por %p114, %p115
      %p117 = scmp.ne.s32.totalorder %s108, %s109
      %p118 = scmp.eq.s32.totalorder %s30, 0
      %p119 = por %p117, %p118
      %p120 = scmp.ne.s32.totalorder %s108, %s109
      %p121 = scmp.eq.s32.totalorder %s31, 1
      %p122 = por %p120, %p121
      %p124 = scmp.ne.s32.totalorder %s109, %s123
      %p125 = scmp.eq.s32.totalorder %s31, 0
      %p126 = por %p124, %p125
      %s128 = sadd.s32 %s127, 1
      %p131 = scmp.eq.s32.totalorder %s25, 1
      %p132 = scmp.ne.s32.totalorder %s127, %s129
      %p133 = scmp.eq.s32.totalorder %s25, 0
      %p134 = por %p132, %p133
      %p135 = scmp.ne.s32.totalorder %s127, %s129
      %p136 = scmp.eq.s32.totalorder %s30, 1
      %p137 = por %p135, %p136
      %p138 = scmp.ne.s32.totalorder %s129, %s130
      %p139 = scmp.eq.s32.totalorder %s30, 0
      %p140 = por %p138, %p139
      %p141 = scmp.ne.s32.totalorder %s129, %s130
      %p142 = scmp.eq.s32.totalorder %s31, 1
      %p143 = por %p141, %p142
      %p145 = scmp.ne.s32.totalorder %s130, %s144
      %p146 = scmp.eq.s32.totalorder %s31, 0
      %p147 = por %p145, %p146
      %s149 = sadd.s32 %s148, 1
      %p152 = scmp.eq.s32.totalorder %s25, 1
      %p153 = scmp.ne.s32.totalorder %s148, %s150
      %p154 = scmp.eq.s32.totalorder %s25, 0
      %p155 = por %p153, %p154
      %p156 = scmp.ne.s32.totalorder %s148, %s150
      %p157 = scmp.eq.s32.totalorder %s30, 1
      %p158 = por %p156, %p157
      %p159 = scmp.ne.s32.totalorder %s150, %s151
      %p160 = scmp.eq.s32.totalorder %s30, 0
      %p161 = por %p159, %p160
      %p162 = scmp.ne.s32.totalorder %s150, %s151
      %p163 = scmp.eq.s32.totalorder %s31, 1
      %p164 = por %p162, %p163
      %p166 = scmp.ne.s32.totalorder %s151, %s165
      %p167 = scmp.eq.s32.totalorder %s31, 0
      %p168 = por %p166, %p167
      %s170 = sadd.s32 %s169, 1
      %p173 = scmp.eq.s32.totalorder %s25, 1
      %p174 = scmp.ne.s32.totalorder %s169, %s171
      %p175 = scmp.eq.s32.totalorder %s25, 0
      %p176 = por %p174, %p175
      %p177 = scmp.ne.s32.totalorder %s169, %s171
      %p178 = scmp.eq.s32.totalorder %s30, 1
      %p179 = por %p177, %p178
      %p180 = scmp.ne.s32.totalorder %s171, %s172
      %p181 = scmp.eq.s32.totalorder %s30, 0
      %p182 = por %p180, %p181
      %p183 = scmp.ne.s32.totalorder %s171, %s172
      %p184 = scmp.eq.s32.totalorder %s31, 1
      %p185 = por %p183, %p184
      %p187 = scmp.ne.s32.totalorder %s172, %s186
      %p188 = scmp.eq.s32.totalorder %s31, 0
      %p189 = por %p187, %p188
      %s191 = sadd.s32 %s190, 1
      %p194 = scmp.eq.s32.totalorder %s25, 1
      %p195 = scmp.ne.s32.totalorder %s190, %s192
      %p196 = scmp.eq.s32.totalorder %s25, 0
      %p197 = por %p195, %p196
      %p198 = scmp.ne.s32.totalorder %s190, %s192
      %p199 = scmp.eq.s32.totalorder %s30, 1
      %p200 = por %p198, %p199
      %p201 = scmp.ne.s32.totalorder %s192, %s193
      %p202 = scmp.eq.s32.totalorder %s30, 0
      %p203 = por %p201, %p202
      %p204 = scmp.ne.s32.totalorder %s192, %s193
      %p205 = scmp.eq.s32.totalorder %s31, 1
      %p206 = por %p204, %p205
      %p208 = scmp.ne.s32.totalorder %s193, %s207
      %p209 = scmp.eq.s32.totalorder %s31, 0
      %p210 = por %p208, %p209
      %s212 = sadd.s32 %s211, 1
      %p215 = scmp.eq.s32.totalorder %s25, 1
      %p216 = scmp.ne.s32.totalorder %s211, %s213
      %p217 = scmp.eq.s32.totalorder %s25, 0
      %p218 = por %p216, %p217
      %p219 = scmp.ne.s32.totalorder %s211, %s213
      %p220 = scmp.eq.s32.totalorder %s30, 1
      %p221 = por %p219, %p220
      %p222 = scmp.ne.s32.totalorder %s213, %s214
      %p223 = scmp.eq.s32.totalorder %s30, 0
      %p224 = por %p222, %p223
      %p225 = scmp.ne.s32.totalorder %s213, %s214
      %p226 = scmp.eq.s32.totalorder %s31, 1
      %p227 = por %p225, %p226
      %p229 = scmp.ne.s32.totalorder %s214, %s228
      %p230 = scmp.eq.s32.totalorder %s31, 0
      %p231 = por %p229, %p230
      %s233 = sadd.s32 %s232, 1
      %p236 = scmp.eq.s32.totalorder %s25, 1
      %p237 = scmp.ne.s32.totalorder %s232, %s234
      %p238 = scmp.eq.s32.totalorder %s25, 0
      %p239 = por %p237, %p238
      %p240 = scmp.ne.s32.totalorder %s232, %s234
      %p241 = scmp.eq.s32.totalorder %s30, 1
      %p242 = por %p240, %p241
      %p243 = scmp.ne.s32.totalorder %s234, %s235
      %p244 = scmp.eq.s32.totalorder %s30, 0
      %p245 = por %p243, %p244
      %p246 = scmp.ne.s32.totalorder %s234, %s235
      %p247 = scmp.eq.s32.totalorder %s31, 1
      %p248 = por %p246, %p247
      %p250 = scmp.ne.s32.totalorder %s235, %s249
      %p251 = scmp.eq.s32.totalorder %s31, 0
      %p252 = por %p250, %p251
      %s254 = sadd.s32 %s253, 1
      %p257 = scmp.eq.s32.totalorder %s25, 1
      %p258 = scmp.ne.s32.totalorder %s253, %s255
      %p259 = scmp.eq.s32.totalorder %s25, 0
      %p260 = por %p258, %p259
      %p261 = scmp.ne.s32.totalorder %s253, %s255
      %p262 = scmp.eq.s32.totalorder %s30, 1
      %p263 = por %p261, %p262
      %p264 = scmp.ne.s32.totalorder %s255, %s256
      %p265 = scmp.eq.s32.totalorder %s30, 0
      %p266 = por %p264, %p265
      %p267 = scmp.ne.s32.totalorder %s255, %s256
      %p268 = scmp.eq.s32.totalorder %s31, 1
      %p269 = por %p267, %p268
      %p271 = scmp.ne.s32.totalorder %s256, %s270
      %p272 = scmp.eq.s32.totalorder %s31, 0
      %p273 = por %p271, %p272
      %s275 = sadd.s32 %s274, 1
      %p278 = scmp.eq.s32.totalorder %s25, 1
      %p279 = scmp.ne.s32.totalorder %s274, %s276
      %p280 = scmp.eq.s32.totalorder %s25, 0
      %p281 = por %p279, %p280
      %p282 = scmp.ne.s32.totalorder %s274, %s276
      %p283 = scmp.eq.s32.totalorder %s30, 1
      %p284 = por %p282, %p283
      %p285 = scmp.ne.s32.totalorder %s276, %s277
      %p286 = scmp.eq.s32.totalorder %s30, 0
      %p287 = por %p285, %p286
      %p288 = scmp.ne.s32.totalorder %s276, %s277
      %p289 = scmp.eq.s32.totalorder %s31, 1
      %p290 = por %p288, %p289
      %p292 = scmp.ne.s32.totalorder %s277, %s291
      %p293 = scmp.eq.s32.totalorder %s31, 0
      %p294 = por %p292, %p293
      %s296 = sadd.s32 %s295, 1
      %p299 = scmp.eq.s32.totalorder %s25, 1
      %p300 = scmp.ne.s32.totalorder %s295, %s297
      %p301 = scmp.eq.s32.totalorder %s25, 0
      %p302 = por %p300, %p301
      %p303 = scmp.ne.s32.totalorder %s295, %s297
      %p304 = scmp.eq.s32.totalorder %s30, 1
      %p305 = por %p303, %p304
      %p306 = scmp.ne.s32.totalorder %s297, %s298
      %p307 = scmp.eq.s32.totalorder %s30, 0
      %p308 = por %p306, %p307
      %p309 = scmp.ne.s32.totalorder %s297, %s298
      %p310 = scmp.eq.s32.totalorder %s31, 1
      %p311 = por %p309, %p310
      %p313 = scmp.ne.s32.totalorder %s298, %s312
      %p314 = scmp.eq.s32.totalorder %s31, 0
      %p315 = por %p313, %p314
      %s317 = sadd.s32 %s316, 1
      %p320 = scmp.eq.s32.totalorder %s25, 1
      %p321 = scmp.ne.s32.totalorder %s316, %s318
      %p322 = scmp.eq.s32.totalorder %s25, 0
      %p323 = por %p321, %p322
      %p324 = scmp.ne.s32.totalorder %s316, %s318
      %p325 = scmp.eq.s32.totalorder %s30, 1
      %p326 = por %p324, %p325
      %p327 = scmp.ne.s32.totalorder %s318, %s319
      %p328 = scmp.eq.s32.totalorder %s30, 0
      %p329 = por %p327, %p328
      %p330 = scmp.ne.s32.totalorder %s318, %s319
      %p331 = scmp.eq.s32.totalorder %s31, 1
      %p332 = por %p330, %p331
      %p334 = scmp.ne.s32.totalorder %s319, %s333
      %p335 = scmp.eq.s32.totalorder %s31, 0
      %p336 = por %p334, %p335
      %s338 = sadd.s32 %s337, 1
      %p341 = scmp.eq.s32.totalorder %s25, 1
      %p342 = scmp.ne.s32.totalorder %s337, %s339
      %p343 = scmp.eq.s32.totalorder %s25, 0
      %p344 = por %p342, %p343
      %p345 = scmp.ne.s32.totalorder %s337, %s339
      %p346 = scmp.eq.s32.totalorder %s30, 1
      %p347 = por %p345, %p346
      %p348 = scmp.ne.s32.totalorder %s339, %s340
      %p349 = scmp.eq.s32.totalorder %s30, 0
      %p350 = por %p348, %p349
      %p351 = scmp.ne.s32.totalorder %s339, %s340
      %p352 = scmp.eq.s32.totalorder %s31, 1
      %p353 = por %p351, %p352
      %p355 = scmp.ne.s32.totalorder %s340, %s354
      %p356 = scmp.eq.s32.totalorder %s31, 0
      %p357 = por %p355, %p356
      %s359 = sadd.s32 %s358, 1
      %p362 = scmp.eq.s32.totalorder %s25, 1
      %p363 = scmp.ne.s32.totalorder %s358, %s360
      %p364 = scmp.eq.s32.totalorder %s25, 0
      %p365 = por %p363, %p364
      %p366 = scmp.ne.s32.totalorder %s358, %s360
      %p367 = scmp.eq.s32.totalorder %s30, 1
      %p368 = por %p366, %p367
      %p369 = scmp.ne.s32.totalorder %s360, %s361
      %p370 = scmp.eq.s32.totalorder %s30, 0
      %p371 = por %p369, %p370
      %p372 = scmp.ne.s32.totalorder %s360, %s361
      %p373 = scmp.eq.s32.totalorder %s31, 1
      %p374 = por %p372, %p373
      %p376 = scmp.ne.s32.totalorder %s361, %s375
      %p377 = scmp.eq.s32.totalorder %s31, 0
      %p378 = por %p376, %p377
      %s379 = ssub.s32 %s25, %s32
      %p380 = scmp.eq.s32.totalorder %s379, 0
      %s382 = sadd.s32 %s381, 1
      %s383 = scalar_select %p380, %s381, %s382
      %p386 = pneg %p380
      %p387 = scmp.eq.s32.totalorder %s25, 1
      %p388 = por %p386, %p387
      %p389 = scmp.ne.s32.totalorder %s381, %s384
      %p390 = scmp.eq.s32.totalorder %s25, 0
      %p391 = por %p389, %p390
      %p392 = scmp.ne.s32.totalorder %s381, %s384
      %p393 = scmp.eq.s32.totalorder %s30, 1
      %p394 = por %p392, %p393
      %p395 = scmp.ne.s32.totalorder %s384, %s385
      %p396 = scmp.eq.s32.totalorder %s30, 0
      %p397 = por %p395, %p396
      %p398 = scmp.ne.s32.totalorder %s384, %s385
      %p399 = scmp.eq.s32.totalorder %s31, 1
      %p400 = por %p398, %p399
      %p402 = scmp.ne.s32.totalorder %s385, %s401
      %p403 = scmp.eq.s32.totalorder %s31, 0
      %p404 = por %p402, %p403
      %p405 = scmp.le.s32.totalorder 1, %s25
      %p406 = scmp.lt.s32.totalorder %s25, 3
      %p407 = pnand %p405, %p406
      %p408 = pneg %p407
      // Predicated region
      $region9: #{tpu_custom_call.1} parent=5 // pred_check
        _
      $region10: #{tpu_custom_call.1} parent=5 // pred_check_branch
        %410 = sbr.rel (%p407) target = $region12
      $region11: #{tpu_custom_call.1} parent=5 // pred_region
        %s411 = ssub.s32 %s25, 1
        // Predicated region
        $region13: #{tpu_custom_call.1} parent=11 // pred_check
          %p412 = pneg %p98
        $region14: #{tpu_custom_call.1} parent=11 // pred_check_branch
          %414 = sbr.rel (%p412) target = $region16
        $region15: #{tpu_custom_call.1} parent=11 // pred_region
          _
        $region16: #{tpu_custom_call.1} parent=11 // pred_fallthru
          _
        // Predicated region
        $region17: #{tpu_custom_call.1} parent=11 // pred_check
          %p415 = pneg %p119
        $region18: #{tpu_custom_call.1} parent=11 // pred_check_branch
          %417 = sbr.rel (%p415) target = $region20
        $region19: #{tpu_custom_call.1} parent=11 // pred_region
          _
        $region20: #{tpu_custom_call.1} parent=11 // pred_fallthru
          _
        // Predicated region
        $region21: #{tpu_custom_call.1} parent=11 // pred_check
          %p418 = pneg %p140
        $region22: #{tpu_custom_call.1} parent=11 // pred_check_branch
          %420 = sbr.rel (%p418) target = $region24
        $region23: #{tpu_custom_call.1} parent=11 // pred_region
          _
        $region24: #{tpu_custom_call.1} parent=11 // pred_fallthru
          _
        // Predicated region
        $region25: #{tpu_custom_call.1} parent=11 // pred_check
          %p421 = pneg %p161
        $region26: #{tpu_custom_call.1} parent=11 // pred_check_branch
          %423 = sbr.rel (%p421) target = $region28
        $region27: #{tpu_custom_call.1} parent=11 // pred_region
          _
        $region28: #{tpu_custom_call.1} parent=11 // pred_fallthru
          _
        // Predicated region
        $region29: #{tpu_custom_call.1} parent=11 // pred_check
          %p424 = pneg %p182
        $region30: #{tpu_custom_call.1} parent=11 // pred_check_branch
          %426 = sbr.rel (%p424) target = $region32
        $region31: #{tpu_custom_call.1} parent=11 // pred_region
          _
        $region32: #{tpu_custom_call.1} parent=11 // pred_fallthru
          _
        // Predicated region
        $region33: #{tpu_custom_call.1} parent=11 // pred_check
          %p427 = pneg %p203
        $region34: #{tpu_custom_call.1} parent=11 // pred_check_branch
          %429 = sbr.rel (%p427) target = $region36
        $region35: #{tpu_custom_call.1} parent=11 // pred_region
          _
        $region36: #{tpu_custom_call.1} parent=11 // pred_fallthru
          _
        // Predicated region
        $region37: #{tpu_custom_call.1} parent=11 // pred_check
          %p430 = pneg %p224
        $region38: #{tpu_custom_call.1} parent=11 // pred_check_branch
          %432 = sbr.rel (%p430) target = $region40
        $region39: #{tpu_custom_call.1} parent=11 // pred_region
          _
        $region40: #{tpu_custom_call.1} parent=11 // pred_fallthru
          _
        // Predicated region
        $region41: #{tpu_custom_call.1} parent=11 // pred_check
          %p433 = pneg %p245
        $region42: #{tpu_custom_call.1} parent=11 // pred_check_branch
          %435 = sbr.rel (%p433) target = $region44
        $region43: #{tpu_custom_call.1} parent=11 // pred_region
          _
        $region44: #{tpu_custom_call.1} parent=11 // pred_fallthru
          _
        // Predicated region
        $region45: #{tpu_custom_call.1} parent=11 // pred_check
          %p436 = pneg %p266
        $region46: #{tpu_custom_call.1} parent=11 // pred_check_branch
          %438 = sbr.rel (%p436) target = $region48
        $region47: #{tpu_custom_call.1} parent=11 // pred_region
          _
        $region48: #{tpu_custom_call.1} parent=11 // pred_fallthru
          _
        // Predicated region
        $region49: #{tpu_custom_call.1} parent=11 // pred_check
          %p439 = pneg %p287
        $region50: #{tpu_custom_call.1} parent=11 // pred_check_branch
          %441 = sbr.rel (%p439) target = $region52
        $region51: #{tpu_custom_call.1} parent=11 // pred_region
          _
        $region52: #{tpu_custom_call.1} parent=11 // pred_fallthru
          _
        // Predicated region
        $region53: #{tpu_custom_call.1} parent=11 // pred_check
          %p442 = pneg %p308
        $region54: #{tpu_custom_call.1} parent=11 // pred_check_branch
          %444 = sbr.rel (%p442) target = $region56
        $region55: #{tpu_custom_call.1} parent=11 // pred_region
          _
        $region56: #{tpu_custom_call.1} parent=11 // pred_fallthru
          _
        // Predicated region
        $region57: #{tpu_custom_call.1} parent=11 // pred_check
          %p445 = pneg %p329
        $region58: #{tpu_custom_call.1} parent=11 // pred_check_branch
          %447 = sbr.rel (%p445) target = $region60
        $region59: #{tpu_custom_call.1} parent=11 // pred_region
          _
        $region60: #{tpu_custom_call.1} parent=11 // pred_fallthru
          _
        // Predicated region
        $region61: #{tpu_custom_call.1} parent=11 // pred_check
          %p448 = pneg %p350
        $region62: #{tpu_custom_call.1} parent=11 // pred_check_branch
          %450 = sbr.rel (%p448) target = $region64
        $region63: #{tpu_custom_call.1} parent=11 // pred_region
          _
        $region64: #{tpu_custom_call.1} parent=11 // pred_fallthru
          _
        // Predicated region
        $region65: #{tpu_custom_call.1} parent=11 // pred_check
          %p451 = pneg %p371
        $region66: #{tpu_custom_call.1} parent=11 // pred_check_branch
          %453 = sbr.rel (%p451) target = $region68
        $region67: #{tpu_custom_call.1} parent=11 // pred_region
          _
        $region68: #{tpu_custom_call.1} parent=11 // pred_fallthru
          _
      $region12: #{tpu_custom_call.1} parent=5 // pred_fallthru
        _
      %p454 = scmp.lt.s32.totalorder %s25, 2
      // Predicated region
      $region69: #{tpu_custom_call.1} parent=5 // pred_check
        %p455 = pneg %p454
      $region70: #{tpu_custom_call.1} parent=5 // pred_check_branch
        %457 = sbr.rel (%p455) target = $region72
      $region71: #{tpu_custom_call.1} parent=5 // pred_region
        // Predicated region
        $region73: #{tpu_custom_call.1} parent=71 // pred_check
          %p458 = pneg %p45
        $region74: #{tpu_custom_call.1} parent=71 // pred_check_branch
          %460 = sbr.rel (%p458) target = $region76
        $region75: #{tpu_custom_call.1} parent=71 // pred_region
          %p461 = scmp.lt.s32.totalorder %s25, 1
          %s462 = scalar_select %p461, %s25, 1
          %s463 = smul.addr %s462, 8
          %s464 = scalar_lea.vmem %s0, %s463
        $region76: #{tpu_custom_call.1} parent=71 // pred_fallthru
          _
        // Predicated region
        $region77: #{tpu_custom_call.1} parent=71 // pred_check
          %p465 = pneg %p71
        $region78: #{tpu_custom_call.1} parent=71 // pred_check_branch
          %467 = sbr.rel (%p465) target = $region80
        $region79: #{tpu_custom_call.1} parent=71 // pred_region
          %p468 = scmp.lt.s32.totalorder %s25, 1
          %s469 = scalar_select %p468, %s25, 1
          %s470 = smul.addr %s469, 8
          %s471 = scalar_lea.vmem %s1, %s470
        $region80: #{tpu_custom_call.1} parent=71 // pred_fallthru
          _
      $region72: #{tpu_custom_call.1} parent=5 // pred_fallthru
        _
      %p472 = scmp.le.s32.totalorder 1, %s25
      %p473 = scmp.lt.s32.totalorder %s25, 3
      %p474 = pnand %p472, %p473
      %p475 = pneg %p474
      // Predicated region
      $region81: #{tpu_custom_call.1} parent=5 // pred_check
        _
      $region82: #{tpu_custom_call.1} parent=5 // pred_check_branch
        %477 = sbr.rel (%p474) target = $region84
      $region83: #{tpu_custom_call.1} parent=5 // pred_region
        %s478 = ssub.s32 %s25, 1
        %p479 = scmp.lt.s32.totalorder %s30, 1
        %s480 = scalar_select %p479, %s30, 1
        %s481 = smul.addr %s480, 8
        %s482 = scalar_lea.vmem %s0, %s481
        %p483 = pneg %p51
        %p484 = pneg %p48
        %p485 = scmp.lt.s32.totalorder %s30, 1
        %s486 = scalar_select %p485, %s30, 1
        %s487 = smul.addr %s486, 8
        %s488 = scalar_lea.vmem %s1, %s487
        %p489 = pneg %p77
        %p490 = pneg %p74
        %p491 = pneg %p98
        %p492 = pneg %p95
        %p493 = pneg %p119
        %p494 = pneg %p116
        %p495 = pneg %p140
        %p496 = pneg %p137
        %p497 = pneg %p161
        %p498 = pneg %p158
        %p499 = pneg %p182
        %p500 = pneg %p179
        %p501 = pneg %p203
        %p502 = pneg %p200
        %p503 = pneg %p224
        %p504 = pneg %p221
        %p505 = pneg %p245
        %p506 = pneg %p242
        %p507 = pneg %p266
        %p508 = pneg %p263
        %p509 = pneg %p287
        %p510 = pneg %p284
        %p511 = pneg %p308
        %p512 = pneg %p305
        %p513 = pneg %p329
        %p514 = pneg %p326
        %p515 = pneg %p350
        %p516 = pneg %p347
        %p517 = pneg %p371
        %p518 = pneg %p368
        %p519 = pneg %p397
        %p520 = pneg %p394
        %s521 = sand.u32 %s384, 1
        %s522 = scalar_lea.sflag [#allocation4], %s521
        %s523 = sand.u32 %s384, 1
        %s524 = smul.addr %s523, 8
        %s525 = scalar_lea.vmem [#allocation3], %s524
        %p526 = scmp.lt.s32.totalorder %s30, 1
        %s527 = scalar_select %p526, %s30, 1
        %s528 = smul.addr %s527, 8
        %s529 = scalar_lea.vmem %s0, %s528
        %p530 = scmp.lt.s32.totalorder %s30, 1
        %s531 = scalar_select %p530, %s30, 1
        %s532 = smul.addr %s531, 8
        %s533 = scalar_lea.vmem %s1, %s532
        %v534 = vld [vmem:[%s529] sm:$0xff]
        %v535 = vld [vmem:[%s533] sm:$0xff]
        %v536 = vld [vmem:[%s2] sm:$0xff]
        %v537 = vld [vmem:[%s2 + $0x8] sm:$0xff]
        %v538 = vld [vmem:[%s2 + $0x10] sm:$0xff]
        %v539 = vld [vmem:[%s2 + $0x18] sm:$0xff]
        %v540 = vld [vmem:[%s3] sm:$0x1]
        %v542 = vlaneseq
        %v543 = vshrl.u32 %v542, 7
        %v544 = vsub.s32 0, %v543
        %v545 = vrot.slane %v540, %v544
        %vm547 = vcmask 261120
        %v549 = vsel %vm547, %v535, 0
        %551 = vmatprep.subr.mxu0 0.0
        %552 = vmatpush1.msra.mxu0 %v536
        %553 = vmatprep.subr.mxu0 0.0
        %554 = vmatpush1.msra.mxu0 %v537
        %555 = vmatprep.subr.mxu0 0.0
        %556 = vmatpush1.msra.mxu0 %v538
        %557 = vmatprep.subr.mxu0 0.0
        %558 = vmatpush1.msra.mxu0 %v539
        %559 = vmatprep.subr.mxu0 0.0
        %560 = vmatpush1.msra.mxu0 0.0
        %561 = vmatprep.subr.mxu0 0.0
        %562 = vmatpush1.msra.mxu0 0.0
        %563 = vmatprep.subr.mxu0 0.0
        %564 = vmatpush1.msra.mxu0 0.0
        %565 = vmatprep.subr.mxu0 0.0
        %566 = vmatpush1.msra.mxu0 0.0
        %567 = vmatprep.subr.mxu0 0.0
        %568 = vmatpush1.msra.mxu0 0.0
        %569 = vmatprep.subr.mxu0 0.0
        %570 = vmatpush1.msra.mxu0 0.0
        %571 = vmatprep.subr.mxu0 0.0
        %572 = vmatpush1.msra.mxu0 0.0
        %573 = vmatprep.subr.mxu0 0.0
        %574 = vmatpush1.msra.mxu0 0.0
        %575 = vmatprep.subr.mxu0 0.0
        %576 = vmatpush1.msra.mxu0 0.0
        %577 = vmatprep.subr.mxu0 0.0
        %578 = vmatpush1.msra.mxu0 0.0
        %579 = vmatprep.subr.mxu0 0.0
        %580 = vmatpush1.msra.mxu0 0.0
        %581 = vmatprep.subr.mxu0 0.0
        %582 = vmatpush1.msra.mxu0 0.0
        %583 = vmatprep.subr.mxu0 0.0
        %584 = vmatpush1.msra.mxu0 0.0
        %585 = vmatprep.subr.mxu0 0.0
        %586 = vmatpush1.msra.mxu0 0.0
        %587 = vmatprep.subr.mxu0 0.0
        %588 = vmatpush1.msra.mxu0 0.0
        %589 = vmatprep.subr.mxu0 0.0
        %590 = vmatpush1.msra.mxu0 0.0
        %591 = vmatprep.subr.mxu0 0.0
        %592 = vmatpush1.msra.mxu0 0.0
        %593 = vmatprep.subr.mxu0 0.0
        %594 = vmatpush1.msra.mxu0 0.0
        %595 = vmatprep.subr.mxu0 0.0
        %596 = vmatpush1.msra.mxu0 0.0
        %597 = vmatprep.subr.mxu0 0.0
        %598 = vmatpush1.msra.mxu0 0.0
        %599 = vmatprep.subr.mxu0 0.0
        %600 = vmatpush1.msra.mxu0 0.0
        %601 = vmatprep.subr.mxu0 0.0
        %602 = vmatpush1.msra.mxu0 0.0
        %603 = vmatprep.subr.mxu0 0.0
        %604 = vmatpush1.msra.mxu0 0.0
        %605 = vmatprep.subr.mxu0 0.0
        %606 = vmatpush1.msra.mxu0 0.0
        %607 = vmatprep.subr.mxu0 0.0
        %608 = vmatpush1.msra.mxu0 0.0
        %609 = vmatprep.subr.mxu0 0.0
        %610 = vmatpush1.msra.mxu0 0.0
        %611 = vmatprep.subr.mxu0 0.0
        %612 = vmatpush1.msra.mxu0 0.0
        %613 = vmatprep.subr.mxu0 0.0
        %614 = vmatpush1.msra.mxu0 0.0
        %615 = vmatprep.mubr.f32.mxu0 0.0
        %616 = vmatmul.mubr.f32.gmra.mrb[0].mxu0 %v549
        %v617 = vpop.f32.mrb[0].mxu0
        %v618 = vadd.f32 %v545, %v617
        %v619 = vpop.f32.mrb[0].mxu0
        %620 = vdwg.mxu0
        %v621 = vmul.f32 %v618, 0.35355338
        %v622 = vld [vmem:[%s4] sm:$0xff]
        %v623 = vld [vmem:[%s4 + $0x8] sm:$0xff]
        %v624 = vld [vmem:[%s4 + $0x10] sm:$0xff]
        %v625 = vld [vmem:[%s4 + $0x18] sm:$0xff]
        %v626 = vld [vmem:[%s5] sm:$0x1]
        %v628 = vlaneseq
        %v629 = vshrl.u32 %v628, 7
        %v630 = vsub.s32 0, %v629
        %v631 = vrot.slane %v626, %v630
        %v634 = vsel %vm547, %v534, 0
        %636 = vmatprep.subr.mxu0 0.0
        %637 = vmatpush1.msra.mxu0 %v622
        %638 = vmatprep.subr.mxu0 0.0
        %639 = vmatpush1.msra.mxu0 %v623
        %640 = vmatprep.subr.mxu0 0.0
        %641 = vmatpush1.msra.mxu0 %v624
        %642 = vmatprep.subr.mxu0 0.0
        %643 = vmatpush1.msra.mxu0 %v625
        %644 = vmatprep.subr.mxu0 0.0
        %645 = vmatpush1.msra.mxu0 0.0
        %646 = vmatprep.subr.mxu0 0.0
        %647 = vmatpush1.msra.mxu0 0.0
        %648 = vmatprep.subr.mxu0 0.0
        %649 = vmatpush1.msra.mxu0 0.0
        %650 = vmatprep.subr.mxu0 0.0
        %651 = vmatpush1.msra.mxu0 0.0
        %652 = vmatprep.subr.mxu0 0.0
        %653 = vmatpush1.msra.mxu0 0.0
        %654 = vmatprep.subr.mxu0 0.0
        %655 = vmatpush1.msra.mxu0 0.0
        %656 = vmatprep.subr.mxu0 0.0
        %657 = vmatpush1.msra.mxu0 0.0
        %658 = vmatprep.subr.mxu0 0.0
        %659 = vmatpush1.msra.mxu0 0.0
        %660 = vmatprep.subr.mxu0 0.0
        %661 = vmatpush1.msra.mxu0 0.0
        %662 = vmatprep.subr.mxu0 0.0
        %663 = vmatpush1.msra.mxu0 0.0
        %664 = vmatprep.subr.mxu0 0.0
        %665 = vmatpush1.msra.mxu0 0.0
        %666 = vmatprep.subr.mxu0 0.0
        %667 = vmatpush1.msra.mxu0 0.0
        %668 = vmatprep.subr.mxu0 0.0
        %669 = vmatpush1.msra.mxu0 0.0
        %670 = vmatprep.subr.mxu0 0.0
        %671 = vmatpush1.msra.mxu0 0.0
        %672 = vmatprep.subr.mxu0 0.0
        %673 = vmatpush1.msra.mxu0 0.0
        %674 = vmatprep.subr.mxu0 0.0
        %675 = vmatpush1.msra.mxu0 0.0
        %676 = vmatprep.subr.mxu0 0.0
        %677 = vmatpush1.msra.mxu0 0.0
        %678 = vmatprep.subr.mxu0 0.0
        %679 = vmatpush1.msra.mxu0 0.0
        %680 = vmatprep.subr.mxu0 0.0
        %681 = vmatpush1.msra.mxu0 0.0
        %682 = vmatprep.subr.mxu0 0.0
        %683 = vmatpush1.msra.mxu0 0.0
        %684 = vmatprep.subr.mxu0 0.0
        %685 = vmatpush1.msra.mxu0 0.0
        %686 = vmatprep.subr.mxu0 0.0
        %687 = vmatpush1.msra.mxu0 0.0
        %688 = vmatprep.subr.mxu0 0.0
        %689 = vmatpush1.msra.mxu0 0.0
        %690 = vmatprep.subr.mxu0 0.0
        %691 = vmatpush1.msra.mxu0 0.0
        %692 = vmatprep.subr.mxu0 0.0
        %693 = vmatpush1.msra.mxu0 0.0
        %694 = vmatprep.subr.mxu0 0.0
        %695 = vmatpush1.msra.mxu0 0.0
        %696 = vmatprep.subr.mxu0 0.0
        %697 = vmatpush1.msra.mxu0 0.0
        %698 = vmatprep.subr.mxu0 0.0
        %699 = vmatpush1.msra.mxu0 0.0
        %700 = vmatprep.mubr.f32.mxu0 0.0
        %701 = vmatmul.mubr.f32.gmra.mrb[0].mxu0 %v634
        %v702 = vpop.f32.mrb[0].mxu0
        %v703 = vadd.f32 %v631, %v702
        %v704 = vpop.f32.mrb[0].mxu0
        %705 = vdwg.mxu0
        %vm706 = vcmask 64512
        %v708 = vsel %vm706, %v621, 0
        %v711 = vsel %vm706, %v703, 0
        %713 = vmatprep.subr.mxu0 0.0
        %714 = vmatpush1.xpose.msra.mxu0 %v711
        %715 = vmatprep.subr.mxu0 0.0
        %716 = vmatpush1.xpose.msra.mxu0 0.0
        %717 = vmatprep.subr.mxu0 0.0
        %718 = vmatpush1.xpose.msra.mxu0 0.0
        %719 = vmatprep.subr.mxu0 0.0
        %720 = vmatpush1.xpose.msra.mxu0 0.0
        %721 = vmatprep.subr.mxu0 0.0
        %722 = vmatpush1.xpose.msra.mxu0 0.0
        %723 = vmatprep.subr.mxu0 0.0
        %724 = vmatpush1.xpose.msra.mxu0 0.0
        %725 = vmatprep.subr.mxu0 0.0
        %726 = vmatpush1.xpose.msra.mxu0 0.0
        %727 = vmatprep.subr.mxu0 0.0
        %728 = vmatpush1.xpose.msra.mxu0 0.0
        %729 = vmatprep.subr.mxu0 0.0
        %730 = vmatpush1.xpose.msra.mxu0 0.0
        %731 = vmatprep.subr.mxu0 0.0
        %732 = vmatpush1.xpose.msra.mxu0 0.0
        %733 = vmatprep.subr.mxu0 0.0
        %734 = vmatpush1.xpose.msra.mxu0 0.0
        %735 = vmatprep.subr.mxu0 0.0
        %736 = vmatpush1.xpose.msra.mxu0 0.0
        %737 = vmatprep.subr.mxu0 0.0
        %738 = vmatpush1.xpose.msra.mxu0 0.0
        %739 = vmatprep.subr.mxu0 0.0
        %740 = vmatpush1.xpose.msra.mxu0 0.0
        %741 = vmatprep.subr.mxu0 0.0
        %742 = vmatpush1.xpose.msra.mxu0 0.0
        %743 = vmatprep.subr.mxu0 0.0
        %744 = vmatpush1.xpose.msra.mxu0 0.0
        %745 = vmatprep.subr.mxu0 0.0
        %746 = vmatpush1.xpose.msra.mxu0 0.0
        %747 = vmatprep.subr.mxu0 0.0
        %748 = vmatpush1.xpose.msra.mxu0 0.0
        %749 = vmatprep.subr.mxu0 0.0
        %750 = vmatpush1.xpose.msra.mxu0 0.0
        %751 = vmatprep.subr.mxu0 0.0
        %752 = vmatpush1.xpose.msra.mxu0 0.0
        %753 = vmatprep.subr.mxu0 0.0
        %754 = vmatpush1.xpose.msra.mxu0 0.0
        %755 = vmatprep.subr.mxu0 0.0
        %756 = vmatpush1.xpose.msra.mxu0 0.0
        %757 = vmatprep.subr.mxu0 0.0
        %758 = vmatpush1.xpose.msra.mxu0 0.0
        %759 = vmatprep.subr.mxu0 0.0
        %760 = vmatpush1.xpose.msra.mxu0 0.0
        %761 = vmatprep.subr.mxu0 0.0
        %762 = vmatpush1.xpose.msra.mxu0 0.0
        %763 = vmatprep.subr.mxu0 0.0
        %764 = vmatpush1.xpose.msra.mxu0 0.0
        %765 = vmatprep.subr.mxu0 0.0
        %766 = vmatpush1.xpose.msra.mxu0 0.0
        %767 = vmatprep.subr.mxu0 0.0
        %768 = vmatpush1.xpose.msra.mxu0 0.0
        %769 = vmatprep.subr.mxu0 0.0
        %770 = vmatpush1.xpose.msra.mxu0 0.0
        %771 = vmatprep.subr.mxu0 0.0
        %772 = vmatpush1.xpose.msra.mxu0 0.0
        %773 = vmatprep.subr.mxu0 0.0
        %774 = vmatpush1.xpose.msra.mxu0 0.0
        %775 = vmatprep.subr.mxu0 0.0
        %776 = vmatpush1.xpose.msra.mxu0 0.0
        %777 = vmatprep.mubr.f32.mxu0 0.0
        %778 = vmatmul.mubr.f32.gmra.mrb[0].mxu0 %v708
        %v779 = vpop.f32.mrb[0].mxu0
        %v780 = vadd.f32 0.0, %v779
        %v781 = vpop.f32.mrb[0].mxu0
        %782 = vdwg.mxu0
        %v783 = vsel %vm706, %v780, -inf
        %784 = vmax.xlane.f32.xlu0 %v783
        %v785 = vpop.xlane.xlu0 %784
        %v786 = vsub.f32 %v780, %v785
        %v787 = vmul.f32 %v786, 1.442695
        %v788 = vpow.pop %v787
        %v789 = vsel %vm706, %v788, 0.0
        %790 = vadd.xlane.f32.xlu0 %v789
        %v791 = vpop.xlane.xlu0 %790
        %v792 = vrcp.pop %v791
        %v793 = vmul.f32 %v788, %v792
        %794 = vrot.lane.b32.xlu0 %v703, 96
        %v795 = vpop.permute.xlu0 %794
        %v798 = vsel %vm706, %v793, 0
        %800 = vmatprep.subr.mxu0 0.0
        %801 = vmatpush1.msra.mxu0 %v795
        %802 = vmatprep.subr.mxu0 0.0
        %803 = vmatpush1.msra.mxu0 0.0
        %804 = vmatprep.subr.mxu0 0.0
        %805 = vmatpush1.msra.mxu0 0.0
        %806 = vmatprep.subr.mxu0 0.0
        %807 = vmatpush1.msra.mxu0 0.0
        %808 = vmatprep.subr.mxu0 0.0
        %809 = vmatpush1.msra.mxu0 0.0
        %810 = vmatprep.subr.mxu0 0.0
        %811 = vmatpush1.msra.mxu0 0.0
        %812 = vmatprep.subr.mxu0 0.0
        %813 = vmatpush1.msra.mxu0 0.0
        %814 = vmatprep.subr.mxu0 0.0
        %815 = vmatpush1.msra.mxu0 0.0
        %816 = vmatprep.subr.mxu0 0.0
        %817 = vmatpush1.msra.mxu0 0.0
        %818 = vmatprep.subr.mxu0 0.0
        %819 = vmatpush1.msra.mxu0 0.0
        %820 = vmatprep.subr.mxu0 0.0
        %821 = vmatpush1.msra.mxu0 0.0
        %822 = vmatprep.subr.mxu0 0.0
        %823 = vmatpush1.msra.mxu0 0.0
        %824 = vmatprep.subr.mxu0 0.0
        %825 = vmatpush1.msra.mxu0 0.0
        %826 = vmatprep.subr.mxu0 0.0
        %827 = vmatpush1.msra.mxu0 0.0
        %828 = vmatprep.subr.mxu0 0.0
        %829 = vmatpush1.msra.mxu0 0.0
        %830 = vmatprep.subr.mxu0 0.0
        %831 = vmatpush1.msra.mxu0 0.0
        %832 = vmatprep.subr.mxu0 0.0
        %833 = vmatpush1.msra.mxu0 0.0
        %834 = vmatprep.subr.mxu0 0.0
        %835 = vmatpush1.msra.mxu0 0.0
        %836 = vmatprep.subr.mxu0 0.0
        %837 = vmatpush1.msra.mxu0 0.0
        %838 = vmatprep.subr.mxu0 0.0
        %839 = vmatpush1.msra.mxu0 0.0
        %840 = vmatprep.subr.mxu0 0.0
        %841 = vmatpush1.msra.mxu0 0.0
        %842 = vmatprep.subr.mxu0 0.0
        %843 = vmatpush1.msra.mxu0 0.0
        %844 = vmatprep.subr.mxu0 0.0
        %845 = vmatpush1.msra.mxu0 0.0
        %846 = vmatprep.subr.mxu0 0.0
        %847 = vmatpush1.msra.mxu0 0.0
        %848 = vmatprep.subr.mxu0 0.0
        %849 = vmatpush1.msra.mxu0 0.0
        %850 = vmatprep.subr.mxu0 0.0
        %851 = vmatpush1.msra.mxu0 0.0
        %852 = vmatprep.subr.mxu0 0.0
        %853 = vmatpush1.msra.mxu0 0.0
        %854 = vmatprep.subr.mxu0 0.0
        %855 = vmatpush1.msra.mxu0 0.0
        %856 = vmatprep.subr.mxu0 0.0
        %857 = vmatpush1.msra.mxu0 0.0
        %858 = vmatprep.subr.mxu0 0.0
        %859 = vmatpush1.msra.mxu0 0.0
        %860 = vmatprep.subr.mxu0 0.0
        %861 = vmatpush1.msra.mxu0 0.0
        %862 = vmatprep.subr.mxu0 0.0
        %863 = vmatpush1.msra.mxu0 0.0
        %864 = vmatprep.mubr.f32.mxu0 0.0
        %865 = vmatmul.mubr.f32.gmra.mrb[0].mxu0 %v798
        %v866 = vpop.f32.mrb[0].mxu0
        %v867 = vadd.f32 0.0, %v866
        %v868 = vpop.f32.mrb[0].mxu0
        %869 = vdwg.mxu0
        %870 = vst.msk [vmem:[#allocation2] sm:$0xff] %vm706, %v867
        %871 = vrot.lane.b32.xlu0 %v621, 120
        %v872 = vpop.permute.xlu0 %871
        %873 = vrot.lane.b32.xlu0 %v703, 120
        %v874 = vpop.permute.xlu0 %873
        %v875 = vsel %vm706, %v872, 0
        %v877 = vsel %vm706, %v874, 0
        %879 = vmatprep.subr.mxu0 0.0
        %880 = vmatpush1.xpose.msra.mxu0 %v877
        %881 = vmatprep.subr.mxu0 0.0
        %882 = vmatpush1.xpose.msra.mxu0 0.0
        %883 = vmatprep.subr.mxu0 0.0
        %884 = vmatpush1.xpose.msra.mxu0 0.0
        %885 = vmatprep.subr.mxu0 0.0
        %886 = vmatpush1.xpose.msra.mxu0 0.0
        %887 = vmatprep.subr.mxu0 0.0
        %888 = vmatpush1.xpose.msra.mxu0 0.0
        %889 = vmatprep.subr.mxu0 0.0
        %890 = vmatpush1.xpose.msra.mxu0 0.0
        %891 = vmatprep.subr.mxu0 0.0
        %892 = vmatpush1.xpose.msra.mxu0 0.0
        %893 = vmatprep.subr.mxu0 0.0
        %894 = vmatpush1.xpose.msra.mxu0 0.0
        %895 = vmatprep.subr.mxu0 0.0
        %896 = vmatpush1.xpose.msra.mxu0 0.0
        %897 = vmatprep.subr.mxu0 0.0
        %898 = vmatpush1.xpose.msra.mxu0 0.0
        %899 = vmatprep.subr.mxu0 0.0
        %900 = vmatpush1.xpose.msra.mxu0 0.0
        %901 = vmatprep.subr.mxu0 0.0
        %902 = vmatpush1.xpose.msra.mxu0 0.0
        %903 = vmatprep.subr.mxu0 0.0
        %904 = vmatpush1.xpose.msra.mxu0 0.0
        %905 = vmatprep.subr.mxu0 0.0
        %906 = vmatpush1.xpose.msra.mxu0 0.0
        %907 = vmatprep.subr.mxu0 0.0
        %908 = vmatpush1.xpose.msra.mxu0 0.0
        %909 = vmatprep.subr.mxu0 0.0
        %910 = vmatpush1.xpose.msra.mxu0 0.0
        %911 = vmatprep.subr.mxu0 0.0
        %912 = vmatpush1.xpose.msra.mxu0 0.0
        %913 = vmatprep.subr.mxu0 0.0
        %914 = vmatpush1.xpose.msra.mxu0 0.0
        %915 = vmatprep.subr.mxu0 0.0
        %916 = vmatpush1.xpose.msra.mxu0 0.0
        %917 = vmatprep.subr.mxu0 0.0
        %918 = vmatpush1.xpose.msra.mxu0 0.0
        %919 = vmatprep.subr.mxu0 0.0
        %920 = vmatpush1.xpose.msra.mxu0 0.0
        %921 = vmatprep.subr.mxu0 0.0
        %922 = vmatpush1.xpose.msra.mxu0 0.0
        %923 = vmatprep.subr.mxu0 0.0
        %924 = vmatpush1.xpose.msra.mxu0 0.0
        %925 = vmatprep.subr.mxu0 0.0
        %926 = vmatpush1.xpose.msra.mxu0 0.0
        %927 = vmatprep.subr.mxu0 0.0
        %928 = vmatpush1.xpose.msra.mxu0 0.0
        %929 = vmatprep.subr.mxu0 0.0
        %930 = vmatpush1.xpose.msra.mxu0 0.0
        %931 = vmatprep.subr.mxu0 0.0
        %932 = vmatpush1.xpose.msra.mxu0 0.0
        %933 = vmatprep.subr.mxu0 0.0
        %934 = vmatpush1.xpose.msra.mxu0 0.0
        %935 = vmatprep.subr.mxu0 0.0
        %936 = vmatpush1.xpose.msra.mxu0 0.0
        %937 = vmatprep.subr.mxu0 0.0
        %938 = vmatpush1.xpose.msra.mxu0 0.0
        %939 = vmatprep.subr.mxu0 0.0
        %940 = vmatpush1.xpose.msra.mxu0 0.0
        %941 = vmatprep.subr.mxu0 0.0
        %942 = vmatpush1.xpose.msra.mxu0 0.0
        %943 = vmatprep.mubr.f32.mxu0 0.0
        %944 = vmatmul.mubr.f32.gmra.mrb[0].mxu0 %v875
        %v945 = vpop.f32.mrb[0].mxu0
        %v946 = vadd.f32 0.0, %v945
        %v947 = vpop.f32.mrb[0].mxu0
        %948 = vdwg.mxu0
        %v949 = vsel %vm706, %v946, -inf
        %950 = vmax.xlane.f32.xlu0 %v949
        %v951 = vpop.xlane.xlu0 %950
        %v952 = vsub.f32 %v946, %v951
        %v953 = vmul.f32 %v952, 1.442695
        %v954 = vpow.pop %v953
        %v955 = vsel %vm706, %v954, 0.0
        %956 = vadd.xlane.f32.xlu0 %v955
        %v957 = vpop.xlane.xlu0 %956
        %v958 = vrcp.pop %v957
        %v959 = vmul.f32 %v954, %v958
        %960 = vrot.lane.b32.xlu0 %v703, 88
        %v961 = vpop.permute.xlu0 %960
        %v964 = vsel %vm706, %v959, 0
        %966 = vmatprep.subr.mxu0 0.0
        %967 = vmatpush1.msra.mxu0 %v961
        %968 = vmatprep.subr.mxu0 0.0
        %969 = vmatpush1.msra.mxu0 0.0
        %970 = vmatprep.subr.mxu0 0.0
        %971 = vmatpush1.msra.mxu0 0.0
        %972 = vmatprep.subr.mxu0 0.0
        %973 = vmatpush1.msra.mxu0 0.0
        %974 = vmatprep.subr.mxu0 0.0
        %975 = vmatpush1.msra.mxu0 0.0
        %976 = vmatprep.subr.mxu0 0.0
        %977 = vmatpush1.msra.mxu0 0.0
        %978 = vmatprep.subr.mxu0 0.0
        %979 = vmatpush1.msra.mxu0 0.0
        %980 = vmatprep.subr.mxu0 0.0
        %981 = vmatpush1.msra.mxu0 0.0
        %982 = vmatprep.subr.mxu0 0.0
        %983 = vmatpush1.msra.mxu0 0.0
        %984 = vmatprep.subr.mxu0 0.0
        %985 = vmatpush1.msra.mxu0 0.0
        %986 = vmatprep.subr.mxu0 0.0
        %987 = vmatpush1.msra.mxu0 0.0
        %988 = vmatprep.subr.mxu0 0.0
        %989 = vmatpush1.msra.mxu0 0.0
        %990 = vmatprep.subr.mxu0 0.0
        %991 = vmatpush1.msra.mxu0 0.0
        %992 = vmatprep.subr.mxu0 0.0
        %993 = vmatpush1.msra.mxu0 0.0
        %994 = vmatprep.subr.mxu0 0.0
        %995 = vmatpush1.msra.mxu0 0.0
        %996 = vmatprep.subr.mxu0 0.0
        %997 = vmatpush1.msra.mxu0 0.0
        %998 = vmatprep.subr.mxu0 0.0
        %999 = vmatpush1.msra.mxu0 0.0
        %1000 = vmatprep.subr.mxu0 0.0
        %1001 = vmatpush1.msra.mxu0 0.0
        %1002 = vmatprep.subr.mxu0 0.0
        %1003 = vmatpush1.msra.mxu0 0.0
        %1004 = vmatprep.subr.mxu0 0.0
        %1005 = vmatpush1.msra.mxu0 0.0
        %1006 = vmatprep.subr.mxu0 0.0
        %1007 = vmatpush1.msra.mxu0 0.0
        %1008 = vmatprep.subr.mxu0 0.0
        %1009 = vmatpush1.msra.mxu0 0.0
        %1010 = vmatprep.subr.mxu0 0.0
        %1011 = vmatpush1.msra.mxu0 0.0
        %1012 = vmatprep.subr.mxu0 0.0
        %1013 = vmatpush1.msra.mxu0 0.0
        %1014 = vmatprep.subr.mxu0 0.0
        %1015 = vmatpush1.msra.mxu0 0.0
        %1016 = vmatprep.subr.mxu0 0.0
        %1017 = vmatpush1.msra.mxu0 0.0
        %1018 = vmatprep.subr.mxu0 0.0
        %1019 = vmatpush1.msra.mxu0 0.0
        %1020 = vmatprep.subr.mxu0 0.0
        %1021 = vmatpush1.msra.mxu0 0.0
        %1022 = vmatprep.subr.mxu0 0.0
        %1023 = vmatpush1.msra.mxu0 0.0
        %1024 = vmatprep.subr.mxu0 0.0
        %1025 = vmatpush1.msra.mxu0 0.0
        %1026 = vmatprep.subr.mxu0 0.0
        %1027 = vmatpush1.msra.mxu0 0.0
        %1028 = vmatprep.subr.mxu0 0.0
        %1029 = vmatpush1.msra.mxu0 0.0
        %1030 = vmatprep.mubr.f32.mxu0 0.0
        %1031 = vmatmul.mubr.f32.gmra.mrb[0].mxu0 %v964
        %v1032 = vpop.f32.mrb[0].mxu0
        %v1033 = vadd.f32 0.0, %v1032
        %v1034 = vpop.f32.mrb[0].mxu0
        %1035 = vdwg.mxu0
        %1037 = vrot.lane.b32.xlu0 %v1033, 8
        %v1038 = vpop.permute.xlu0 %1037
        %vm1040 = vcmask 130112
        %1041 = vst.msk [vmem:[#allocation2] sm:$0xff] %vm1040, %v1038
        %1042 = vrot.lane.b32.xlu0 %v621, 112
        %v1043 = vpop.permute.xlu0 %1042
        %1044 = vrot.lane.b32.xlu0 %v703, 112
        %v1045 = vpop.permute.xlu0 %1044
        %v1046 = vsel %vm706, %v1043, 0
        %v1048 = vsel %vm706, %v1045, 0
        %1050 = vmatprep.subr.mxu0 0.0
        %1051 = vmatpush1.xpose.msra.mxu0 %v1048
        %1052 = vmatprep.subr.mxu0 0.0
        %1053 = vmatpush1.xpose.msra.mxu0 0.0
        %1054 = vmatprep.subr.mxu0 0.0
        %1055 = vmatpush1.xpose.msra.mxu0 0.0
        %1056 = vmatprep.subr.mxu0 0.0
        %1057 = vmatpush1.xpose.msra.mxu0 0.0
        %1058 = vmatprep.subr.mxu0 0.0
        %1059 = vmatpush1.xpose.msra.mxu0 0.0
        %1060 = vmatprep.subr.mxu0 0.0
        %1061 = vmatpush1.xpose.msra.mxu0 0.0
        %1062 = vmatprep.subr.mxu0 0.0
        %1063 = vmatpush1.xpose.msra.mxu0 0.0
        %1064 = vmatprep.subr.mxu0 0.0
        %1065 = vmatpush1.xpose.msra.mxu0 0.0
        %1066 = vmatprep.subr.mxu0 0.0
        %1067 = vmatpush1.xpose.msra.mxu0 0.0
        %1068 = vmatprep.subr.mxu0 0.0
        %1069 = vmatpush1.xpose.msra.mxu0 0.0
        %1070 = vmatprep.subr.mxu0 0.0
        %1071 = vmatpush1.xpose.msra.mxu0 0.0
        %1072 = vmatprep.subr.mxu0 0.0
        %1073 = vmatpush1.xpose.msra.mxu0 0.0
        %1074 = vmatprep.subr.mxu0 0.0
        %1075 = vmatpush1.xpose.msra.mxu0 0.0
        %1076 = vmatprep.subr.mxu0 0.0
        %1077 = vmatpush1.xpose.msra.mxu0 0.0
        %1078 = vmatprep.subr.mxu0 0.0
        %1079 = vmatpush1.xpose.msra.mxu0 0.0
        %1080 = vmatprep.subr.mxu0 0.0
        %1081 = vmatpush1.xpose.msra.mxu0 0.0
        %1082 = vmatprep.subr.mxu0 0.0
        %1083 = vmatpush1.xpose.msra.mxu0 0.0
        %1084 = vmatprep.subr.mxu0 0.0
        %1085 = vmatpush1.xpose.msra.mxu0 0.0
        %1086 = vmatprep.subr.mxu0 0.0
        %1087 = vmatpush1.xpose.msra.mxu0 0.0
        %1088 = vmatprep.subr.mxu0 0.0
        %1089 = vmatpush1.xpose.msra.mxu0 0.0
        %1090 = vmatprep.subr.mxu0 0.0
        %1091 = vmatpush1.xpose.msra.mxu0 0.0
        %1092 = vmatprep.subr.mxu0 0.0
        %1093 = vmatpush1.xpose.msra.mxu0 0.0
        %1094 = vmatprep.subr.mxu0 0.0
        %1095 = vmatpush1.xpose.msra.mxu0 0.0
        %1096 = vmatprep.subr.mxu0 0.0
        %1097 = vmatpush1.xpose.msra.mxu0 0.0
        %1098 = vmatprep.subr.mxu0 0.0
        %1099 = vmatpush1.xpose.msra.mxu0 0.0
        %1100 = vmatprep.subr.mxu0 0.0
        %1101 = vmatpush1.xpose.msra.mxu0 0.0
        %1102 = vmatprep.subr.mxu0 0.0
        %1103 = vmatpush1.xpose.msra.mxu0 0.0
        %1104 = vmatprep.subr.mxu0 0.0
        %1105 = vmatpush1.xpose.msra.mxu0 0.0
        %1106 = vmatprep.subr.mxu0 0.0
        %1107 = vmatpush1.xpose.msra.mxu0 0.0
        %1108 = vmatprep.subr.mxu0 0.0
        %1109 = vmatpush1.xpose.msra.mxu0 0.0
        %1110 = vmatprep.subr.mxu0 0.0
        %1111 = vmatpush1.xpose.msra.mxu0 0.0
        %1112 = vmatprep.subr.mxu0 0.0
        %1113 = vmatpush1.xpose.msra.mxu0 0.0
        %1114 = vmatprep.mubr.f32.mxu0 0.0
        %1115 = vmatmul.mubr.f32.gmra.mrb[0].mxu0 %v1046
        %v1116 = vpop.f32.mrb[0].mxu0
        %v1117 = vadd.f32 0.0, %v1116
        %v1118 = vpop.f32.mrb[0].mxu0
        %1119 = vdwg.mxu0
        %v1120 = vsel %vm706, %v1117, -inf
        %1121 = vmax.xlane.f32.xlu0 %v1120
        %v1122 = vpop.xlane.xlu0 %1121
        %v1123 = vsub.f32 %v1117, %v1122
        %v1124 = vmul.f32 %v1123, 1.442695
        %v1125 = vpow.pop %v1124
        %v1126 = vsel %vm706, %v1125, 0.0
        %1127 = vadd.xlane.f32.xlu0 %v1126
        %v1128 = vpop.xlane.xlu0 %1127
        %v1129 = vrcp.pop %v1128
        %v1130 = vmul.f32 %v1125, %v1129
        %1131 = vrot.lane.b32.xlu0 %v703, 80
        %v1132 = vpop.permute.xlu0 %1131
        %v1135 = vsel %vm706, %v1130, 0
        %1137 = vmatprep.subr.mxu0 0.0
        %1138 = vmatpush1.msra.mxu0 %v1132
        %1139 = vmatprep.subr.mxu0 0.0
        %1140 = vmatpush1.msra.mxu0 0.0
        %1141 = vmatprep.subr.mxu0 0.0
        %1142 = vmatpush1.msra.mxu0 0.0
        %1143 = vmatprep.subr.mxu0 0.0
        %1144 = vmatpush1.msra.mxu0 0.0
        %1145 = vmatprep.subr.mxu0 0.0
        %1146 = vmatpush1.msra.mxu0 0.0
        %1147 = vmatprep.subr.mxu0 0.0
        %1148 = vmatpush1.msra.mxu0 0.0
        %1149 = vmatprep.subr.mxu0 0.0
        %1150 = vmatpush1.msra.mxu0 0.0
        %1151 = vmatprep.subr.mxu0 0.0
        %1152 = vmatpush1.msra.mxu0 0.0
        %1153 = vmatprep.subr.mxu0 0.0
        %1154 = vmatpush1.msra.mxu0 0.0
        %1155 = vmatprep.subr.mxu0 0.0
        %1156 = vmatpush1.msra.mxu0 0.0
        %1157 = vmatprep.subr.mxu0 0.0
        %1158 = vmatpush1.msra.mxu0 0.0
        %1159 = vmatprep.subr.mxu0 0.0
        %1160 = vmatpush1.msra.mxu0 0.0
        %1161 = vmatprep.subr.mxu0 0.0
        %1162 = vmatpush1.msra.mxu0 0.0
        %1163 = vmatprep.subr.mxu0 0.0
        %1164 = vmatpush1.msra.mxu0 0.0
        %1165 = vmatprep.subr.mxu0 0.0
        %1166 = vmatpush1.msra.mxu0 0.0
        %1167 = vmatprep.subr.mxu0 0.0
        %1168 = vmatpush1.msra.mxu0 0.0
        %1169 = vmatprep.subr.mxu0 0.0
        %1170 = vmatpush1.msra.mxu0 0.0
        %1171 = vmatprep.subr.mxu0 0.0
        %1172 = vmatpush1.msra.mxu0 0.0
        %1173 = vmatprep.subr.mxu0 0.0
        %1174 = vmatpush1.msra.mxu0 0.0
        %1175 = vmatprep.subr.mxu0 0.0
        %1176 = vmatpush1.msra.mxu0 0.0
        %1177 = vmatprep.subr.mxu0 0.0
        %1178 = vmatpush1.msra.mxu0 0.0
        %1179 = vmatprep.subr.mxu0 0.0
        %1180 = vmatpush1.msra.mxu0 0.0
        %1181 = vmatprep.subr.mxu0 0.0
        %1182 = vmatpush1.msra.mxu0 0.0
        %1183 = vmatprep.subr.mxu0 0.0
        %1184 = vmatpush1.msra.mxu0 0.0
        %1185 = vmatprep.subr.mxu0 0.0
        %1186 = vmatpush1.msra.mxu0 0.0
        %1187 = vmatprep.subr.mxu0 0.0
        %1188 = vmatpush1.msra.mxu0 0.0
        %1189 = vmatprep.subr.mxu0 0.0
        %1190 = vmatpush1.msra.mxu0 0.0
        %1191 = vmatprep.subr.mxu0 0.0
        %1192 = vmatpush1.msra.mxu0 0.0
        %1193 = vmatprep.subr.mxu0 0.0
        %1194 = vmatpush1.msra.mxu0 0.0
        %1195 = vmatprep.subr.mxu0 0.0
        %1196 = vmatpush1.msra.mxu0 0.0
        %1197 = vmatprep.subr.mxu0 0.0
        %1198 = vmatpush1.msra.mxu0 0.0
        %1199 = vmatprep.subr.mxu0 0.0
        %1200 = vmatpush1.msra.mxu0 0.0
        %1201 = vmatprep.mubr.f32.mxu0 0.0
        %1202 = vmatmul.mubr.f32.gmra.mrb[0].mxu0 %v1135
        %v1203 = vpop.f32.mrb[0].mxu0
        %v1204 = vadd.f32 0.0, %v1203
        %v1205 = vpop.f32.mrb[0].mxu0
        %1206 = vdwg.mxu0
        %1208 = vrot.lane.b32.xlu0 %v1204, 16
        %v1209 = vpop.permute.xlu0 %1208
        %vm1211 = vcmask 195712
        %1212 = vst.msk [vmem:[#allocation2] sm:$0xff] %vm1211, %v1209
        %1213 = vrot.lane.b32.xlu0 %v621, 104
        %v1214 = vpop.permute.xlu0 %1213
        %1215 = vrot.lane.b32.xlu0 %v703, 104
        %v1216 = vpop.permute.xlu0 %1215
        %v1217 = vsel %vm706, %v1214, 0
        %v1219 = vsel %vm706, %v1216, 0
        %1221 = vmatprep.subr.mxu0 0.0
        %1222 = vmatpush1.xpose.msra.mxu0 %v1219
        %1223 = vmatprep.subr.mxu0 0.0
        %1224 = vmatpush1.xpose.msra.mxu0 0.0
        %1225 = vmatprep.subr.mxu0 0.0
        %1226 = vmatpush1.xpose.msra.mxu0 0.0
        %1227 = vmatprep.subr.mxu0 0.0
        %1228 = vmatpush1.xpose.msra.mxu0 0.0
        %1229 = vmatprep.subr.mxu0 0.0
        %1230 = vmatpush1.xpose.msra.mxu0 0.0
        %1231 = vmatprep.subr.mxu0 0.0
        %1232 = vmatpush1.xpose.msra.mxu0 0.0
        %1233 = vmatprep.subr.mxu0 0.0
        %1234 = vmatpush1.xpose.msra.mxu0 0.0
        %1235 = vmatprep.subr.mxu0 0.0
        %1236 = vmatpush1.xpose.msra.mxu0 0.0
        %1237 = vmatprep.subr.mxu0 0.0
        %1238 = vmatpush1.xpose.msra.mxu0 0.0
        %1239 = vmatprep.subr.mxu0 0.0
        %1240 = vmatpush1.xpose.msra.mxu0 0.0
        %1241 = vmatprep.subr.mxu0 0.0
        %1242 = vmatpush1.xpose.msra.mxu0 0.0
        %1243 = vmatprep.subr.mxu0 0.0
        %1244 = vmatpush1.xpose.msra.mxu0 0.0
        %1245 = vmatprep.subr.mxu0 0.0
        %1246 = vmatpush1.xpose.msra.mxu0 0.0
        %1247 = vmatprep.subr.mxu0 0.0
        %1248 = vmatpush1.xpose.msra.mxu0 0.0
        %1249 = vmatprep.subr.mxu0 0.0
        %1250 = vmatpush1.xpose.msra.mxu0 0.0
        %1251 = vmatprep.subr.mxu0 0.0
        %1252 = vmatpush1.xpose.msra.mxu0 0.0
        %1253 = vmatprep.subr.mxu0 0.0
        %1254 = vmatpush1.xpose.msra.mxu0 0.0
        %1255 = vmatprep.subr.mxu0 0.0
        %1256 = vmatpush1.xpose.msra.mxu0 0.0
        %1257 = vmatprep.subr.mxu0 0.0
        %1258 = vmatpush1.xpose.msra.mxu0 0.0
        %1259 = vmatprep.subr.mxu0 0.0
        %1260 = vmatpush1.xpose.msra.mxu0 0.0
        %1261 = vmatprep.subr.mxu0 0.0
        %1262 = vmatpush1.xpose.msra.mxu0 0.0
        %1263 = vmatprep.subr.mxu0 0.0
        %1264 = vmatpush1.xpose.msra.mxu0 0.0
        %1265 = vmatprep.subr.mxu0 0.0
        %1266 = vmatpush1.xpose.msra.mxu0 0.0
        %1267 = vmatprep.subr.mxu0 0.0
        %1268 = vmatpush1.xpose.msra.mxu0 0.0
        %1269 = vmatprep.subr.mxu0 0.0
        %1270 = vmatpush1.xpose.msra.mxu0 0.0
        %1271 = vmatprep.subr.mxu0 0.0
        %1272 = vmatpush1.xpose.msra.mxu0 0.0
        %1273 = vmatprep.subr.mxu0 0.0
        %1274 = vmatpush1.xpose.msra.mxu0 0.0
        %1275 = vmatprep.subr.mxu0 0.0
        %1276 = vmatpush1.xpose.msra.mxu0 0.0
        %1277 = vmatprep.subr.mxu0 0.0
        %1278 = vmatpush1.xpose.msra.mxu0 0.0
        %1279 = vmatprep.subr.mxu0 0.0
        %1280 = vmatpush1.xpose.msra.mxu0 0.0
        %1281 = vmatprep.subr.mxu0 0.0
        %1282 = vmatpush1.xpose.msra.mxu0 0.0
        %1283 = vmatprep.subr.mxu0 0.0
        %1284 = vmatpush1.xpose.msra.mxu0 0.0
        %1285 = vmatprep.mubr.f32.mxu0 0.0
        %1286 = vmatmul.mubr.f32.gmra.mrb[0].mxu0 %v1217
        %v1287 = vpop.f32.mrb[0].mxu0
        %v1288 = vadd.f32 0.0, %v1287
        %v1289 = vpop.f32.mrb[0].mxu0
        %1290 = vdwg.mxu0
        %v1291 = vsel %vm706, %v1288, -inf
        %1292 = vmax.xlane.f32.xlu0 %v1291
        %v1293 = vpop.xlane.xlu0 %1292
        %v1294 = vsub.f32 %v1288, %v1293
        %v1295 = vmul.f32 %v1294, 1.442695
        %v1296 = vpow.pop %v1295
        %v1297 = vsel %vm706, %v1296, 0.0
        %1298 = vadd.xlane.f32.xlu0 %v1297
        %v1299 = vpop.xlane.xlu0 %1298
        %v1300 = vrcp.pop %v1299
        %v1301 = vmul.f32 %v1296, %v1300
        %1302 = vrot.lane.b32.xlu0 %v703, 72
        %v1303 = vpop.permute.xlu0 %1302
        %v1306 = vsel %vm706, %v1301, 0
        %1308 = vmatprep.subr.mxu0 0.0
        %1309 = vmatpush1.msra.mxu0 %v1303
        %1310 = vmatprep.subr.mxu0 0.0
        %1311 = vmatpush1.msra.mxu0 0.0
        %1312 = vmatprep.subr.mxu0 0.0
        %1313 = vmatpush1.msra.mxu0 0.0
        %1314 = vmatprep.subr.mxu0 0.0
        %1315 = vmatpush1.msra.mxu0 0.0
        %1316 = vmatprep.subr.mxu0 0.0
        %1317 = vmatpush1.msra.mxu0 0.0
        %1318 = vmatprep.subr.mxu0 0.0
        %1319 = vmatpush1.msra.mxu0 0.0
        %1320 = vmatprep.subr.mxu0 0.0
        %1321 = vmatpush1.msra.mxu0 0.0
        %1322 = vmatprep.subr.mxu0 0.0
        %1323 = vmatpush1.msra.mxu0 0.0
        %1324 = vmatprep.subr.mxu0 0.0
        %1325 = vmatpush1.msra.mxu0 0.0
        %1326 = vmatprep.subr.mxu0 0.0
        %1327 = vmatpush1.msra.mxu0 0.0
        %1328 = vmatprep.subr.mxu0 0.0
        %1329 = vmatpush1.msra.mxu0 0.0
        %1330 = vmatprep.subr.mxu0 0.0
        %1331 = vmatpush1.msra.mxu0 0.0
        %1332 = vmatprep.subr.mxu0 0.0
        %1333 = vmatpush1.msra.mxu0 0.0
        %1334 = vmatprep.subr.mxu0 0.0
        %1335 = vmatpush1.msra.mxu0 0.0
        %1336 = vmatprep.subr.mxu0 0.0
        %1337 = vmatpush1.msra.mxu0 0.0
        %1338 = vmatprep.subr.mxu0 0.0
        %1339 = vmatpush1.msra.mxu0 0.0
        %1340 = vmatprep.subr.mxu0 0.0
        %1341 = vmatpush1.msra.mxu0 0.0
        %1342 = vmatprep.subr.mxu0 0.0
        %1343 = vmatpush1.msra.mxu0 0.0
        %1344 = vmatprep.subr.mxu0 0.0
        %1345 = vmatpush1.msra.mxu0 0.0
        %1346 = vmatprep.subr.mxu0 0.0
        %1347 = vmatpush1.msra.mxu0 0.0
        %1348 = vmatprep.subr.mxu0 0.0
        %1349 = vmatpush1.msra.mxu0 0.0
        %1350 = vmatprep.subr.mxu0 0.0
        %1351 = vmatpush1.msra.mxu0 0.0
        %1352 = vmatprep.subr.mxu0 0.0
        %1353 = vmatpush1.msra.mxu0 0.0
        %1354 = vmatprep.subr.mxu0 0.0
        %1355 = vmatpush1.msra.mxu0 0.0
        %1356 = vmatprep.subr.mxu0 0.0
        %1357 = vmatpush1.msra.mxu0 0.0
        %1358 = vmatprep.subr.mxu0 0.0
        %1359 = vmatpush1.msra.mxu0 0.0
        %1360 = vmatprep.subr.mxu0 0.0
        %1361 = vmatpush1.msra.mxu0 0.0
        %1362 = vmatprep.subr.mxu0 0.0
        %1363 = vmatpush1.msra.mxu0 0.0
        %1364 = vmatprep.subr.mxu0 0.0
        %1365 = vmatpush1.msra.mxu0 0.0
        %1366 = vmatprep.subr.mxu0 0.0
        %1367 = vmatpush1.msra.mxu0 0.0
        %1368 = vmatprep.subr.mxu0 0.0
        %1369 = vmatpush1.msra.mxu0 0.0
        %1370 = vmatprep.subr.mxu0 0.0
        %1371 = vmatpush1.msra.mxu0 0.0
        %1372 = vmatprep.mubr.f32.mxu0 0.0
        %1373 = vmatmul.mubr.f32.gmra.mrb[0].mxu0 %v1306
        %v1374 = vpop.f32.mrb[0].mxu0
        %v1375 = vadd.f32 0.0, %v1374
        %v1376 = vpop.f32.mrb[0].mxu0
        %1377 = vdwg.mxu0
        %1379 = vrot.lane.b32.xlu0 %v1375, 24
        %v1380 = vpop.permute.xlu0 %1379
        %vm1382 = vcmask 261312
        %1383 = vst.msk [vmem:[#allocation2] sm:$0xff] %vm1382, %v1380
        %v1384 = vld [vmem:[#allocation2] sm:$0xff]
        %v1385 = vld [vmem:[%s6] sm:$0xff]
        %v1386 = vld [vmem:[%s6 + $0x8] sm:$0xff]
        %v1387 = vld [vmem:[%s6 + $0x10] sm:$0xff]
        %v1388 = vld [vmem:[%s6 + $0x18] sm:$0xff]
        %v1389 = vld [vmem:[%s7] sm:$0x1]
        %v1391 = vlaneseq
        %v1392 = vshrl.u32 %v1391, 7
        %v1393 = vsub.s32 0, %v1392
        %v1394 = vrot.slane %v1389, %v1393
        %v1397 = vsel %vm547, %v1384, 0
        %1399 = vmatprep.subr.mxu0 0.0
        %1400 = vmatpush1.msra.mxu0 %v1385
        %1401 = vmatprep.subr.mxu0 0.0
        %1402 = vmatpush1.msra.mxu0 %v1386
        %1403 = vmatprep.subr.mxu0 0.0
        %1404 = vmatpush1.msra.mxu0 %v1387
        %1405 = vmatprep.subr.mxu0 0.0
        %1406 = vmatpush1.msra.mxu0 %v1388
        %1407 = vmatprep.subr.mxu0 0.0
        %1408 = vmatpush1.msra.mxu0 0.0
        %1409 = vmatprep.subr.mxu0 0.0
        %1410 = vmatpush1.msra.mxu0 0.0
        %1411 = vmatprep.subr.mxu0 0.0
        %1412 = vmatpush1.msra.mxu0 0.0
        %1413 = vmatprep.subr.mxu0 0.0
        %1414 = vmatpush1.msra.mxu0 0.0
        %1415 = vmatprep.subr.mxu0 0.0
        %1416 = vmatpush1.msra.mxu0 0.0
        %1417 = vmatprep.subr.mxu0 0.0
        %1418 = vmatpush1.msra.mxu0 0.0
        %1419 = vmatprep.subr.mxu0 0.0
        %1420 = vmatpush1.msra.mxu0 0.0
        %1421 = vmatprep.subr.mxu0 0.0
        %1422 = vmatpush1.msra.mxu0 0.0
        %1423 = vmatprep.subr.mxu0 0.0
        %1424 = vmatpush1.msra.mxu0 0.0
        %1425 = vmatprep.subr.mxu0 0.0
        %1426 = vmatpush1.msra.mxu0 0.0
        %1427 = vmatprep.subr.mxu0 0.0
        %1428 = vmatpush1.msra.mxu0 0.0
        %1429 = vmatprep.subr.mxu0 0.0
        %1430 = vmatpush1.msra.mxu0 0.0
        %1431 = vmatprep.subr.mxu0 0.0
        %1432 = vmatpush1.msra.mxu0 0.0
        %1433 = vmatprep.subr.mxu0 0.0
        %1434 = vmatpush1.msra.mxu0 0.0
        %1435 = vmatprep.subr.mxu0 0.0
        %1436 = vmatpush1.msra.mxu0 0.0
        %1437 = vmatprep.subr.mxu0 0.0
        %1438 = vmatpush1.msra.mxu0 0.0
        %1439 = vmatprep.subr.mxu0 0.0
        %1440 = vmatpush1.msra.mxu0 0.0
        %1441 = vmatprep.subr.mxu0 0.0
        %1442 = vmatpush1.msra.mxu0 0.0
        %1443 = vmatprep.subr.mxu0 0.0
        %1444 = vmatpush1.msra.mxu0 0.0
        %1445 = vmatprep.subr.mxu0 0.0
        %1446 = vmatpush1.msra.mxu0 0.0
        %1447 = vmatprep.subr.mxu0 0.0
        %1448 = vmatpush1.msra.mxu0 0.0
        %1449 = vmatprep.subr.mxu0 0.0
        %1450 = vmatpush1.msra.mxu0 0.0
        %1451 = vmatprep.subr.mxu0 0.0
        %1452 = vmatpush1.msra.mxu0 0.0
        %1453 = vmatprep.subr.mxu0 0.0
        %1454 = vmatpush1.msra.mxu0 0.0
        %1455 = vmatprep.subr.mxu0 0.0
        %1456 = vmatpush1.msra.mxu0 0.0
        %1457 = vmatprep.subr.mxu0 0.0
        %1458 = vmatpush1.msra.mxu0 0.0
        %1459 = vmatprep.subr.mxu0 0.0
        %1460 = vmatpush1.msra.mxu0 0.0
        %1461 = vmatprep.subr.mxu0 0.0
        %1462 = vmatpush1.msra.mxu0 0.0
        %1463 = vmatprep.mubr.f32.mxu0 0.0
        %1464 = vmatmul.mubr.f32.gmra.mrb[0].mxu0 %v1397
        %v1465 = vpop.f32.mrb[0].mxu0
        %v1466 = vadd.f32 %v1394, %v1465
        %v1467 = vpop.f32.mrb[0].mxu0
        %1468 = vdwg.mxu0
        %v1469 = vadd.f32 %v534, %v1466
        %v1470 = vsel %vm547, %v1469, 0.0
        %1471 = vadd.xlane.f32.xlu0 %v1470
        %v1472 = vpop.xlane.xlu0 %1471
        %v1473 = vrcp.pop 32.0
        %v1474 = vmul.f32 %v1472, %v1473
        %v1475 = vsub.f32 %v1469, %v1474
        %v1476 = vmul.f32 %v1475, %v1475
        %v1477 = vsel %vm547, %v1476, 0.0
        %1478 = vadd.xlane.f32.xlu0 %v1477
        %v1479 = vpop.xlane.xlu0 %1478
        %v1480 = vmul.f32 %v1479, %v1473
        %v1481 = vadd.f32 %v1480, 1e-05
        %v1482 = vrsqrt.pop %v1481
        %v1483 = vmul.f32 %v1475, %v1482
        %v1484 = vld [vmem:[%s12] sm:$0x1]
        %v1486 = vlaneseq
        %v1487 = vshrl.u32 %v1486, 7
        %v1488 = vsub.s32 0, %v1487
        %v1489 = vrot.slane %v1484, %v1488
        %v1491 = vmul.f32 %v1483, %v1489
        %v1492 = vld [vmem:[%s13] sm:$0x1]
        %v1494 = vlaneseq
        %v1495 = vshrl.u32 %v1494, 7
        %v1496 = vsub.s32 0, %v1495
        %v1497 = vrot.slane %v1492, %v1496
        %v1499 = vadd.f32 %v1491, %v1497
        %v1500 = vld [vmem:[%s8] sm:$0xff]
        %v1501 = vld [vmem:[%s8 + $0x8] sm:$0xff]
        %v1502 = vld [vmem:[%s8 + $0x10] sm:$0xff]
        %v1503 = vld [vmem:[%s8 + $0x18] sm:$0xff]
        %v1504 = vld [vmem:[%s9] sm:$0x1]
        %v1506 = vlaneseq
        %v1507 = vshrl.u32 %v1506, 7
        %v1508 = vsub.s32 0, %v1507
        %v1509 = vrot.slane %v1504, %v1508
        %v1512 = vsel %vm547, %v1499, 0
        %1514 = vmatprep.subr.mxu0 0.0
        %1515 = vmatpush1.msra.mxu0 %v1500
        %1516 = vmatprep.subr.mxu0 0.0
        %1517 = vmatpush1.msra.mxu0 %v1501
        %1518 = vmatprep.subr.mxu0 0.0
        %1519 = vmatpush1.msra.mxu0 %v1502
        %1520 = vmatprep.subr.mxu0 0.0
        %1521 = vmatpush1.msra.mxu0 %v1503
        %1522 = vmatprep.subr.mxu0 0.0
        %1523 = vmatpush1.msra.mxu0 0.0
        %1524 = vmatprep.subr.mxu0 0.0
        %1525 = vmatpush1.msra.mxu0 0.0
        %1526 = vmatprep.subr.mxu0 0.0
        %1527 = vmatpush1.msra.mxu0 0.0
        %1528 = vmatprep.subr.mxu0 0.0
        %1529 = vmatpush1.msra.mxu0 0.0
        %1530 = vmatprep.subr.mxu0 0.0
        %1531 = vmatpush1.msra.mxu0 0.0
        %1532 = vmatprep.subr.mxu0 0.0
        %1533 = vmatpush1.msra.mxu0 0.0
        %1534 = vmatprep.subr.mxu0 0.0
        %1535 = vmatpush1.msra.mxu0 0.0
        %1536 = vmatprep.subr.mxu0 0.0
        %1537 = vmatpush1.msra.mxu0 0.0
        %1538 = vmatprep.subr.mxu0 0.0
        %1539 = vmatpush1.msra.mxu0 0.0
        %1540 = vmatprep.subr.mxu0 0.0
        %1541 = vmatpush1.msra.mxu0 0.0
        %1542 = vmatprep.subr.mxu0 0.0
        %1543 = vmatpush1.msra.mxu0 0.0
        %1544 = vmatprep.subr.mxu0 0.0
        %1545 = vmatpush1.msra.mxu0 0.0
        %1546 = vmatprep.subr.mxu0 0.0
        %1547 = vmatpush1.msra.mxu0 0.0
        %1548 = vmatprep.subr.mxu0 0.0
        %1549 = vmatpush1.msra.mxu0 0.0
        %1550 = vmatprep.subr.mxu0 0.0
        %1551 = vmatpush1.msra.mxu0 0.0
        %1552 = vmatprep.subr.mxu0 0.0
        %1553 = vmatpush1.msra.mxu0 0.0
        %1554 = vmatprep.subr.mxu0 0.0
        %1555 = vmatpush1.msra.mxu0 0.0
        %1556 = vmatprep.subr.mxu0 0.0
        %1557 = vmatpush1.msra.mxu0 0.0
        %1558 = vmatprep.subr.mxu0 0.0
        %1559 = vmatpush1.msra.mxu0 0.0
        %1560 = vmatprep.subr.mxu0 0.0
        %1561 = vmatpush1.msra.mxu0 0.0
        %1562 = vmatprep.subr.mxu0 0.0
        %1563 = vmatpush1.msra.mxu0 0.0
        %1564 = vmatprep.subr.mxu0 0.0
        %1565 = vmatpush1.msra.mxu0 0.0
        %1566 = vmatprep.subr.mxu0 0.0
        %1567 = vmatpush1.msra.mxu0 0.0
        %1568 = vmatprep.subr.mxu0 0.0
        %1569 = vmatpush1.msra.mxu0 0.0
        %1570 = vmatprep.subr.mxu0 0.0
        %1571 = vmatpush1.msra.mxu0 0.0
        %1572 = vmatprep.subr.mxu0 0.0
        %1573 = vmatpush1.msra.mxu0 0.0
        %1574 = vmatprep.subr.mxu0 0.0
        %1575 = vmatpush1.msra.mxu0 0.0
        %1576 = vmatprep.subr.mxu0 0.0
        %1577 = vmatpush1.msra.mxu0 0.0
        %1578 = vmatprep.mubr.f32.mxu0 0.0
        %1579 = vmatmul.mubr.f32.gmra.mrb[0].mxu0 %v1512
        %v1580 = vpop.f32.mrb[0].mxu0
        %v1581 = vadd.f32 %v1509, %v1580
        %v1582 = vpop.f32.mrb[0].mxu0
        %1583 = vdwg.mxu0
        %v1584 = vmax.f32 %v1581, 0.0
        %v1585 = vld [vmem:[%s10] sm:$0xff]
        %v1586 = vld [vmem:[%s10 + $0x8] sm:$0xff]
        %v1587 = vld [vmem:[%s10 + $0x10] sm:$0xff]
        %v1588 = vld [vmem:[%s10 + $0x18] sm:$0xff]
        %v1589 = vld [vmem:[%s10 + $0x20] sm:$0xff]
        %v1590 = vld [vmem:[%s10 + $0x28] sm:$0xff]
        %v1591 = vld [vmem:[%s10 + $0x30] sm:$0xff]
        %v1592 = vld [vmem:[%s10 + $0x38] sm:$0xff]
        %v1593 = vld [vmem:[%s10 + $0x40] sm:$0xff]
        %v1594 = vld [vmem:[%s10 + $0x48] sm:$0xff]
        %v1595 = vld [vmem:[%s10 + $0x50] sm:$0xff]
        %v1596 = vld [vmem:[%s10 + $0x58] sm:$0xff]
        %v1597 = vld [vmem:[%s10 + $0x60] sm:$0xff]
        %v1598 = vld [vmem:[%s10 + $0x68] sm:$0xff]
        %v1599 = vld [vmem:[%s10 + $0x70] sm:$0xff]
        %v1600 = vld [vmem:[%s10 + $0x78] sm:$0xff]
        %v1601 = vld [vmem:[%s11] sm:$0x1]
        %v1603 = vlaneseq
        %v1604 = vshrl.u32 %v1603, 7
        %v1605 = vsub.s32 0, %v1604
        %v1606 = vrot.slane %v1601, %v1605
        %1608 = vmatprep.subr.mxu0 0.0
        %1609 = vmatpush1.msra.mxu0 %v1585
        %1610 = vmatprep.subr.mxu0 0.0
        %1611 = vmatpush1.msra.mxu0 %v1586
        %1612 = vmatprep.subr.mxu0 0.0
        %1613 = vmatpush1.msra.mxu0 %v1587
        %1614 = vmatprep.subr.mxu0 0.0
        %1615 = vmatpush1.msra.mxu0 %v1588
        %1616 = vmatprep.subr.mxu0 0.0
        %1617 = vmatpush1.msra.mxu0 %v1589
        %1618 = vmatprep.subr.mxu0 0.0
        %1619 = vmatpush1.msra.mxu0 %v1590
        %1620 = vmatprep.subr.mxu0 0.0
        %1621 = vmatpush1.msra.mxu0 %v1591
        %1622 = vmatprep.subr.mxu0 0.0
        %1623 = vmatpush1.msra.mxu0 %v1592
        %1624 = vmatprep.subr.mxu0 0.0
        %1625 = vmatpush1.msra.mxu0 %v1593
        %1626 = vmatprep.subr.mxu0 0.0
        %1627 = vmatpush1.msra.mxu0 %v1594
        %1628 = vmatprep.subr.mxu0 0.0
        %1629 = vmatpush1.msra.mxu0 %v1595
        %1630 = vmatprep.subr.mxu0 0.0
        %1631 = vmatpush1.msra.mxu0 %v1596
        %1632 = vmatprep.subr.mxu0 0.0
        %1633 = vmatpush1.msra.mxu0 %v1597
        %1634 = vmatprep.subr.mxu0 0.0
        %1635 = vmatpush1.msra.mxu0 %v1598
        %1636 = vmatprep.subr.mxu0 0.0
        %1637 = vmatpush1.msra.mxu0 %v1599
        %1638 = vmatprep.subr.mxu0 0.0
        %1639 = vmatpush1.msra.mxu0 %v1600
        %1640 = vmatprep.subr.mxu0 0.0
        %1641 = vmatpush1.msra.mxu0 0.0
        %1642 = vmatprep.subr.mxu0 0.0
        %1643 = vmatpush1.msra.mxu0 0.0
        %1644 = vmatprep.subr.mxu0 0.0
        %1645 = vmatpush1.msra.mxu0 0.0
        %1646 = vmatprep.subr.mxu0 0.0
        %1647 = vmatpush1.msra.mxu0 0.0
        %1648 = vmatprep.subr.mxu0 0.0
        %1649 = vmatpush1.msra.mxu0 0.0
        %1650 = vmatprep.subr.mxu0 0.0
        %1651 = vmatpush1.msra.mxu0 0.0
        %1652 = vmatprep.subr.mxu0 0.0
        %1653 = vmatpush1.msra.mxu0 0.0
        %1654 = vmatprep.subr.mxu0 0.0
        %1655 = vmatpush1.msra.mxu0 0.0
        %1656 = vmatprep.subr.mxu0 0.0
        %1657 = vmatpush1.msra.mxu0 0.0
        %1658 = vmatprep.subr.mxu0 0.0
        %1659 = vmatpush1.msra.mxu0 0.0
        %1660 = vmatprep.subr.mxu0 0.0
        %1661 = vmatpush1.msra.mxu0 0.0
        %1662 = vmatprep.subr.mxu0 0.0
        %1663 = vmatpush1.msra.mxu0 0.0
        %1664 = vmatprep.subr.mxu0 0.0
        %1665 = vmatpush1.msra.mxu0 0.0
        %1666 = vmatprep.subr.mxu0 0.0
        %1667 = vmatpush1.msra.mxu0 0.0
        %1668 = vmatprep.subr.mxu0 0.0
        %1669 = vmatpush1.msra.mxu0 0.0
        %1670 = vmatprep.subr.mxu0 0.0
        %1671 = vmatpush1.msra.mxu0 0.0
        %1672 = vmatprep.mubr.f32.mxu0 0.0
        %1673 = vmatmul.mubr.f32.gmra.mrb[0].mxu0 %v1584
        %v1674 = vpop.f32.mrb[0].mxu0
        %v1675 = vadd.f32 %v1606, %v1674
        %v1676 = vpop.f32.mrb[0].mxu0
        %1677 = vdwg.mxu0
        %v1678 = vadd.f32 %v1499, %v1675
        %v1679 = vsel %vm547, %v1678, 0.0
        %1680 = vadd.xlane.f32.xlu0 %v1679
        %v1681 = vpop.xlane.xlu0 %1680
        %v1682 = vmul.f32 %v1681, %v1473
        %v1683 = vsub.f32 %v1678, %v1682
        %v1684 = vmul.f32 %v1683, %v1683
        %v1685 = vsel %vm547, %v1684, 0.0
        %1686 = vadd.xlane.f32.xlu0 %v1685
        %v1687 = vpop.xlane.xlu0 %1686
        %v1688 = vmul.f32 %v1687, %v1473
        %v1689 = vadd.f32 %v1688, 1e-05
        %v1690 = vrsqrt.pop %v1689
        %v1691 = vmul.f32 %v1683, %v1690
        %v1692 = vld [vmem:[%s14] sm:$0x1]
        %v1694 = vlaneseq
        %v1695 = vshrl.u32 %v1694, 7
        %v1696 = vsub.s32 0, %v1695
        %v1697 = vrot.slane %v1692, %v1696
        %v1699 = vmul.f32 %v1691, %v1697
        %v1700 = vld [vmem:[%s15] sm:$0x1]
        %v1702 = vlaneseq
        %v1703 = vshrl.u32 %v1702, 7
        %v1704 = vsub.s32 0, %v1703
        %v1705 = vrot.slane %v1700, %v1704
        %v1707 = vadd.f32 %v1699, %v1705
        %1708 = vst.msk [vmem:[%s525] sm:$0xff] %vm547, %v1707
        %s1709 = sand.u32 %s384, 1
        %s1710 = scalar_lea.sflag [#allocation4], %s1709
        %s1711 = sand.u32 %s384, 1
        %s1712 = smul.addr %s1711, 8
        %s1713 = scalar_lea.vmem [#allocation3], %s1712
        // Predicated region
        $region85: #{tpu_custom_call.1} parent=83 // pred_check
          %p1714 = pneg %p394
        $region86: #{tpu_custom_call.1} parent=83 // pred_check_branch
          %1716 = sbr.rel (%p1714) target = $region88
        $region87: #{tpu_custom_call.1} parent=83 // pred_region
          %s1718 = ssub.s32 128, 128
          %1719 = vsyncadd %s1710, %s1718
          %s1720 = smul.addr %s30, 128
          %s1721 = scalar_lea.hbm %s16, %s1720
          %s1723 = sshll.u32 %s1713, 4
          %s1724 = int_to_ptr.vmem [resolvable:$true] %s1723
          %1726 = dma.vmem_to_hbm [thread:$0]  %s1724, 128, %s1721, %s1710
        $region88: #{tpu_custom_call.1} parent=83 // pred_fallthru
          _
      $region84: #{tpu_custom_call.1} parent=5 // pred_fallthru
        _
      %p1727 = scmp.le.s32.totalorder 2, %s25
      // Predicated region
      $region89: #{tpu_custom_call.1} parent=5 // pred_check
        %p1728 = pneg %p1727
      $region90: #{tpu_custom_call.1} parent=5 // pred_check_branch
        %1730 = sbr.rel (%p1728) target = $region92
      $region91: #{tpu_custom_call.1} parent=5 // pred_region
        %s1731 = ssub.s32 %s25, 2
        // Predicated region
        $region93: #{tpu_custom_call.1} parent=91 // pred_check
          %p1732 = pneg %p400
        $region94: #{tpu_custom_call.1} parent=91 // pred_check_branch
          %1734 = sbr.rel (%p1732) target = $region96
        $region95: #{tpu_custom_call.1} parent=91 // pred_region
          %s1735 = sand.u32 %s385, 1
          %s1736 = scalar_lea.sflag [#allocation4], %s1735
          %s1737 = sand.u32 %s385, 1
          %s1738 = smul.addr %s1737, 8
          %s1739 = scalar_lea.vmem [#allocation3], %s1738
          %1740 = dma.done %s1736, 128
        $region96: #{tpu_custom_call.1} parent=91 // pred_fallthru
          _
      $region92: #{tpu_custom_call.1} parent=5 // pred_fallthru
        _
    $region6: #{tpu_custom_call.1} parent=1 // loop_footer
      %s29 = sadd.s32 1, %s25
    $region7: #{tpu_custom_call.1} parent=1 // loop_footer_branch
      %24 = sbr.rel target = $region3
    $region8: #{tpu_custom_call.1} parent=1 // loop_exit
      _
    %1741 = vsyncpa [#allocation4], 1
    %s1742 = scalar_lea.sflag [#allocation4], 1
    %1743 = vsyncpa %s1742, 1

</llo_original>
